<compile_context>
chip_gen: v7x
topology: tpu7x:2x2x1
jax: 0.10.0
libtpu: 0.0.40
codegen_flags: <defaults>
</compile_context>

<pallas_src>
import functools

import jax
import jax.numpy as jnp
from jax.experimental import pallas as pl
from jax.experimental.pallas import tpu as pltpu


# ------------------------------- model config -------------------------------

VOCAB = 64
HIDDEN = 32
N_HEADS = 4
HEAD_DIM = HIDDEN // N_HEADS
N_LAYERS = 2
INTERMEDIATE = 4 * HIDDEN
MAX_POS = 16
TYPE_VOCAB = 2
N_CLASSES = 2
LN_EPS = 1e-12
GELU_C = 0.7978845608028654  # sqrt(2/pi)


# ------------------------- shared math (kernel + ref) ------------------------

def _layernorm(x, g, b):
    mean = jnp.mean(x, axis=-1, keepdims=True)
    var = jnp.mean((x - mean) * (x - mean), axis=-1, keepdims=True)
    return (x - mean) * jax.lax.rsqrt(var + LN_EPS) * g + b


def _gelu(x):
    # TODO(synk): tanh-approx GELU; HF BERT default is erf-based (~1e-3 rel diff).
    return 0.5 * x * (1.0 + jnp.tanh(GELU_C * (x + 0.044715 * x * x * x)))


# ------------------------------ fused Pallas kernel --------------------------

def _bert_fused_kernel(emb_ref, mask_ref, emb_g_ref, emb_b_ref,
                       w_qkv_ref, b_qkv_ref, w_o_ref, b_o_ref,
                       ln1_g_ref, ln1_b_ref, w_i_ref, b_i_ref,
                       w_f_ref, b_f_ref, ln2_g_ref, ln2_b_ref,
                       pool_w_ref, pool_b_ref, cls_w_ref, cls_b_ref,
                       logits_ref, *, n_layers, n_heads, head_dim, batch, seq):
    hidden = n_heads * head_dim

    # Embedding LayerNorm; the hidden state is a value resident in VMEM/vregs
    # for the entire network (no HBM round-trips between sub-ops or layers).
    h = _layernorm(emb_ref[...], emb_g_ref[...], emb_b_ref[...])      # (B*S, H)

    # Additive key bias built in-kernel from the (B, S) mask
    # (matches BERT's (1 - mask) * -10000); no (B*S, B*S) bias array anywhere.
    key_bias = (1.0 - mask_ref[...]) * -10000.0                       # (B, S)

    nt_dims = (((1,), (1,)), ((), ()))                                # q @ k^T

    for l in range(n_layers):                                         # unrolled
        # Fused QKV projection: one (B*S, H) @ (H, 3H) MXU matmul.
        # Q columns of w_qkv / b_qkv are pre-scaled by 1/sqrt(head_dim).
        qkv = jnp.dot(h, w_qkv_ref[l],
                      preferred_element_type=jnp.float32) + b_qkv_ref[l]

        # Per-sequence, per-head attention: only (S, S) score blocks are
        # computed, never cross-batch pairs.
        ctx_rows = []
        for b in range(batch):
            r0 = b * seq
            qkv_b = qkv[r0:r0 + seq, :]                               # (S, 3H)
            bias_b = key_bias[b:b + 1, :]                             # (1, S)
            ctx_heads = []
            for hh in range(n_heads):
                c0 = hh * head_dim
                q_h = qkv_b[:, c0:c0 + head_dim]                      # (S, Dh)
                k_h = qkv_b[:, hidden + c0:hidden + c0 + head_dim]
                v_h = qkv_b[:, 2 * hidden + c0:2 * hidden + c0 + head_dim]
                s = jax.lax.dot_general(q_h, k_h, nt_dims,
                                        preferred_element_type=jnp.float32)
                s = s + bias_b
                s = s - jnp.max(s, axis=-1, keepdims=True)
                p = jnp.exp(s)
                p = p * pl.reciprocal(jnp.sum(p, axis=-1, keepdims=True),
                                      approx=True)                    # EUP slot
                ctx_heads.append(jnp.dot(p, v_h,
                                         preferred_element_type=jnp.float32))
            ctx_rows.append(jnp.concatenate(ctx_heads, axis=-1))      # (S, H)
        ctx = jnp.concatenate(ctx_rows, axis=0)                       # (B*S, H)

        # Single lane-contiguous output projection (no per-head K=8 dots).
        attn = jnp.dot(ctx, w_o_ref[l],
                       preferred_element_type=jnp.float32) + b_o_ref[l]

        # residual + LayerNorm, FFN (GELU), residual + LayerNorm
        h1 = _layernorm(attn + h, ln1_g_ref[l], ln1_b_ref[l])
        inter = _gelu(jnp.dot(h1, w_i_ref[l],
                              preferred_element_type=jnp.float32) + b_i_ref[l])
        ffn = jnp.dot(inter, w_f_ref[l],
                      preferred_element_type=jnp.float32) + b_f_ref[l]
        h = _layernorm(ffn + h1, ln2_g_ref[l], ln2_b_ref[l])

    # Pooler (tanh) + dropout(eval) + classifier + ReLU on the [CLS] rows only.
    cls_rows = jnp.concatenate([h[b * seq:b * seq + 1, :] for b in range(batch)],
                               axis=0)                                # (B, H)
    pooled = jnp.tanh(jnp.dot(cls_rows, pool_w_ref[...],
                              preferred_element_type=jnp.float32) + pool_b_ref[...])
    # TODO(synk): nn.Dropout(0.5) is stochastic; treated as eval-mode identity.
    logits = jnp.dot(pooled, cls_w_ref[...],
                     preferred_element_type=jnp.float32) + cls_b_ref[...]
    logits_ref[...] = jnp.maximum(logits, 0.0)


# ------------------------------ param prep + wrapper --------------------------

def prepare_kernel_params(params):
    """One-time transform: fold 1/sqrt(head_dim) into the Q columns of w_qkv/b_qkv."""
    scale = 1.0 / (HEAD_DIM ** 0.5)
    stk = dict(params["stacked"])
    w_qkv, b_qkv = stk["w_qkv"], stk["b_qkv"]
    stk["w_qkv"] = jnp.concatenate(
        [w_qkv[:, :, :HIDDEN] * scale, w_qkv[:, :, HIDDEN:]], axis=-1)
    stk["b_qkv"] = jnp.concatenate(
        [b_qkv[:, :, :HIDDEN] * scale, b_qkv[:, :, HIDDEN:]], axis=-1)
    out = dict(params)
    out["stacked"] = stk
    return out


def bert_classifier_forward(prepped, input_id, mask):
    """prepped: output of prepare_kernel_params.  input_id/mask: (B, S) int."""
    B, S = input_id.shape

    # embeddings (data-dependent gather = plain-JAX glue)
    word = prepped["word_emb"][input_id]                  # (B, S, H)
    pos = prepped["pos_emb"][:S][None, :, :]              # (1, S, H)
    typ = prepped["type_emb"][0][None, None, :]           # token_type_ids == 0
    emb = (word + pos + typ).reshape(B * S, HIDDEN)

    mask_f = mask.astype(jnp.float32)                     # (B, S)

    stk = prepped["stacked"]
    kernel = functools.partial(_bert_fused_kernel,
                               n_layers=N_LAYERS, n_heads=N_HEADS,
                               head_dim=HEAD_DIM, batch=B, seq=S)

    # Single grid-less pallas_call: every operand is a whole-array VMEM block
    # (total < ~200 KB at this size), so there is zero per-step grid overhead.
    # For real BERT-base sizes, reintroduce a ('parallel' row-tile, 'arbitrary'
    # layer) grid with stacked-weight index_maps, bf16 weights, and an explicit
    # vmem_limit_bytes (v7x: 64 MiB physical; v5e: 16 MiB scoped default).
    logits = pl.pallas_call(
        kernel,
        out_shape=jax.ShapeDtypeStruct((B, N_CLASSES), jnp.float32),
    )(emb, mask_f, prepped["emb_ln_g"], prepped["emb_ln_b"],
      stk["w_qkv"], stk["b_qkv"], stk["w_o"], stk["b_o"],
      stk["ln1_g"], stk["ln1_b"], stk["w_i"], stk["b_i"],
      stk["w_f"], stk["b_f"], stk["ln2_g"], stk["ln2_b"],
      prepped["pool_w"], prepped["pool_b"], prepped["cls_w"], prepped["cls_b"])

    return logits                                         # (B, N_CLASSES)


# ------------------------------- synthetic init ------------------------------

def init_params(key):
    """Deterministic synthetic weights (BERT module shapes, scaled down)."""
    def nrm(k, shape, std=0.02):
        return (std * jax.random.normal(k, shape)).astype(jnp.float32)

    keys = iter(jax.random.split(key, 40))
    L, H, I = N_LAYERS, HIDDEN, INTERMEDIATE
    return {
        "word_emb": nrm(next(keys), (VOCAB, H)),
        "pos_emb": nrm(next(keys), (MAX_POS, H)),
        "type_emb": nrm(next(keys), (TYPE_VOCAB, H)),
        "emb_ln_g": 1.0 + nrm(next(keys), (1, H), 0.1),
        "emb_ln_b": nrm(next(keys), (1, H)),
        "stacked": {
            "w_qkv": nrm(next(keys), (L, H, 3 * H)),
            "b_qkv": nrm(next(keys), (L, 1, 3 * H)),
            "w_o": nrm(next(keys), (L, H, H)),
            "b_o": nrm(next(keys), (L, 1, H)),
            "ln1_g": 1.0 + nrm(next(keys), (L, 1, H), 0.1),
            "ln1_b": nrm(next(keys), (L, 1, H)),
            "w_i": nrm(next(keys), (L, H, I)),
            "b_i": nrm(next(keys), (L, 1, I)),
            "w_f": nrm(next(keys), (L, I, H)),
            "b_f": nrm(next(keys), (L, 1, H)),
            "ln2_g": 1.0 + nrm(next(keys), (L, 1, H), 0.1),
            "ln2_b": nrm(next(keys), (L, 1, H)),
        },
        "pool_w": nrm(next(keys), (H, H)),
        "pool_b": nrm(next(keys), (1, H)),
        "cls_w": nrm(next(keys), (H, N_CLASSES)),
        "cls_b": nrm(next(keys), (1, N_CLASSES)),
    }


# ------------------------------ pure-JAX reference ---------------------------

def bert_classifier_ref(params, input_id, mask):
    B, S = input_id.shape
    x = (params["word_emb"][input_id]
         + params["pos_emb"][:S][None, :, :]
         + params["type_emb"][0][None, None, :])
    h = _layernorm(x, params["emb_ln_g"], params["emb_ln_b"])
    bias = ((1.0 - mask.astype(jnp.float32)) * -10000.0)[:, None, None, :]
    stk = params["stacked"]
    scale = 1.0 / (HEAD_DIM ** 0.5)
    for l in range(N_LAYERS):
        qkv = h @ stk["w_qkv"][l] + stk["b_qkv"][l]
        q, k, v = jnp.split(qkv, 3, axis=-1)
        split = lambda t: t.reshape(B, S, N_HEADS, HEAD_DIM).transpose(0, 2, 1, 3)
        s = jnp.einsum("bhqd,bhkd->bhqk", split(q), split(k)) * scale + bias
        p = jax.nn.softmax(s, axis=-1)
        ctx = jnp.einsum("bhqk,bhkd->bhqd", p, split(v))
        ctx = ctx.transpose(0, 2, 1, 3).reshape(B, S, HIDDEN)
        h1 = _layernorm(ctx @ stk["w_o"][l] + stk["b_o"][l] + h,
                        stk["ln1_g"][l], stk["ln1_b"][l])
        inter = _gelu(h1 @ stk["w_i"][l] + stk["b_i"][l])
        h = _layernorm(inter @ stk["w_f"][l] + stk["b_f"][l] + h1,
                       stk["ln2_g"][l], stk["ln2_b"][l])
    pooled = jnp.tanh(h[:, 0, :] @ params["pool_w"] + params["pool_b"])
    return jnp.maximum(pooled @ params["cls_w"] + params["cls_b"], 0.0)


# ------------------------------------ main ------------------------------------

if __name__ == "__main__":
    key = jax.random.PRNGKey(0)
    k_param, k_ids = jax.random.split(key)

    params = init_params(k_param)
    prepped = prepare_kernel_params(params)       # one-time (not in timed path)

    B, S = 2, 8
    input_id = jax.random.randint(k_ids, (B, S), 0, VOCAB, dtype=jnp.int32)
    mask = jnp.ones((B, S), dtype=jnp.int32).at[1, 6:].set(0)  # pad last tokens

    out = jax.jit(bert_classifier_forward)(prepped, input_id, mask)
    out = jax.block_until_ready(out)

    ref = bert_classifier_ref(params, input_id, mask)
    assert out.shape == (B, N_CLASSES)
    assert bool(jnp.all(out >= 0.0))                            # ReLU output
    assert bool(jnp.allclose(out, ref, atol=1e-3, rtol=1e-2)), (out, ref)
    print("KERNEL_OK")
</pallas_src>

<mosaic_0001>
module attributes {stable_mosaic.version = 11 : i64} {
  func.func @_bert_fused_kernel(%arg0: memref<16x32xf32, #tpu.memory_space<vmem>>, %arg1: memref<2x8xf32, #tpu.memory_space<vmem>>, %arg2: memref<1x32xf32, #tpu.memory_space<vmem>>, %arg3: memref<1x32xf32, #tpu.memory_space<vmem>>, %arg4: memref<2x32x96xf32, #tpu.memory_space<vmem>>, %arg5: memref<2x1x96xf32, #tpu.memory_space<vmem>>, %arg6: memref<2x32x32xf32, #tpu.memory_space<vmem>>, %arg7: memref<2x1x32xf32, #tpu.memory_space<vmem>>, %arg8: memref<2x1x32xf32, #tpu.memory_space<vmem>>, %arg9: memref<2x1x32xf32, #tpu.memory_space<vmem>>, %arg10: memref<2x32x128xf32, #tpu.memory_space<vmem>>, %arg11: memref<2x1x128xf32, #tpu.memory_space<vmem>>, %arg12: memref<2x128x32xf32, #tpu.memory_space<vmem>>, %arg13: memref<2x1x32xf32, #tpu.memory_space<vmem>>, %arg14: memref<2x1x32xf32, #tpu.memory_space<vmem>>, %arg15: memref<2x1x32xf32, #tpu.memory_space<vmem>>, %arg16: memref<32x32xf32, #tpu.memory_space<vmem>>, %arg17: memref<1x32xf32, #tpu.memory_space<vmem>>, %arg18: memref<32x2xf32, #tpu.memory_space<vmem>>, %arg19: memref<1x2xf32, #tpu.memory_space<vmem>>, %arg20: memref<2x2xf32, #tpu.memory_space<vmem>>) attributes {dimension_semantics = [], scalar_prefetch = 0 : i64, scratch_operands = 0 : i64, tpu.core_type = #tpu.core_type<tc>} {
    %c0 = arith.constant 0 : index
    %c0_0 = arith.constant 0 : index
    %0 = vector.load %arg0[%c0, %c0_0] : memref<16x32xf32, #tpu.memory_space<vmem>>, vector<16x32xf32>
    %c0_1 = arith.constant 0 : index
    %c0_2 = arith.constant 0 : index
    %1 = vector.load %arg2[%c0_1, %c0_2] : memref<1x32xf32, #tpu.memory_space<vmem>>, vector<1x32xf32>
    %c0_3 = arith.constant 0 : index
    %c0_4 = arith.constant 0 : index
    %2 = vector.load %arg3[%c0_3, %c0_4] : memref<1x32xf32, #tpu.memory_space<vmem>>, vector<1x32xf32>
    %cst = arith.constant dense<0.000000e+00> : vector<16xf32>
    %3 = vector.multi_reduction <add>, %0, %cst [1] : vector<16x32xf32> to vector<16xf32>
    %4 = vector.shape_cast %3 : vector<16xf32> to vector<16x1xf32>
    %cst_5 = arith.constant 3.200000e+01 : f32
    %5 = vector.broadcast %cst_5 : f32 to vector<16x1xf32>
    %6 = arith.divf %4, %5 : vector<16x1xf32>
    %7 = vector.broadcast %6 : vector<16x1xf32> to vector<16x32xf32>
    %8 = arith.subf %0, %7 : vector<16x32xf32>
    %9 = vector.broadcast %6 : vector<16x1xf32> to vector<16x32xf32>
    %10 = arith.subf %0, %9 : vector<16x32xf32>
    %11 = arith.mulf %8, %10 : vector<16x32xf32>
    %cst_6 = arith.constant dense<0.000000e+00> : vector<16xf32>
    %12 = vector.multi_reduction <add>, %11, %cst_6 [1] : vector<16x32xf32> to vector<16xf32>
    %13 = vector.shape_cast %12 : vector<16xf32> to vector<16x1xf32>
    %cst_7 = arith.constant 3.200000e+01 : f32
    %14 = vector.broadcast %cst_7 : f32 to vector<16x1xf32>
    %15 = arith.divf %13, %14 : vector<16x1xf32>
    %16 = vector.broadcast %6 : vector<16x1xf32> to vector<16x32xf32>
    %17 = arith.subf %0, %16 : vector<16x32xf32>
    %cst_8 = arith.constant 9.99999996E-13 : f32
    %18 = vector.broadcast %cst_8 : f32 to vector<16x1xf32>
    %19 = arith.addf %15, %18 : vector<16x1xf32>
    %20 = math.rsqrt %19 : vector<16x1xf32>
    %21 = vector.broadcast %20 : vector<16x1xf32> to vector<16x32xf32>
    %22 = arith.mulf %17, %21 : vector<16x32xf32>
    %23 = vector.broadcast %1 : vector<1x32xf32> to vector<16x32xf32>
    %24 = arith.mulf %22, %23 : vector<16x32xf32>
    %25 = vector.broadcast %2 : vector<1x32xf32> to vector<16x32xf32>
    %26 = arith.addf %24, %25 : vector<16x32xf32>
    %c0_9 = arith.constant 0 : index
    %c0_10 = arith.constant 0 : index
    %27 = vector.load %arg1[%c0_9, %c0_10] : memref<2x8xf32, #tpu.memory_space<vmem>>, vector<2x8xf32>
    %cst_11 = arith.constant 1.000000e+00 : f32
    %28 = vector.broadcast %cst_11 : f32 to vector<2x8xf32>
    %29 = arith.subf %28, %27 : vector<2x8xf32>
    %cst_12 = arith.constant -1.000000e+04 : f32
    %30 = vector.broadcast %cst_12 : f32 to vector<2x8xf32>
    %31 = arith.mulf %29, %30 : vector<2x8xf32>
    %c0_13 = arith.constant 0 : index
    %c0_14 = arith.constant 0 : index
    %c0_15 = arith.constant 0 : index
    %32 = vector.load %arg4[%c0_13, %c0_14, %c0_15] : memref<2x32x96xf32, #tpu.memory_space<vmem>>, vector<1x32x96xf32>
    %33 = vector.shape_cast %32 : vector<1x32x96xf32> to vector<32x96xf32>
    %cst_16 = arith.constant dense<0.000000e+00> : vector<16x96xf32>
    %34 = tpu.matmul %26, %33, %cst_16 {dimension_numbers = #tpu.dot_dimension_numbers<[1], [0], [0], [1], [0, 0, 1, 1], [], []>} : vector<16x32xf32>, vector<32x96xf32>, vector<16x96xf32> -> vector<16x96xf32>
    %c0_17 = arith.constant 0 : index
    %c0_18 = arith.constant 0 : index
    %c0_19 = arith.constant 0 : index
    %35 = vector.load %arg5[%c0_17, %c0_18, %c0_19] : memref<2x1x96xf32, #tpu.memory_space<vmem>>, vector<1x1x96xf32>
    %36 = vector.shape_cast %35 : vector<1x1x96xf32> to vector<1x96xf32>
    %37 = vector.broadcast %36 : vector<1x96xf32> to vector<16x96xf32>
    %38 = arith.addf %34, %37 : vector<16x96xf32>
    %39 = vector.extract_strided_slice %38 {offsets = [0, 0], sizes = [8, 96], strides = [1, 1]} : vector<16x96xf32> to vector<8x96xf32>
    %40 = vector.extract_strided_slice %31 {offsets = [0, 0], sizes = [1, 8], strides = [1, 1]} : vector<2x8xf32> to vector<1x8xf32>
    %41 = vector.extract_strided_slice %39 {offsets = [0, 0], sizes = [8, 8], strides = [1, 1]} : vector<8x96xf32> to vector<8x8xf32>
    %42 = vector.extract_strided_slice %39 {offsets = [0, 32], sizes = [8, 8], strides = [1, 1]} : vector<8x96xf32> to vector<8x8xf32>
    %43 = vector.extract_strided_slice %39 {offsets = [0, 64], sizes = [8, 8], strides = [1, 1]} : vector<8x96xf32> to vector<8x8xf32>
    %cst_20 = arith.constant dense<0.000000e+00> : vector<8x8xf32>
    %44 = tpu.matmul %41, %42, %cst_20 {dimension_numbers = #tpu.dot_dimension_numbers<[1], [1], [0], [0], [0, 0, 1, 0], [], []>} : vector<8x8xf32>, vector<8x8xf32>, vector<8x8xf32> -> vector<8x8xf32>
    %45 = vector.broadcast %40 : vector<1x8xf32> to vector<8x8xf32>
    %46 = arith.addf %44, %45 : vector<8x8xf32>
    %cst_21 = arith.constant dense<0xFF800000> : vector<8xf32>
    %47 = vector.multi_reduction <maximumf>, %46, %cst_21 [1] : vector<8x8xf32> to vector<8xf32>
    %48 = vector.shape_cast %47 : vector<8xf32> to vector<8x1xf32>
    %49 = vector.broadcast %48 : vector<8x1xf32> to vector<8x8xf32>
    %50 = arith.subf %46, %49 : vector<8x8xf32>
    %51 = math.exp %50 : vector<8x8xf32>
    %cst_22 = arith.constant dense<0.000000e+00> : vector<8xf32>
    %52 = vector.multi_reduction <add>, %51, %cst_22 [1] : vector<8x8xf32> to vector<8xf32>
    %53 = vector.shape_cast %52 : vector<8xf32> to vector<8x1xf32>
    %54 = tpu.reciprocal %53 {approx = true} : vector<8x1xf32> -> vector<8x1xf32>
    %55 = vector.broadcast %54 : vector<8x1xf32> to vector<8x8xf32>
    %56 = arith.mulf %51, %55 : vector<8x8xf32>
    %cst_23 = arith.constant dense<0.000000e+00> : vector<8x8xf32>
    %57 = tpu.matmul %56, %43, %cst_23 {dimension_numbers = #tpu.dot_dimension_numbers<[1], [0], [0], [1], [0, 0, 1, 1], [], []>} : vector<8x8xf32>, vector<8x8xf32>, vector<8x8xf32> -> vector<8x8xf32>
    %58 = vector.extract_strided_slice %39 {offsets = [0, 8], sizes = [8, 8], strides = [1, 1]} : vector<8x96xf32> to vector<8x8xf32>
    %59 = vector.extract_strided_slice %39 {offsets = [0, 40], sizes = [8, 8], strides = [1, 1]} : vector<8x96xf32> to vector<8x8xf32>
    %60 = vector.extract_strided_slice %39 {offsets = [0, 72], sizes = [8, 8], strides = [1, 1]} : vector<8x96xf32> to vector<8x8xf32>
    %cst_24 = arith.constant dense<0.000000e+00> : vector<8x8xf32>
    %61 = tpu.matmul %58, %59, %cst_24 {dimension_numbers = #tpu.dot_dimension_numbers<[1], [1], [0], [0], [0, 0, 1, 0], [], []>} : vector<8x8xf32>, vector<8x8xf32>, vector<8x8xf32> -> vector<8x8xf32>
    %62 = vector.broadcast %40 : vector<1x8xf32> to vector<8x8xf32>
    %63 = arith.addf %61, %62 : vector<8x8xf32>
    %cst_25 = arith.constant dense<0xFF800000> : vector<8xf32>
    %64 = vector.multi_reduction <maximumf>, %63, %cst_25 [1] : vector<8x8xf32> to vector<8xf32>
    %65 = vector.shape_cast %64 : vector<8xf32> to vector<8x1xf32>
    %66 = vector.broadcast %65 : vector<8x1xf32> to vector<8x8xf32>
    %67 = arith.subf %63, %66 : vector<8x8xf32>
    %68 = math.exp %67 : vector<8x8xf32>
    %cst_26 = arith.constant dense<0.000000e+00> : vector<8xf32>
    %69 = vector.multi_reduction <add>, %68, %cst_26 [1] : vector<8x8xf32> to vector<8xf32>
    %70 = vector.shape_cast %69 : vector<8xf32> to vector<8x1xf32>
    %71 = tpu.reciprocal %70 {approx = true} : vector<8x1xf32> -> vector<8x1xf32>
    %72 = vector.broadcast %71 : vector<8x1xf32> to vector<8x8xf32>
    %73 = arith.mulf %68, %72 : vector<8x8xf32>
    %cst_27 = arith.constant dense<0.000000e+00> : vector<8x8xf32>
    %74 = tpu.matmul %73, %60, %cst_27 {dimension_numbers = #tpu.dot_dimension_numbers<[1], [0], [0], [1], [0, 0, 1, 1], [], []>} : vector<8x8xf32>, vector<8x8xf32>, vector<8x8xf32> -> vector<8x8xf32>
    %75 = vector.extract_strided_slice %39 {offsets = [0, 16], sizes = [8, 8], strides = [1, 1]} : vector<8x96xf32> to vector<8x8xf32>
    %76 = vector.extract_strided_slice %39 {offsets = [0, 48], sizes = [8, 8], strides = [1, 1]} : vector<8x96xf32> to vector<8x8xf32>
    %77 = vector.extract_strided_slice %39 {offsets = [0, 80], sizes = [8, 8], strides = [1, 1]} : vector<8x96xf32> to vector<8x8xf32>
    %cst_28 = arith.constant dense<0.000000e+00> : vector<8x8xf32>
    %78 = tpu.matmul %75, %76, %cst_28 {dimension_numbers = #tpu.dot_dimension_numbers<[1], [1], [0], [0], [0, 0, 1, 0], [], []>} : vector<8x8xf32>, vector<8x8xf32>, vector<8x8xf32> -> vector<8x8xf32>
    %79 = vector.broadcast %40 : vector<1x8xf32> to vector<8x8xf32>
    %80 = arith.addf %78, %79 : vector<8x8xf32>
    %cst_29 = arith.constant dense<0xFF800000> : vector<8xf32>
    %81 = vector.multi_reduction <maximumf>, %80, %cst_29 [1] : vector<8x8xf32> to vector<8xf32>
    %82 = vector.shape_cast %81 : vector<8xf32> to vector<8x1xf32>
    %83 = vector.broadcast %82 : vector<8x1xf32> to vector<8x8xf32>
    %84 = arith.subf %80, %83 : vector<8x8xf32>
    %85 = math.exp %84 : vector<8x8xf32>
    %cst_30 = arith.constant dense<0.000000e+00> : vector<8xf32>
    %86 = vector.multi_reduction <add>, %85, %cst_30 [1] : vector<8x8xf32> to vector<8xf32>
    %87 = vector.shape_cast %86 : vector<8xf32> to vector<8x1xf32>
    %88 = tpu.reciprocal %87 {approx = true} : vector<8x1xf32> -> vector<8x1xf32>
    %89 = vector.broadcast %88 : vector<8x1xf32> to vector<8x8xf32>
    %90 = arith.mulf %85, %89 : vector<8x8xf32>
    %cst_31 = arith.constant dense<0.000000e+00> : vector<8x8xf32>
    %91 = tpu.matmul %90, %77, %cst_31 {dimension_numbers = #tpu.dot_dimension_numbers<[1], [0], [0], [1], [0, 0, 1, 1], [], []>} : vector<8x8xf32>, vector<8x8xf32>, vector<8x8xf32> -> vector<8x8xf32>
    %92 = vector.extract_strided_slice %39 {offsets = [0, 24], sizes = [8, 8], strides = [1, 1]} : vector<8x96xf32> to vector<8x8xf32>
    %93 = vector.extract_strided_slice %39 {offsets = [0, 56], sizes = [8, 8], strides = [1, 1]} : vector<8x96xf32> to vector<8x8xf32>
    %94 = vector.extract_strided_slice %39 {offsets = [0, 88], sizes = [8, 8], strides = [1, 1]} : vector<8x96xf32> to vector<8x8xf32>
    %cst_32 = arith.constant dense<0.000000e+00> : vector<8x8xf32>
    %95 = tpu.matmul %92, %93, %cst_32 {dimension_numbers = #tpu.dot_dimension_numbers<[1], [1], [0], [0], [0, 0, 1, 0], [], []>} : vector<8x8xf32>, vector<8x8xf32>, vector<8x8xf32> -> vector<8x8xf32>
    %96 = vector.broadcast %40 : vector<1x8xf32> to vector<8x8xf32>
    %97 = arith.addf %95, %96 : vector<8x8xf32>
    %cst_33 = arith.constant dense<0xFF800000> : vector<8xf32>
    %98 = vector.multi_reduction <maximumf>, %97, %cst_33 [1] : vector<8x8xf32> to vector<8xf32>
    %99 = vector.shape_cast %98 : vector<8xf32> to vector<8x1xf32>
    %100 = vector.broadcast %99 : vector<8x1xf32> to vector<8x8xf32>
    %101 = arith.subf %97, %100 : vector<8x8xf32>
    %102 = math.exp %101 : vector<8x8xf32>
    %cst_34 = arith.constant dense<0.000000e+00> : vector<8xf32>
    %103 = vector.multi_reduction <add>, %102, %cst_34 [1] : vector<8x8xf32> to vector<8xf32>
    %104 = vector.shape_cast %103 : vector<8xf32> to vector<8x1xf32>
    %105 = tpu.reciprocal %104 {approx = true} : vector<8x1xf32> -> vector<8x1xf32>
    %106 = vector.broadcast %105 : vector<8x1xf32> to vector<8x8xf32>
    %107 = arith.mulf %102, %106 : vector<8x8xf32>
    %cst_35 = arith.constant dense<0.000000e+00> : vector<8x8xf32>
    %108 = tpu.matmul %107, %94, %cst_35 {dimension_numbers = #tpu.dot_dimension_numbers<[1], [0], [0], [1], [0, 0, 1, 1], [], []>} : vector<8x8xf32>, vector<8x8xf32>, vector<8x8xf32> -> vector<8x8xf32>
    %109 = tpu.concatenate %57, %74, %91, %108 in 1 : vector<8x8xf32>, vector<8x8xf32>, vector<8x8xf32>, vector<8x8xf32> -> vector<8x32xf32>
    %110 = vector.extract_strided_slice %38 {offsets = [8, 0], sizes = [8, 96], strides = [1, 1]} : vector<16x96xf32> to vector<8x96xf32>
    %111 = vector.extract_strided_slice %31 {offsets = [1, 0], sizes = [1, 8], strides = [1, 1]} : vector<2x8xf32> to vector<1x8xf32>
    %112 = vector.extract_strided_slice %110 {offsets = [0, 0], sizes = [8, 8], strides = [1, 1]} : vector<8x96xf32> to vector<8x8xf32>
    %113 = vector.extract_strided_slice %110 {offsets = [0, 32], sizes = [8, 8], strides = [1, 1]} : vector<8x96xf32> to vector<8x8xf32>
    %114 = vector.extract_strided_slice %110 {offsets = [0, 64], sizes = [8, 8], strides = [1, 1]} : vector<8x96xf32> to vector<8x8xf32>
    %cst_36 = arith.constant dense<0.000000e+00> : vector<8x8xf32>
    %115 = tpu.matmul %112, %113, %cst_36 {dimension_numbers = #tpu.dot_dimension_numbers<[1], [1], [0], [0], [0, 0, 1, 0], [], []>} : vector<8x8xf32>, vector<8x8xf32>, vector<8x8xf32> -> vector<8x8xf32>
    %116 = vector.broadcast %111 : vector<1x8xf32> to vector<8x8xf32>
    %117 = arith.addf %115, %116 : vector<8x8xf32>
    %cst_37 = arith.constant dense<0xFF800000> : vector<8xf32>
    %118 = vector.multi_reduction <maximumf>, %117, %cst_37 [1] : vector<8x8xf32> to vector<8xf32>
    %119 = vector.shape_cast %118 : vector<8xf32> to vector<8x1xf32>
    %120 = vector.broadcast %119 : vector<8x1xf32> to vector<8x8xf32>
    %121 = arith.subf %117, %120 : vector<8x8xf32>
    %122 = math.exp %121 : vector<8x8xf32>
    %cst_38 = arith.constant dense<0.000000e+00> : vector<8xf32>
    %123 = vector.multi_reduction <add>, %122, %cst_38 [1] : vector<8x8xf32> to vector<8xf32>
    %124 = vector.shape_cast %123 : vector<8xf32> to vector<8x1xf32>
    %125 = tpu.reciprocal %124 {approx = true} : vector<8x1xf32> -> vector<8x1xf32>
    %126 = vector.broadcast %125 : vector<8x1xf32> to vector<8x8xf32>
    %127 = arith.mulf %122, %126 : vector<8x8xf32>
    %cst_39 = arith.constant dense<0.000000e+00> : vector<8x8xf32>
    %128 = tpu.matmul %127, %114, %cst_39 {dimension_numbers = #tpu.dot_dimension_numbers<[1], [0], [0], [1], [0, 0, 1, 1], [], []>} : vector<8x8xf32>, vector<8x8xf32>, vector<8x8xf32> -> vector<8x8xf32>
    %129 = vector.extract_strided_slice %110 {offsets = [0, 8], sizes = [8, 8], strides = [1, 1]} : vector<8x96xf32> to vector<8x8xf32>
    %130 = vector.extract_strided_slice %110 {offsets = [0, 40], sizes = [8, 8], strides = [1, 1]} : vector<8x96xf32> to vector<8x8xf32>
    %131 = vector.extract_strided_slice %110 {offsets = [0, 72], sizes = [8, 8], strides = [1, 1]} : vector<8x96xf32> to vector<8x8xf32>
    %cst_40 = arith.constant dense<0.000000e+00> : vector<8x8xf32>
    %132 = tpu.matmul %129, %130, %cst_40 {dimension_numbers = #tpu.dot_dimension_numbers<[1], [1], [0], [0], [0, 0, 1, 0], [], []>} : vector<8x8xf32>, vector<8x8xf32>, vector<8x8xf32> -> vector<8x8xf32>
    %133 = vector.broadcast %111 : vector<1x8xf32> to vector<8x8xf32>
    %134 = arith.addf %132, %133 : vector<8x8xf32>
    %cst_41 = arith.constant dense<0xFF800000> : vector<8xf32>
    %135 = vector.multi_reduction <maximumf>, %134, %cst_41 [1] : vector<8x8xf32> to vector<8xf32>
    %136 = vector.shape_cast %135 : vector<8xf32> to vector<8x1xf32>
    %137 = vector.broadcast %136 : vector<8x1xf32> to vector<8x8xf32>
    %138 = arith.subf %134, %137 : vector<8x8xf32>
    %139 = math.exp %138 : vector<8x8xf32>
    %cst_42 = arith.constant dense<0.000000e+00> : vector<8xf32>
    %140 = vector.multi_reduction <add>, %139, %cst_42 [1] : vector<8x8xf32> to vector<8xf32>
    %141 = vector.shape_cast %140 : vector<8xf32> to vector<8x1xf32>
    %142 = tpu.reciprocal %141 {approx = true} : vector<8x1xf32> -> vector<8x1xf32>
    %143 = vector.broadcast %142 : vector<8x1xf32> to vector<8x8xf32>
    %144 = arith.mulf %139, %143 : vector<8x8xf32>
    %cst_43 = arith.constant dense<0.000000e+00> : vector<8x8xf32>
    %145 = tpu.matmul %144, %131, %cst_43 {dimension_numbers = #tpu.dot_dimension_numbers<[1], [0], [0], [1], [0, 0, 1, 1], [], []>} : vector<8x8xf32>, vector<8x8xf32>, vector<8x8xf32> -> vector<8x8xf32>
    %146 = vector.extract_strided_slice %110 {offsets = [0, 16], sizes = [8, 8], strides = [1, 1]} : vector<8x96xf32> to vector<8x8xf32>
    %147 = vector.extract_strided_slice %110 {offsets = [0, 48], sizes = [8, 8], strides = [1, 1]} : vector<8x96xf32> to vector<8x8xf32>
    %148 = vector.extract_strided_slice %110 {offsets = [0, 80], sizes = [8, 8], strides = [1, 1]} : vector<8x96xf32> to vector<8x8xf32>
    %cst_44 = arith.constant dense<0.000000e+00> : vector<8x8xf32>
    %149 = tpu.matmul %146, %147, %cst_44 {dimension_numbers = #tpu.dot_dimension_numbers<[1], [1], [0], [0], [0, 0, 1, 0], [], []>} : vector<8x8xf32>, vector<8x8xf32>, vector<8x8xf32> -> vector<8x8xf32>
    %150 = vector.broadcast %111 : vector<1x8xf32> to vector<8x8xf32>
    %151 = arith.addf %149, %150 : vector<8x8xf32>
    %cst_45 = arith.constant dense<0xFF800000> : vector<8xf32>
    %152 = vector.multi_reduction <maximumf>, %151, %cst_45 [1] : vector<8x8xf32> to vector<8xf32>
    %153 = vector.shape_cast %152 : vector<8xf32> to vector<8x1xf32>
    %154 = vector.broadcast %153 : vector<8x1xf32> to vector<8x8xf32>
    %155 = arith.subf %151, %154 : vector<8x8xf32>
    %156 = math.exp %155 : vector<8x8xf32>
    %cst_46 = arith.constant dense<0.000000e+00> : vector<8xf32>
    %157 = vector.multi_reduction <add>, %156, %cst_46 [1] : vector<8x8xf32> to vector<8xf32>
    %158 = vector.shape_cast %157 : vector<8xf32> to vector<8x1xf32>
    %159 = tpu.reciprocal %158 {approx = true} : vector<8x1xf32> -> vector<8x1xf32>
    %160 = vector.broadcast %159 : vector<8x1xf32> to vector<8x8xf32>
    %161 = arith.mulf %156, %160 : vector<8x8xf32>
    %cst_47 = arith.constant dense<0.000000e+00> : vector<8x8xf32>
    %162 = tpu.matmul %161, %148, %cst_47 {dimension_numbers = #tpu.dot_dimension_numbers<[1], [0], [0], [1], [0, 0, 1, 1], [], []>} : vector<8x8xf32>, vector<8x8xf32>, vector<8x8xf32> -> vector<8x8xf32>
    %163 = vector.extract_strided_slice %110 {offsets = [0, 24], sizes = [8, 8], strides = [1, 1]} : vector<8x96xf32> to vector<8x8xf32>
    %164 = vector.extract_strided_slice %110 {offsets = [0, 56], sizes = [8, 8], strides = [1, 1]} : vector<8x96xf32> to vector<8x8xf32>
    %165 = vector.extract_strided_slice %110 {offsets = [0, 88], sizes = [8, 8], strides = [1, 1]} : vector<8x96xf32> to vector<8x8xf32>
    %cst_48 = arith.constant dense<0.000000e+00> : vector<8x8xf32>
    %166 = tpu.matmul %163, %164, %cst_48 {dimension_numbers = #tpu.dot_dimension_numbers<[1], [1], [0], [0], [0, 0, 1, 0], [], []>} : vector<8x8xf32>, vector<8x8xf32>, vector<8x8xf32> -> vector<8x8xf32>
    %167 = vector.broadcast %111 : vector<1x8xf32> to vector<8x8xf32>
    %168 = arith.addf %166, %167 : vector<8x8xf32>
    %cst_49 = arith.constant dense<0xFF800000> : vector<8xf32>
    %169 = vector.multi_reduction <maximumf>, %168, %cst_49 [1] : vector<8x8xf32> to vector<8xf32>
    %170 = vector.shape_cast %169 : vector<8xf32> to vector<8x1xf32>
    %171 = vector.broadcast %170 : vector<8x1xf32> to vector<8x8xf32>
    %172 = arith.subf %168, %171 : vector<8x8xf32>
    %173 = math.exp %172 : vector<8x8xf32>
    %cst_50 = arith.constant dense<0.000000e+00> : vector<8xf32>
    %174 = vector.multi_reduction <add>, %173, %cst_50 [1] : vector<8x8xf32> to vector<8xf32>
    %175 = vector.shape_cast %174 : vector<8xf32> to vector<8x1xf32>
    %176 = tpu.reciprocal %175 {approx = true} : vector<8x1xf32> -> vector<8x1xf32>
    %177 = vector.broadcast %176 : vector<8x1xf32> to vector<8x8xf32>
    %178 = arith.mulf %173, %177 : vector<8x8xf32>
    %cst_51 = arith.constant dense<0.000000e+00> : vector<8x8xf32>
    %179 = tpu.matmul %178, %165, %cst_51 {dimension_numbers = #tpu.dot_dimension_numbers<[1], [0], [0], [1], [0, 0, 1, 1], [], []>} : vector<8x8xf32>, vector<8x8xf32>, vector<8x8xf32> -> vector<8x8xf32>
    %180 = tpu.concatenate %128, %145, %162, %179 in 1 : vector<8x8xf32>, vector<8x8xf32>, vector<8x8xf32>, vector<8x8xf32> -> vector<8x32xf32>
    %181 = tpu.concatenate %109, %180 in 0 : vector<8x32xf32>, vector<8x32xf32> -> vector<16x32xf32>
    %c0_52 = arith.constant 0 : index
    %c0_53 = arith.constant 0 : index
    %c0_54 = arith.constant 0 : index
    %182 = vector.load %arg6[%c0_52, %c0_53, %c0_54] : memref<2x32x32xf32, #tpu.memory_space<vmem>>, vector<1x32x32xf32>
    %183 = vector.shape_cast %182 : vector<1x32x32xf32> to vector<32x32xf32>
    %cst_55 = arith.constant dense<0.000000e+00> : vector<16x32xf32>
    %184 = tpu.matmul %181, %183, %cst_55 {dimension_numbers = #tpu.dot_dimension_numbers<[1], [0], [0], [1], [0, 0, 1, 1], [], []>} : vector<16x32xf32>, vector<32x32xf32>, vector<16x32xf32> -> vector<16x32xf32>
    %c0_56 = arith.constant 0 : index
    %c0_57 = arith.constant 0 : index
    %c0_58 = arith.constant 0 : index
    %185 = vector.load %arg7[%c0_56, %c0_57, %c0_58] : memref<2x1x32xf32, #tpu.memory_space<vmem>>, vector<1x1x32xf32>
    %186 = vector.shape_cast %185 : vector<1x1x32xf32> to vector<1x32xf32>
    %187 = vector.broadcast %186 : vector<1x32xf32> to vector<16x32xf32>
    %188 = arith.addf %184, %187 : vector<16x32xf32>
    %189 = arith.addf %188, %26 : vector<16x32xf32>
    %c0_59 = arith.constant 0 : index
    %c0_60 = arith.constant 0 : index
    %c0_61 = arith.constant 0 : index
    %190 = vector.load %arg8[%c0_59, %c0_60, %c0_61] : memref<2x1x32xf32, #tpu.memory_space<vmem>>, vector<1x1x32xf32>
    %191 = vector.shape_cast %190 : vector<1x1x32xf32> to vector<1x32xf32>
    %c0_62 = arith.constant 0 : index
    %c0_63 = arith.constant 0 : index
    %c0_64 = arith.constant 0 : index
    %192 = vector.load %arg9[%c0_62, %c0_63, %c0_64] : memref<2x1x32xf32, #tpu.memory_space<vmem>>, vector<1x1x32xf32>
    %193 = vector.shape_cast %192 : vector<1x1x32xf32> to vector<1x32xf32>
    %cst_65 = arith.constant dense<0.000000e+00> : vector<16xf32>
    %194 = vector.multi_reduction <add>, %189, %cst_65 [1] : vector<16x32xf32> to vector<16xf32>
    %195 = vector.shape_cast %194 : vector<16xf32> to vector<16x1xf32>
    %cst_66 = arith.constant 3.200000e+01 : f32
    %196 = vector.broadcast %cst_66 : f32 to vector<16x1xf32>
    %197 = arith.divf %195, %196 : vector<16x1xf32>
    %198 = vector.broadcast %197 : vector<16x1xf32> to vector<16x32xf32>
    %199 = arith.subf %189, %198 : vector<16x32xf32>
    %200 = vector.broadcast %197 : vector<16x1xf32> to vector<16x32xf32>
    %201 = arith.subf %189, %200 : vector<16x32xf32>
    %202 = arith.mulf %199, %201 : vector<16x32xf32>
    %cst_67 = arith.constant dense<0.000000e+00> : vector<16xf32>
    %203 = vector.multi_reduction <add>, %202, %cst_67 [1] : vector<16x32xf32> to vector<16xf32>
    %204 = vector.shape_cast %203 : vector<16xf32> to vector<16x1xf32>
    %cst_68 = arith.constant 3.200000e+01 : f32
    %205 = vector.broadcast %cst_68 : f32 to vector<16x1xf32>
    %206 = arith.divf %204, %205 : vector<16x1xf32>
    %207 = vector.broadcast %197 : vector<16x1xf32> to vector<16x32xf32>
    %208 = arith.subf %189, %207 : vector<16x32xf32>
    %cst_69 = arith.constant 9.99999996E-13 : f32
    %209 = vector.broadcast %cst_69 : f32 to vector<16x1xf32>
    %210 = arith.addf %206, %209 : vector<16x1xf32>
    %211 = math.rsqrt %210 : vector<16x1xf32>
    %212 = vector.broadcast %211 : vector<16x1xf32> to vector<16x32xf32>
    %213 = arith.mulf %208, %212 : vector<16x32xf32>
    %214 = vector.broadcast %191 : vector<1x32xf32> to vector<16x32xf32>
    %215 = arith.mulf %213, %214 : vector<16x32xf32>
    %216 = vector.broadcast %193 : vector<1x32xf32> to vector<16x32xf32>
    %217 = arith.addf %215, %216 : vector<16x32xf32>
    %c0_70 = arith.constant 0 : index
    %c0_71 = arith.constant 0 : index
    %c0_72 = arith.constant 0 : index
    %218 = vector.load %arg10[%c0_70, %c0_71, %c0_72] : memref<2x32x128xf32, #tpu.memory_space<vmem>>, vector<1x32x128xf32>
    %219 = vector.shape_cast %218 : vector<1x32x128xf32> to vector<32x128xf32>
    %cst_73 = arith.constant dense<0.000000e+00> : vector<16x128xf32>
    %220 = tpu.matmul %217, %219, %cst_73 {dimension_numbers = #tpu.dot_dimension_numbers<[1], [0], [0], [1], [0, 0, 1, 1], [], []>} : vector<16x32xf32>, vector<32x128xf32>, vector<16x128xf32> -> vector<16x128xf32>
    %c0_74 = arith.constant 0 : index
    %c0_75 = arith.constant 0 : index
    %c0_76 = arith.constant 0 : index
    %221 = vector.load %arg11[%c0_74, %c0_75, %c0_76] : memref<2x1x128xf32, #tpu.memory_space<vmem>>, vector<1x1x128xf32>
    %222 = vector.shape_cast %221 : vector<1x1x128xf32> to vector<1x128xf32>
    %223 = vector.broadcast %222 : vector<1x128xf32> to vector<16x128xf32>
    %224 = arith.addf %220, %223 : vector<16x128xf32>
    %cst_77 = arith.constant 5.000000e-01 : f32
    %225 = vector.broadcast %cst_77 : f32 to vector<16x128xf32>
    %226 = arith.mulf %225, %224 : vector<16x128xf32>
    %cst_78 = arith.constant 4.471500e-02 : f32
    %227 = vector.broadcast %cst_78 : f32 to vector<16x128xf32>
    %228 = arith.mulf %227, %224 : vector<16x128xf32>
    %229 = arith.mulf %228, %224 : vector<16x128xf32>
    %230 = arith.mulf %229, %224 : vector<16x128xf32>
    %231 = arith.addf %224, %230 : vector<16x128xf32>
    %cst_79 = arith.constant 0.797884583 : f32
    %232 = vector.broadcast %cst_79 : f32 to vector<16x128xf32>
    %233 = arith.mulf %232, %231 : vector<16x128xf32>
    %234 = math.tanh %233 : vector<16x128xf32>
    %cst_80 = arith.constant 1.000000e+00 : f32
    %235 = vector.broadcast %cst_80 : f32 to vector<16x128xf32>
    %236 = arith.addf %235, %234 : vector<16x128xf32>
    %237 = arith.mulf %226, %236 : vector<16x128xf32>
    %c0_81 = arith.constant 0 : index
    %c0_82 = arith.constant 0 : index
    %c0_83 = arith.constant 0 : index
    %238 = vector.load %arg12[%c0_81, %c0_82, %c0_83] : memref<2x128x32xf32, #tpu.memory_space<vmem>>, vector<1x128x32xf32>
    %239 = vector.shape_cast %238 : vector<1x128x32xf32> to vector<128x32xf32>
    %cst_84 = arith.constant dense<0.000000e+00> : vector<16x32xf32>
    %240 = tpu.matmul %237, %239, %cst_84 {dimension_numbers = #tpu.dot_dimension_numbers<[1], [0], [0], [1], [0, 0, 1, 1], [], []>} : vector<16x128xf32>, vector<128x32xf32>, vector<16x32xf32> -> vector<16x32xf32>
    %c0_85 = arith.constant 0 : index
    %c0_86 = arith.constant 0 : index
    %c0_87 = arith.constant 0 : index
    %241 = vector.load %arg13[%c0_85, %c0_86, %c0_87] : memref<2x1x32xf32, #tpu.memory_space<vmem>>, vector<1x1x32xf32>
    %242 = vector.shape_cast %241 : vector<1x1x32xf32> to vector<1x32xf32>
    %243 = vector.broadcast %242 : vector<1x32xf32> to vector<16x32xf32>
    %244 = arith.addf %240, %243 : vector<16x32xf32>
    %245 = arith.addf %244, %217 : vector<16x32xf32>
    %c0_88 = arith.constant 0 : index
    %c0_89 = arith.constant 0 : index
    %c0_90 = arith.constant 0 : index
    %246 = vector.load %arg14[%c0_88, %c0_89, %c0_90] : memref<2x1x32xf32, #tpu.memory_space<vmem>>, vector<1x1x32xf32>
    %247 = vector.shape_cast %246 : vector<1x1x32xf32> to vector<1x32xf32>
    %c0_91 = arith.constant 0 : index
    %c0_92 = arith.constant 0 : index
    %c0_93 = arith.constant 0 : index
    %248 = vector.load %arg15[%c0_91, %c0_92, %c0_93] : memref<2x1x32xf32, #tpu.memory_space<vmem>>, vector<1x1x32xf32>
    %249 = vector.shape_cast %248 : vector<1x1x32xf32> to vector<1x32xf32>
    %cst_94 = arith.constant dense<0.000000e+00> : vector<16xf32>
    %250 = vector.multi_reduction <add>, %245, %cst_94 [1] : vector<16x32xf32> to vector<16xf32>
    %251 = vector.shape_cast %250 : vector<16xf32> to vector<16x1xf32>
    %cst_95 = arith.constant 3.200000e+01 : f32
    %252 = vector.broadcast %cst_95 : f32 to vector<16x1xf32>
    %253 = arith.divf %251, %252 : vector<16x1xf32>
    %254 = vector.broadcast %253 : vector<16x1xf32> to vector<16x32xf32>
    %255 = arith.subf %245, %254 : vector<16x32xf32>
    %256 = vector.broadcast %253 : vector<16x1xf32> to vector<16x32xf32>
    %257 = arith.subf %245, %256 : vector<16x32xf32>
    %258 = arith.mulf %255, %257 : vector<16x32xf32>
    %cst_96 = arith.constant dense<0.000000e+00> : vector<16xf32>
    %259 = vector.multi_reduction <add>, %258, %cst_96 [1] : vector<16x32xf32> to vector<16xf32>
    %260 = vector.shape_cast %259 : vector<16xf32> to vector<16x1xf32>
    %cst_97 = arith.constant 3.200000e+01 : f32
    %261 = vector.broadcast %cst_97 : f32 to vector<16x1xf32>
    %262 = arith.divf %260, %261 : vector<16x1xf32>
    %263 = vector.broadcast %253 : vector<16x1xf32> to vector<16x32xf32>
    %264 = arith.subf %245, %263 : vector<16x32xf32>
    %cst_98 = arith.constant 9.99999996E-13 : f32
    %265 = vector.broadcast %cst_98 : f32 to vector<16x1xf32>
    %266 = arith.addf %262, %265 : vector<16x1xf32>
    %267 = math.rsqrt %266 : vector<16x1xf32>
    %268 = vector.broadcast %267 : vector<16x1xf32> to vector<16x32xf32>
    %269 = arith.mulf %264, %268 : vector<16x32xf32>
    %270 = vector.broadcast %247 : vector<1x32xf32> to vector<16x32xf32>
    %271 = arith.mulf %269, %270 : vector<16x32xf32>
    %272 = vector.broadcast %249 : vector<1x32xf32> to vector<16x32xf32>
    %273 = arith.addf %271, %272 : vector<16x32xf32>
    %c1 = arith.constant 1 : index
    %c0_99 = arith.constant 0 : index
    %c0_100 = arith.constant 0 : index
    %274 = vector.load %arg4[%c1, %c0_99, %c0_100] : memref<2x32x96xf32, #tpu.memory_space<vmem>>, vector<1x32x96xf32>
    %275 = vector.shape_cast %274 : vector<1x32x96xf32> to vector<32x96xf32>
    %cst_101 = arith.constant dense<0.000000e+00> : vector<16x96xf32>
    %276 = tpu.matmul %273, %275, %cst_101 {dimension_numbers = #tpu.dot_dimension_numbers<[1], [0], [0], [1], [0, 0, 1, 1], [], []>} : vector<16x32xf32>, vector<32x96xf32>, vector<16x96xf32> -> vector<16x96xf32>
    %c1_102 = arith.constant 1 : index
    %c0_103 = arith.constant 0 : index
    %c0_104 = arith.constant 0 : index
    %277 = vector.load %arg5[%c1_102, %c0_103, %c0_104] : memref<2x1x96xf32, #tpu.memory_space<vmem>>, vector<1x1x96xf32>
    %278 = vector.shape_cast %277 : vector<1x1x96xf32> to vector<1x96xf32>
    %279 = vector.broadcast %278 : vector<1x96xf32> to vector<16x96xf32>
    %280 = arith.addf %276, %279 : vector<16x96xf32>
    %281 = vector.extract_strided_slice %280 {offsets = [0, 0], sizes = [8, 96], strides = [1, 1]} : vector<16x96xf32> to vector<8x96xf32>
    %282 = vector.extract_strided_slice %31 {offsets = [0, 0], sizes = [1, 8], strides = [1, 1]} : vector<2x8xf32> to vector<1x8xf32>
    %283 = vector.extract_strided_slice %281 {offsets = [0, 0], sizes = [8, 8], strides = [1, 1]} : vector<8x96xf32> to vector<8x8xf32>
    %284 = vector.extract_strided_slice %281 {offsets = [0, 32], sizes = [8, 8], strides = [1, 1]} : vector<8x96xf32> to vector<8x8xf32>
    %285 = vector.extract_strided_slice %281 {offsets = [0, 64], sizes = [8, 8], strides = [1, 1]} : vector<8x96xf32> to vector<8x8xf32>
    %cst_105 = arith.constant dense<0.000000e+00> : vector<8x8xf32>
    %286 = tpu.matmul %283, %284, %cst_105 {dimension_numbers = #tpu.dot_dimension_numbers<[1], [1], [0], [0], [0, 0, 1, 0], [], []>} : vector<8x8xf32>, vector<8x8xf32>, vector<8x8xf32> -> vector<8x8xf32>
    %287 = vector.broadcast %282 : vector<1x8xf32> to vector<8x8xf32>
    %288 = arith.addf %286, %287 : vector<8x8xf32>
    %cst_106 = arith.constant dense<0xFF800000> : vector<8xf32>
    %289 = vector.multi_reduction <maximumf>, %288, %cst_106 [1] : vector<8x8xf32> to vector<8xf32>
    %290 = vector.shape_cast %289 : vector<8xf32> to vector<8x1xf32>
    %291 = vector.broadcast %290 : vector<8x1xf32> to vector<8x8xf32>
    %292 = arith.subf %288, %291 : vector<8x8xf32>
    %293 = math.exp %292 : vector<8x8xf32>
    %cst_107 = arith.constant dense<0.000000e+00> : vector<8xf32>
    %294 = vector.multi_reduction <add>, %293, %cst_107 [1] : vector<8x8xf32> to vector<8xf32>
    %295 = vector.shape_cast %294 : vector<8xf32> to vector<8x1xf32>
    %296 = tpu.reciprocal %295 {approx = true} : vector<8x1xf32> -> vector<8x1xf32>
    %297 = vector.broadcast %296 : vector<8x1xf32> to vector<8x8xf32>
    %298 = arith.mulf %293, %297 : vector<8x8xf32>
    %cst_108 = arith.constant dense<0.000000e+00> : vector<8x8xf32>
    %299 = tpu.matmul %298, %285, %cst_108 {dimension_numbers = #tpu.dot_dimension_numbers<[1], [0], [0], [1], [0, 0, 1, 1], [], []>} : vector<8x8xf32>, vector<8x8xf32>, vector<8x8xf32> -> vector<8x8xf32>
    %300 = vector.extract_strided_slice %281 {offsets = [0, 8], sizes = [8, 8], strides = [1, 1]} : vector<8x96xf32> to vector<8x8xf32>
    %301 = vector.extract_strided_slice %281 {offsets = [0, 40], sizes = [8, 8], strides = [1, 1]} : vector<8x96xf32> to vector<8x8xf32>
    %302 = vector.extract_strided_slice %281 {offsets = [0, 72], sizes = [8, 8], strides = [1, 1]} : vector<8x96xf32> to vector<8x8xf32>
    %cst_109 = arith.constant dense<0.000000e+00> : vector<8x8xf32>
    %303 = tpu.matmul %300, %301, %cst_109 {dimension_numbers = #tpu.dot_dimension_numbers<[1], [1], [0], [0], [0, 0, 1, 0], [], []>} : vector<8x8xf32>, vector<8x8xf32>, vector<8x8xf32> -> vector<8x8xf32>
    %304 = vector.broadcast %282 : vector<1x8xf32> to vector<8x8xf32>
    %305 = arith.addf %303, %304 : vector<8x8xf32>
    %cst_110 = arith.constant dense<0xFF800000> : vector<8xf32>
    %306 = vector.multi_reduction <maximumf>, %305, %cst_110 [1] : vector<8x8xf32> to vector<8xf32>
    %307 = vector.shape_cast %306 : vector<8xf32> to vector<8x1xf32>
    %308 = vector.broadcast %307 : vector<8x1xf32> to vector<8x8xf32>
    %309 = arith.subf %305, %308 : vector<8x8xf32>
    %310 = math.exp %309 : vector<8x8xf32>
    %cst_111 = arith.constant dense<0.000000e+00> : vector<8xf32>
    %311 = vector.multi_reduction <add>, %310, %cst_111 [1] : vector<8x8xf32> to vector<8xf32>
    %312 = vector.shape_cast %311 : vector<8xf32> to vector<8x1xf32>
    %313 = tpu.reciprocal %312 {approx = true} : vector<8x1xf32> -> vector<8x1xf32>
    %314 = vector.broadcast %313 : vector<8x1xf32> to vector<8x8xf32>
    %315 = arith.mulf %310, %314 : vector<8x8xf32>
    %cst_112 = arith.constant dense<0.000000e+00> : vector<8x8xf32>
    %316 = tpu.matmul %315, %302, %cst_112 {dimension_numbers = #tpu.dot_dimension_numbers<[1], [0], [0], [1], [0, 0, 1, 1], [], []>} : vector<8x8xf32>, vector<8x8xf32>, vector<8x8xf32> -> vector<8x8xf32>
    %317 = vector.extract_strided_slice %281 {offsets = [0, 16], sizes = [8, 8], strides = [1, 1]} : vector<8x96xf32> to vector<8x8xf32>
    %318 = vector.extract_strided_slice %281 {offsets = [0, 48], sizes = [8, 8], strides = [1, 1]} : vector<8x96xf32> to vector<8x8xf32>
    %319 = vector.extract_strided_slice %281 {offsets = [0, 80], sizes = [8, 8], strides = [1, 1]} : vector<8x96xf32> to vector<8x8xf32>
    %cst_113 = arith.constant dense<0.000000e+00> : vector<8x8xf32>
    %320 = tpu.matmul %317, %318, %cst_113 {dimension_numbers = #tpu.dot_dimension_numbers<[1], [1], [0], [0], [0, 0, 1, 0], [], []>} : vector<8x8xf32>, vector<8x8xf32>, vector<8x8xf32> -> vector<8x8xf32>
    %321 = vector.broadcast %282 : vector<1x8xf32> to vector<8x8xf32>
    %322 = arith.addf %320, %321 : vector<8x8xf32>
    %cst_114 = arith.constant dense<0xFF800000> : vector<8xf32>
    %323 = vector.multi_reduction <maximumf>, %322, %cst_114 [1] : vector<8x8xf32> to vector<8xf32>
    %324 = vector.shape_cast %323 : vector<8xf32> to vector<8x1xf32>
    %325 = vector.broadcast %324 : vector<8x1xf32> to vector<8x8xf32>
    %326 = arith.subf %322, %325 : vector<8x8xf32>
    %327 = math.exp %326 : vector<8x8xf32>
    %cst_115 = arith.constant dense<0.000000e+00> : vector<8xf32>
    %328 = vector.multi_reduction <add>, %327, %cst_115 [1] : vector<8x8xf32> to vector<8xf32>
    %329 = vector.shape_cast %328 : vector<8xf32> to vector<8x1xf32>
    %330 = tpu.reciprocal %329 {approx = true} : vector<8x1xf32> -> vector<8x1xf32>
    %331 = vector.broadcast %330 : vector<8x1xf32> to vector<8x8xf32>
    %332 = arith.mulf %327, %331 : vector<8x8xf32>
    %cst_116 = arith.constant dense<0.000000e+00> : vector<8x8xf32>
    %333 = tpu.matmul %332, %319, %cst_116 {dimension_numbers = #tpu.dot_dimension_numbers<[1], [0], [0], [1], [0, 0, 1, 1], [], []>} : vector<8x8xf32>, vector<8x8xf32>, vector<8x8xf32> -> vector<8x8xf32>
    %334 = vector.extract_strided_slice %281 {offsets = [0, 24], sizes = [8, 8], strides = [1, 1]} : vector<8x96xf32> to vector<8x8xf32>
    %335 = vector.extract_strided_slice %281 {offsets = [0, 56], sizes = [8, 8], strides = [1, 1]} : vector<8x96xf32> to vector<8x8xf32>
    %336 = vector.extract_strided_slice %281 {offsets = [0, 88], sizes = [8, 8], strides = [1, 1]} : vector<8x96xf32> to vector<8x8xf32>
    %cst_117 = arith.constant dense<0.000000e+00> : vector<8x8xf32>
    %337 = tpu.matmul %334, %335, %cst_117 {dimension_numbers = #tpu.dot_dimension_numbers<[1], [1], [0], [0], [0, 0, 1, 0], [], []>} : vector<8x8xf32>, vector<8x8xf32>, vector<8x8xf32> -> vector<8x8xf32>
    %338 = vector.broadcast %282 : vector<1x8xf32> to vector<8x8xf32>
    %339 = arith.addf %337, %338 : vector<8x8xf32>
    %cst_118 = arith.constant dense<0xFF800000> : vector<8xf32>
    %340 = vector.multi_reduction <maximumf>, %339, %cst_118 [1] : vector<8x8xf32> to vector<8xf32>
    %341 = vector.shape_cast %340 : vector<8xf32> to vector<8x1xf32>
    %342 = vector.broadcast %341 : vector<8x1xf32> to vector<8x8xf32>
    %343 = arith.subf %339, %342 : vector<8x8xf32>
    %344 = math.exp %343 : vector<8x8xf32>
    %cst_119 = arith.constant dense<0.000000e+00> : vector<8xf32>
    %345 = vector.multi_reduction <add>, %344, %cst_119 [1] : vector<8x8xf32> to vector<8xf32>
    %346 = vector.shape_cast %345 : vector<8xf32> to vector<8x1xf32>
    %347 = tpu.reciprocal %346 {approx = true} : vector<8x1xf32> -> vector<8x1xf32>
    %348 = vector.broadcast %347 : vector<8x1xf32> to vector<8x8xf32>
    %349 = arith.mulf %344, %348 : vector<8x8xf32>
    %cst_120 = arith.constant dense<0.000000e+00> : vector<8x8xf32>
    %350 = tpu.matmul %349, %336, %cst_120 {dimension_numbers = #tpu.dot_dimension_numbers<[1], [0], [0], [1], [0, 0, 1, 1], [], []>} : vector<8x8xf32>, vector<8x8xf32>, vector<8x8xf32> -> vector<8x8xf32>
    %351 = tpu.concatenate %299, %316, %333, %350 in 1 : vector<8x8xf32>, vector<8x8xf32>, vector<8x8xf32>, vector<8x8xf32> -> vector<8x32xf32>
    %352 = vector.extract_strided_slice %280 {offsets = [8, 0], sizes = [8, 96], strides = [1, 1]} : vector<16x96xf32> to vector<8x96xf32>
    %353 = vector.extract_strided_slice %31 {offsets = [1, 0], sizes = [1, 8], strides = [1, 1]} : vector<2x8xf32> to vector<1x8xf32>
    %354 = vector.extract_strided_slice %352 {offsets = [0, 0], sizes = [8, 8], strides = [1, 1]} : vector<8x96xf32> to vector<8x8xf32>
    %355 = vector.extract_strided_slice %352 {offsets = [0, 32], sizes = [8, 8], strides = [1, 1]} : vector<8x96xf32> to vector<8x8xf32>
    %356 = vector.extract_strided_slice %352 {offsets = [0, 64], sizes = [8, 8], strides = [1, 1]} : vector<8x96xf32> to vector<8x8xf32>
    %cst_121 = arith.constant dense<0.000000e+00> : vector<8x8xf32>
    %357 = tpu.matmul %354, %355, %cst_121 {dimension_numbers = #tpu.dot_dimension_numbers<[1], [1], [0], [0], [0, 0, 1, 0], [], []>} : vector<8x8xf32>, vector<8x8xf32>, vector<8x8xf32> -> vector<8x8xf32>
    %358 = vector.broadcast %353 : vector<1x8xf32> to vector<8x8xf32>
    %359 = arith.addf %357, %358 : vector<8x8xf32>
    %cst_122 = arith.constant dense<0xFF800000> : vector<8xf32>
    %360 = vector.multi_reduction <maximumf>, %359, %cst_122 [1] : vector<8x8xf32> to vector<8xf32>
    %361 = vector.shape_cast %360 : vector<8xf32> to vector<8x1xf32>
    %362 = vector.broadcast %361 : vector<8x1xf32> to vector<8x8xf32>
    %363 = arith.subf %359, %362 : vector<8x8xf32>
    %364 = math.exp %363 : vector<8x8xf32>
    %cst_123 = arith.constant dense<0.000000e+00> : vector<8xf32>
    %365 = vector.multi_reduction <add>, %364, %cst_123 [1] : vector<8x8xf32> to vector<8xf32>
    %366 = vector.shape_cast %365 : vector<8xf32> to vector<8x1xf32>
    %367 = tpu.reciprocal %366 {approx = true} : vector<8x1xf32> -> vector<8x1xf32>
    %368 = vector.broadcast %367 : vector<8x1xf32> to vector<8x8xf32>
    %369 = arith.mulf %364, %368 : vector<8x8xf32>
    %cst_124 = arith.constant dense<0.000000e+00> : vector<8x8xf32>
    %370 = tpu.matmul %369, %356, %cst_124 {dimension_numbers = #tpu.dot_dimension_numbers<[1], [0], [0], [1], [0, 0, 1, 1], [], []>} : vector<8x8xf32>, vector<8x8xf32>, vector<8x8xf32> -> vector<8x8xf32>
    %371 = vector.extract_strided_slice %352 {offsets = [0, 8], sizes = [8, 8], strides = [1, 1]} : vector<8x96xf32> to vector<8x8xf32>
    %372 = vector.extract_strided_slice %352 {offsets = [0, 40], sizes = [8, 8], strides = [1, 1]} : vector<8x96xf32> to vector<8x8xf32>
    %373 = vector.extract_strided_slice %352 {offsets = [0, 72], sizes = [8, 8], strides = [1, 1]} : vector<8x96xf32> to vector<8x8xf32>
    %cst_125 = arith.constant dense<0.000000e+00> : vector<8x8xf32>
    %374 = tpu.matmul %371, %372, %cst_125 {dimension_numbers = #tpu.dot_dimension_numbers<[1], [1], [0], [0], [0, 0, 1, 0], [], []>} : vector<8x8xf32>, vector<8x8xf32>, vector<8x8xf32> -> vector<8x8xf32>
    %375 = vector.broadcast %353 : vector<1x8xf32> to vector<8x8xf32>
    %376 = arith.addf %374, %375 : vector<8x8xf32>
    %cst_126 = arith.constant dense<0xFF800000> : vector<8xf32>
    %377 = vector.multi_reduction <maximumf>, %376, %cst_126 [1] : vector<8x8xf32> to vector<8xf32>
    %378 = vector.shape_cast %377 : vector<8xf32> to vector<8x1xf32>
    %379 = vector.broadcast %378 : vector<8x1xf32> to vector<8x8xf32>
    %380 = arith.subf %376, %379 : vector<8x8xf32>
    %381 = math.exp %380 : vector<8x8xf32>
    %cst_127 = arith.constant dense<0.000000e+00> : vector<8xf32>
    %382 = vector.multi_reduction <add>, %381, %cst_127 [1] : vector<8x8xf32> to vector<8xf32>
    %383 = vector.shape_cast %382 : vector<8xf32> to vector<8x1xf32>
    %384 = tpu.reciprocal %383 {approx = true} : vector<8x1xf32> -> vector<8x1xf32>
    %385 = vector.broadcast %384 : vector<8x1xf32> to vector<8x8xf32>
    %386 = arith.mulf %381, %385 : vector<8x8xf32>
    %cst_128 = arith.constant dense<0.000000e+00> : vector<8x8xf32>
    %387 = tpu.matmul %386, %373, %cst_128 {dimension_numbers = #tpu.dot_dimension_numbers<[1], [0], [0], [1], [0, 0, 1, 1], [], []>} : vector<8x8xf32>, vector<8x8xf32>, vector<8x8xf32> -> vector<8x8xf32>
    %388 = vector.extract_strided_slice %352 {offsets = [0, 16], sizes = [8, 8], strides = [1, 1]} : vector<8x96xf32> to vector<8x8xf32>
    %389 = vector.extract_strided_slice %352 {offsets = [0, 48], sizes = [8, 8], strides = [1, 1]} : vector<8x96xf32> to vector<8x8xf32>
    %390 = vector.extract_strided_slice %352 {offsets = [0, 80], sizes = [8, 8], strides = [1, 1]} : vector<8x96xf32> to vector<8x8xf32>
    %cst_129 = arith.constant dense<0.000000e+00> : vector<8x8xf32>
    %391 = tpu.matmul %388, %389, %cst_129 {dimension_numbers = #tpu.dot_dimension_numbers<[1], [1], [0], [0], [0, 0, 1, 0], [], []>} : vector<8x8xf32>, vector<8x8xf32>, vector<8x8xf32> -> vector<8x8xf32>
    %392 = vector.broadcast %353 : vector<1x8xf32> to vector<8x8xf32>
    %393 = arith.addf %391, %392 : vector<8x8xf32>
    %cst_130 = arith.constant dense<0xFF800000> : vector<8xf32>
    %394 = vector.multi_reduction <maximumf>, %393, %cst_130 [1] : vector<8x8xf32> to vector<8xf32>
    %395 = vector.shape_cast %394 : vector<8xf32> to vector<8x1xf32>
    %396 = vector.broadcast %395 : vector<8x1xf32> to vector<8x8xf32>
    %397 = arith.subf %393, %396 : vector<8x8xf32>
    %398 = math.exp %397 : vector<8x8xf32>
    %cst_131 = arith.constant dense<0.000000e+00> : vector<8xf32>
    %399 = vector.multi_reduction <add>, %398, %cst_131 [1] : vector<8x8xf32> to vector<8xf32>
    %400 = vector.shape_cast %399 : vector<8xf32> to vector<8x1xf32>
    %401 = tpu.reciprocal %400 {approx = true} : vector<8x1xf32> -> vector<8x1xf32>
    %402 = vector.broadcast %401 : vector<8x1xf32> to vector<8x8xf32>
    %403 = arith.mulf %398, %402 : vector<8x8xf32>
    %cst_132 = arith.constant dense<0.000000e+00> : vector<8x8xf32>
    %404 = tpu.matmul %403, %390, %cst_132 {dimension_numbers = #tpu.dot_dimension_numbers<[1], [0], [0], [1], [0, 0, 1, 1], [], []>} : vector<8x8xf32>, vector<8x8xf32>, vector<8x8xf32> -> vector<8x8xf32>
    %405 = vector.extract_strided_slice %352 {offsets = [0, 24], sizes = [8, 8], strides = [1, 1]} : vector<8x96xf32> to vector<8x8xf32>
    %406 = vector.extract_strided_slice %352 {offsets = [0, 56], sizes = [8, 8], strides = [1, 1]} : vector<8x96xf32> to vector<8x8xf32>
    %407 = vector.extract_strided_slice %352 {offsets = [0, 88], sizes = [8, 8], strides = [1, 1]} : vector<8x96xf32> to vector<8x8xf32>
    %cst_133 = arith.constant dense<0.000000e+00> : vector<8x8xf32>
    %408 = tpu.matmul %405, %406, %cst_133 {dimension_numbers = #tpu.dot_dimension_numbers<[1], [1], [0], [0], [0, 0, 1, 0], [], []>} : vector<8x8xf32>, vector<8x8xf32>, vector<8x8xf32> -> vector<8x8xf32>
    %409 = vector.broadcast %353 : vector<1x8xf32> to vector<8x8xf32>
    %410 = arith.addf %408, %409 : vector<8x8xf32>
    %cst_134 = arith.constant dense<0xFF800000> : vector<8xf32>
    %411 = vector.multi_reduction <maximumf>, %410, %cst_134 [1] : vector<8x8xf32> to vector<8xf32>
    %412 = vector.shape_cast %411 : vector<8xf32> to vector<8x1xf32>
    %413 = vector.broadcast %412 : vector<8x1xf32> to vector<8x8xf32>
    %414 = arith.subf %410, %413 : vector<8x8xf32>
    %415 = math.exp %414 : vector<8x8xf32>
    %cst_135 = arith.constant dense<0.000000e+00> : vector<8xf32>
    %416 = vector.multi_reduction <add>, %415, %cst_135 [1] : vector<8x8xf32> to vector<8xf32>
    %417 = vector.shape_cast %416 : vector<8xf32> to vector<8x1xf32>
    %418 = tpu.reciprocal %417 {approx = true} : vector<8x1xf32> -> vector<8x1xf32>
    %419 = vector.broadcast %418 : vector<8x1xf32> to vector<8x8xf32>
    %420 = arith.mulf %415, %419 : vector<8x8xf32>
    %cst_136 = arith.constant dense<0.000000e+00> : vector<8x8xf32>
    %421 = tpu.matmul %420, %407, %cst_136 {dimension_numbers = #tpu.dot_dimension_numbers<[1], [0], [0], [1], [0, 0, 1, 1], [], []>} : vector<8x8xf32>, vector<8x8xf32>, vector<8x8xf32> -> vector<8x8xf32>
    %422 = tpu.concatenate %370, %387, %404, %421 in 1 : vector<8x8xf32>, vector<8x8xf32>, vector<8x8xf32>, vector<8x8xf32> -> vector<8x32xf32>
    %423 = tpu.concatenate %351, %422 in 0 : vector<8x32xf32>, vector<8x32xf32> -> vector<16x32xf32>
    %c1_137 = arith.constant 1 : index
    %c0_138 = arith.constant 0 : index
    %c0_139 = arith.constant 0 : index
    %424 = vector.load %arg6[%c1_137, %c0_138, %c0_139] : memref<2x32x32xf32, #tpu.memory_space<vmem>>, vector<1x32x32xf32>
    %425 = vector.shape_cast %424 : vector<1x32x32xf32> to vector<32x32xf32>
    %cst_140 = arith.constant dense<0.000000e+00> : vector<16x32xf32>
    %426 = tpu.matmul %423, %425, %cst_140 {dimension_numbers = #tpu.dot_dimension_numbers<[1], [0], [0], [1], [0, 0, 1, 1], [], []>} : vector<16x32xf32>, vector<32x32xf32>, vector<16x32xf32> -> vector<16x32xf32>
    %c1_141 = arith.constant 1 : index
    %c0_142 = arith.constant 0 : index
    %c0_143 = arith.constant 0 : index
    %427 = vector.load %arg7[%c1_141, %c0_142, %c0_143] : memref<2x1x32xf32, #tpu.memory_space<vmem>>, vector<1x1x32xf32>
    %428 = vector.shape_cast %427 : vector<1x1x32xf32> to vector<1x32xf32>
    %429 = vector.broadcast %428 : vector<1x32xf32> to vector<16x32xf32>
    %430 = arith.addf %426, %429 : vector<16x32xf32>
    %431 = arith.addf %430, %273 : vector<16x32xf32>
    %c1_144 = arith.constant 1 : index
    %c0_145 = arith.constant 0 : index
    %c0_146 = arith.constant 0 : index
    %432 = vector.load %arg8[%c1_144, %c0_145, %c0_146] : memref<2x1x32xf32, #tpu.memory_space<vmem>>, vector<1x1x32xf32>
    %433 = vector.shape_cast %432 : vector<1x1x32xf32> to vector<1x32xf32>
    %c1_147 = arith.constant 1 : index
    %c0_148 = arith.constant 0 : index
    %c0_149 = arith.constant 0 : index
    %434 = vector.load %arg9[%c1_147, %c0_148, %c0_149] : memref<2x1x32xf32, #tpu.memory_space<vmem>>, vector<1x1x32xf32>
    %435 = vector.shape_cast %434 : vector<1x1x32xf32> to vector<1x32xf32>
    %cst_150 = arith.constant dense<0.000000e+00> : vector<16xf32>
    %436 = vector.multi_reduction <add>, %431, %cst_150 [1] : vector<16x32xf32> to vector<16xf32>
    %437 = vector.shape_cast %436 : vector<16xf32> to vector<16x1xf32>
    %cst_151 = arith.constant 3.200000e+01 : f32
    %438 = vector.broadcast %cst_151 : f32 to vector<16x1xf32>
    %439 = arith.divf %437, %438 : vector<16x1xf32>
    %440 = vector.broadcast %439 : vector<16x1xf32> to vector<16x32xf32>
    %441 = arith.subf %431, %440 : vector<16x32xf32>
    %442 = vector.broadcast %439 : vector<16x1xf32> to vector<16x32xf32>
    %443 = arith.subf %431, %442 : vector<16x32xf32>
    %444 = arith.mulf %441, %443 : vector<16x32xf32>
    %cst_152 = arith.constant dense<0.000000e+00> : vector<16xf32>
    %445 = vector.multi_reduction <add>, %444, %cst_152 [1] : vector<16x32xf32> to vector<16xf32>
    %446 = vector.shape_cast %445 : vector<16xf32> to vector<16x1xf32>
    %cst_153 = arith.constant 3.200000e+01 : f32
    %447 = vector.broadcast %cst_153 : f32 to vector<16x1xf32>
    %448 = arith.divf %446, %447 : vector<16x1xf32>
    %449 = vector.broadcast %439 : vector<16x1xf32> to vector<16x32xf32>
    %450 = arith.subf %431, %449 : vector<16x32xf32>
    %cst_154 = arith.constant 9.99999996E-13 : f32
    %451 = vector.broadcast %cst_154 : f32 to vector<16x1xf32>
    %452 = arith.addf %448, %451 : vector<16x1xf32>
    %453 = math.rsqrt %452 : vector<16x1xf32>
    %454 = vector.broadcast %453 : vector<16x1xf32> to vector<16x32xf32>
    %455 = arith.mulf %450, %454 : vector<16x32xf32>
    %456 = vector.broadcast %433 : vector<1x32xf32> to vector<16x32xf32>
    %457 = arith.mulf %455, %456 : vector<16x32xf32>
    %458 = vector.broadcast %435 : vector<1x32xf32> to vector<16x32xf32>
    %459 = arith.addf %457, %458 : vector<16x32xf32>
    %c1_155 = arith.constant 1 : index
    %c0_156 = arith.constant 0 : index
    %c0_157 = arith.constant 0 : index
    %460 = vector.load %arg10[%c1_155, %c0_156, %c0_157] : memref<2x32x128xf32, #tpu.memory_space<vmem>>, vector<1x32x128xf32>
    %461 = vector.shape_cast %460 : vector<1x32x128xf32> to vector<32x128xf32>
    %cst_158 = arith.constant dense<0.000000e+00> : vector<16x128xf32>
    %462 = tpu.matmul %459, %461, %cst_158 {dimension_numbers = #tpu.dot_dimension_numbers<[1], [0], [0], [1], [0, 0, 1, 1], [], []>} : vector<16x32xf32>, vector<32x128xf32>, vector<16x128xf32> -> vector<16x128xf32>
    %c1_159 = arith.constant 1 : index
    %c0_160 = arith.constant 0 : index
    %c0_161 = arith.constant 0 : index
    %463 = vector.load %arg11[%c1_159, %c0_160, %c0_161] : memref<2x1x128xf32, #tpu.memory_space<vmem>>, vector<1x1x128xf32>
    %464 = vector.shape_cast %463 : vector<1x1x128xf32> to vector<1x128xf32>
    %465 = vector.broadcast %464 : vector<1x128xf32> to vector<16x128xf32>
    %466 = arith.addf %462, %465 : vector<16x128xf32>
    %cst_162 = arith.constant 5.000000e-01 : f32
    %467 = vector.broadcast %cst_162 : f32 to vector<16x128xf32>
    %468 = arith.mulf %467, %466 : vector<16x128xf32>
    %cst_163 = arith.constant 4.471500e-02 : f32
    %469 = vector.broadcast %cst_163 : f32 to vector<16x128xf32>
    %470 = arith.mulf %469, %466 : vector<16x128xf32>
    %471 = arith.mulf %470, %466 : vector<16x128xf32>
    %472 = arith.mulf %471, %466 : vector<16x128xf32>
    %473 = arith.addf %466, %472 : vector<16x128xf32>
    %cst_164 = arith.constant 0.797884583 : f32
    %474 = vector.broadcast %cst_164 : f32 to vector<16x128xf32>
    %475 = arith.mulf %474, %473 : vector<16x128xf32>
    %476 = math.tanh %475 : vector<16x128xf32>
    %cst_165 = arith.constant 1.000000e+00 : f32
    %477 = vector.broadcast %cst_165 : f32 to vector<16x128xf32>
    %478 = arith.addf %477, %476 : vector<16x128xf32>
    %479 = arith.mulf %468, %478 : vector<16x128xf32>
    %c1_166 = arith.constant 1 : index
    %c0_167 = arith.constant 0 : index
    %c0_168 = arith.constant 0 : index
    %480 = vector.load %arg12[%c1_166, %c0_167, %c0_168] : memref<2x128x32xf32, #tpu.memory_space<vmem>>, vector<1x128x32xf32>
    %481 = vector.shape_cast %480 : vector<1x128x32xf32> to vector<128x32xf32>
    %cst_169 = arith.constant dense<0.000000e+00> : vector<16x32xf32>
    %482 = tpu.matmul %479, %481, %cst_169 {dimension_numbers = #tpu.dot_dimension_numbers<[1], [0], [0], [1], [0, 0, 1, 1], [], []>} : vector<16x128xf32>, vector<128x32xf32>, vector<16x32xf32> -> vector<16x32xf32>
    %c1_170 = arith.constant 1 : index
    %c0_171 = arith.constant 0 : index
    %c0_172 = arith.constant 0 : index
    %483 = vector.load %arg13[%c1_170, %c0_171, %c0_172] : memref<2x1x32xf32, #tpu.memory_space<vmem>>, vector<1x1x32xf32>
    %484 = vector.shape_cast %483 : vector<1x1x32xf32> to vector<1x32xf32>
    %485 = vector.broadcast %484 : vector<1x32xf32> to vector<16x32xf32>
    %486 = arith.addf %482, %485 : vector<16x32xf32>
    %487 = arith.addf %486, %459 : vector<16x32xf32>
    %c1_173 = arith.constant 1 : index
    %c0_174 = arith.constant 0 : index
    %c0_175 = arith.constant 0 : index
    %488 = vector.load %arg14[%c1_173, %c0_174, %c0_175] : memref<2x1x32xf32, #tpu.memory_space<vmem>>, vector<1x1x32xf32>
    %489 = vector.shape_cast %488 : vector<1x1x32xf32> to vector<1x32xf32>
    %c1_176 = arith.constant 1 : index
    %c0_177 = arith.constant 0 : index
    %c0_178 = arith.constant 0 : index
    %490 = vector.load %arg15[%c1_176, %c0_177, %c0_178] : memref<2x1x32xf32, #tpu.memory_space<vmem>>, vector<1x1x32xf32>
    %491 = vector.shape_cast %490 : vector<1x1x32xf32> to vector<1x32xf32>
    %cst_179 = arith.constant dense<0.000000e+00> : vector<16xf32>
    %492 = vector.multi_reduction <add>, %487, %cst_179 [1] : vector<16x32xf32> to vector<16xf32>
    %493 = vector.shape_cast %492 : vector<16xf32> to vector<16x1xf32>
    %cst_180 = arith.constant 3.200000e+01 : f32
    %494 = vector.broadcast %cst_180 : f32 to vector<16x1xf32>
    %495 = arith.divf %493, %494 : vector<16x1xf32>
    %496 = vector.broadcast %495 : vector<16x1xf32> to vector<16x32xf32>
    %497 = arith.subf %487, %496 : vector<16x32xf32>
    %498 = vector.broadcast %495 : vector<16x1xf32> to vector<16x32xf32>
    %499 = arith.subf %487, %498 : vector<16x32xf32>
    %500 = arith.mulf %497, %499 : vector<16x32xf32>
    %cst_181 = arith.constant dense<0.000000e+00> : vector<16xf32>
    %501 = vector.multi_reduction <add>, %500, %cst_181 [1] : vector<16x32xf32> to vector<16xf32>
    %502 = vector.shape_cast %501 : vector<16xf32> to vector<16x1xf32>
    %cst_182 = arith.constant 3.200000e+01 : f32
    %503 = vector.broadcast %cst_182 : f32 to vector<16x1xf32>
    %504 = arith.divf %502, %503 : vector<16x1xf32>
    %505 = vector.broadcast %495 : vector<16x1xf32> to vector<16x32xf32>
    %506 = arith.subf %487, %505 : vector<16x32xf32>
    %cst_183 = arith.constant 9.99999996E-13 : f32
    %507 = vector.broadcast %cst_183 : f32 to vector<16x1xf32>
    %508 = arith.addf %504, %507 : vector<16x1xf32>
    %509 = math.rsqrt %508 : vector<16x1xf32>
    %510 = vector.broadcast %509 : vector<16x1xf32> to vector<16x32xf32>
    %511 = arith.mulf %506, %510 : vector<16x32xf32>
    %512 = vector.broadcast %489 : vector<1x32xf32> to vector<16x32xf32>
    %513 = arith.mulf %511, %512 : vector<16x32xf32>
    %514 = vector.broadcast %491 : vector<1x32xf32> to vector<16x32xf32>
    %515 = arith.addf %513, %514 : vector<16x32xf32>
    %516 = vector.extract_strided_slice %515 {offsets = [0, 0], sizes = [1, 32], strides = [1, 1]} : vector<16x32xf32> to vector<1x32xf32>
    %517 = vector.extract_strided_slice %515 {offsets = [8, 0], sizes = [1, 32], strides = [1, 1]} : vector<16x32xf32> to vector<1x32xf32>
    %518 = tpu.concatenate %516, %517 in 0 : vector<1x32xf32>, vector<1x32xf32> -> vector<2x32xf32>
    %c0_184 = arith.constant 0 : index
    %c0_185 = arith.constant 0 : index
    %519 = vector.load %arg16[%c0_184, %c0_185] : memref<32x32xf32, #tpu.memory_space<vmem>>, vector<32x32xf32>
    %cst_186 = arith.constant dense<0.000000e+00> : vector<2x32xf32>
    %520 = tpu.matmul %518, %519, %cst_186 {dimension_numbers = #tpu.dot_dimension_numbers<[1], [0], [0], [1], [0, 0, 1, 1], [], []>} : vector<2x32xf32>, vector<32x32xf32>, vector<2x32xf32> -> vector<2x32xf32>
    %c0_187 = arith.constant 0 : index
    %c0_188 = arith.constant 0 : index
    %521 = vector.load %arg17[%c0_187, %c0_188] : memref<1x32xf32, #tpu.memory_space<vmem>>, vector<1x32xf32>
    %522 = vector.broadcast %521 : vector<1x32xf32> to vector<2x32xf32>
    %523 = arith.addf %520, %522 : vector<2x32xf32>
    %524 = math.tanh %523 : vector<2x32xf32>
    %c0_189 = arith.constant 0 : index
    %c0_190 = arith.constant 0 : index
    %525 = vector.load %arg18[%c0_189, %c0_190] : memref<32x2xf32, #tpu.memory_space<vmem>>, vector<32x2xf32>
    %cst_191 = arith.constant dense<0.000000e+00> : vector<2x2xf32>
    %526 = tpu.matmul %524, %525, %cst_191 {dimension_numbers = #tpu.dot_dimension_numbers<[1], [0], [0], [1], [0, 0, 1, 1], [], []>} : vector<2x32xf32>, vector<32x2xf32>, vector<2x2xf32> -> vector<2x2xf32>
    %c0_192 = arith.constant 0 : index
    %c0_193 = arith.constant 0 : index
    %527 = vector.load %arg19[%c0_192, %c0_193] : memref<1x2xf32, #tpu.memory_space<vmem>>, vector<1x2xf32>
    %528 = vector.broadcast %527 : vector<1x2xf32> to vector<2x2xf32>
    %529 = arith.addf %526, %528 : vector<2x2xf32>
    %cst_194 = arith.constant 0.000000e+00 : f32
    %530 = vector.broadcast %cst_194 : f32 to vector<2x2xf32>
    %531 = arith.maximumf %529, %530 : vector<2x2xf32>
    %c0_195 = arith.constant 0 : index
    %c0_196 = arith.constant 0 : index
    %532 = vector.load %arg20[%c0_195, %c0_196] : memref<2x2xf32, #tpu.memory_space<vmem>>, vector<2x2xf32>
    tpu.vector_store %arg20[%c0_195, %c0_196], %531 {strides = array<i32>} : memref<2x2xf32, #tpu.memory_space<vmem>>, vector<2x2xf32>,
    return
  }
}

</mosaic_0001>

<llo_original>
// kernel: bert_classifier_forward.1
$region0: #{bert_classifier_forward.1}
  #allocation0 [shape = 'u32[]', space=smem, size = 0x4, offset = 0x4, fixed_abs, tag = 'smem constant byte address 0x4 - core index']
  #allocation1 [shape = 'u32[144,128]{1,0:T(1,128)}', space=vmem, size = 0x12000, scoped, tag = 'internal scratch']
  %s0 = inlined_call_operand.vmem [shape: f32[16,32], index: 0, kind: input, shape index: {}]
  %s1 = inlined_call_operand.vmem [shape: f32[2,8], index: 1, kind: input, shape index: {}]
  %s2 = inlined_call_operand.vmem [shape: f32[1,32], index: 2, kind: input, shape index: {}]
  %s3 = inlined_call_operand.vmem [shape: f32[1,32], index: 3, kind: input, shape index: {}]
  %s4 = inlined_call_operand.vmem [shape: f32[2,32,96], index: 4, kind: input, shape index: {}]
  %s5 = inlined_call_operand.vmem [shape: f32[2,1,96], index: 5, kind: input, shape index: {}]
  %s6 = inlined_call_operand.vmem [shape: f32[2,32,32], index: 6, kind: input, shape index: {}]
  %s7 = inlined_call_operand.vmem [shape: f32[2,1,32], index: 7, kind: input, shape index: {}]
  %s8 = inlined_call_operand.vmem [shape: f32[2,1,32], index: 8, kind: input, shape index: {}]
  %s9 = inlined_call_operand.vmem [shape: f32[2,1,32], index: 9, kind: input, shape index: {}]
  %s10 = inlined_call_operand.vmem [shape: f32[2,32,128], index: 10, kind: input, shape index: {}]
  %s11 = inlined_call_operand.vmem [shape: f32[2,1,128], index: 11, kind: input, shape index: {}]
  %s12 = inlined_call_operand.vmem [shape: f32[2,128,32], index: 12, kind: input, shape index: {}]
  %s13 = inlined_call_operand.vmem [shape: f32[2,1,32], index: 13, kind: input, shape index: {}]
  %s14 = inlined_call_operand.vmem [shape: f32[2,1,32], index: 14, kind: input, shape index: {}]
  %s15 = inlined_call_operand.vmem [shape: f32[2,1,32], index: 15, kind: input, shape index: {}]
  %s16 = inlined_call_operand.vmem [shape: f32[32,32], index: 16, kind: input, shape index: {}]
  %s17 = inlined_call_operand.vmem [shape: f32[1,32], index: 17, kind: input, shape index: {}]
  %s18 = inlined_call_operand.vmem [shape: f32[32,2], index: 18, kind: input, shape index: {}]
  %s19 = inlined_call_operand.vmem [shape: f32[1,2], index: 19, kind: input, shape index: {}]
  %s20 = inlined_call_operand.hbm [shape: f32[2,2], index: 20, kind: output, shape index: {}]
  %s21 = sld [smem:[#allocation0]]
  $region90: #{bert_classifier_forward.1} parent=0
    _
  %s23 = ssub.s32 1, %s21
  %s24 = scalar_select 0, %s23, %s21
  $region1: #{bert_classifier_forward.1} parent=0
    #allocation2 [shape = 'u8[1024]{0}', space=vmem, size = 0x400, scoped, tag = 'output window, operand 0, single buffered']
    #allocation3 [shape = 's32[1]{0}', space=sflag, size = 0x4, scoped, tag = 'scoped memory for bert_classifier_forward.1']
    %25 = vsyncpa [#allocation3], 0
    // Predicated region
    $region2: #{bert_classifier_forward.1} parent=1 // pred_check
      _
    $region3: #{bert_classifier_forward.1} parent=1 // pred_check_branch
      %27 = sbr.rel (0) target = $region5
    $region4: #{bert_classifier_forward.1} parent=1 // pred_region
      _
    $region5: #{bert_classifier_forward.1} parent=1 // pred_fallthru
      _
    // Predicated region
    $region6: #{bert_classifier_forward.1} parent=1 // pred_check
      _
    $region7: #{bert_classifier_forward.1} parent=1 // pred_check_branch
      %29 = sbr.rel (0) target = $region9
    $region8: #{bert_classifier_forward.1} parent=1 // pred_region
      _
    $region9: #{bert_classifier_forward.1} parent=1 // pred_fallthru
      _
    // Predicated region
    $region10: #{bert_classifier_forward.1} parent=1 // pred_check
      _
    $region11: #{bert_classifier_forward.1} parent=1 // pred_check_branch
      %31 = sbr.rel (0) target = $region13
    $region12: #{bert_classifier_forward.1} parent=1 // pred_region
      _
    $region13: #{bert_classifier_forward.1} parent=1 // pred_fallthru
      _
    // Predicated region
    $region14: #{bert_classifier_forward.1} parent=1 // pred_check
      _
    $region15: #{bert_classifier_forward.1} parent=1 // pred_check_branch
      %33 = sbr.rel (0) target = $region17
    $region16: #{bert_classifier_forward.1} parent=1 // pred_region
      _
    $region17: #{bert_classifier_forward.1} parent=1 // pred_fallthru
      _
    // Predicated region
    $region18: #{bert_classifier_forward.1} parent=1 // pred_check
      _
    $region19: #{bert_classifier_forward.1} parent=1 // pred_check_branch
      %35 = sbr.rel (0) target = $region21
    $region20: #{bert_classifier_forward.1} parent=1 // pred_region
      _
    $region21: #{bert_classifier_forward.1} parent=1 // pred_fallthru
      _
    // Predicated region
    $region22: #{bert_classifier_forward.1} parent=1 // pred_check
      _
    $region23: #{bert_classifier_forward.1} parent=1 // pred_check_branch
      %37 = sbr.rel (0) target = $region25
    $region24: #{bert_classifier_forward.1} parent=1 // pred_region
      _
    $region25: #{bert_classifier_forward.1} parent=1 // pred_fallthru
      _
    // Predicated region
    $region26: #{bert_classifier_forward.1} parent=1 // pred_check
      _
    $region27: #{bert_classifier_forward.1} parent=1 // pred_check_branch
      %39 = sbr.rel (0) target = $region29
    $region28: #{bert_classifier_forward.1} parent=1 // pred_region
      _
    $region29: #{bert_classifier_forward.1} parent=1 // pred_fallthru
      _
    // Predicated region
    $region30: #{bert_classifier_forward.1} parent=1 // pred_check
      _
    $region31: #{bert_classifier_forward.1} parent=1 // pred_check_branch
      %41 = sbr.rel (0) target = $region33
    $region32: #{bert_classifier_forward.1} parent=1 // pred_region
      _
    $region33: #{bert_classifier_forward.1} parent=1 // pred_fallthru
      _
    // Predicated region
    $region34: #{bert_classifier_forward.1} parent=1 // pred_check
      _
    $region35: #{bert_classifier_forward.1} parent=1 // pred_check_branch
      %43 = sbr.rel (0) target = $region37
    $region36: #{bert_classifier_forward.1} parent=1 // pred_region
      _
    $region37: #{bert_classifier_forward.1} parent=1 // pred_fallthru
      _
    // Predicated region
    $region38: #{bert_classifier_forward.1} parent=1 // pred_check
      _
    $region39: #{bert_classifier_forward.1} parent=1 // pred_check_branch
      %45 = sbr.rel (0) target = $region41
    $region40: #{bert_classifier_forward.1} parent=1 // pred_region
      _
    $region41: #{bert_classifier_forward.1} parent=1 // pred_fallthru
      _
    // Predicated region
    $region42: #{bert_classifier_forward.1} parent=1 // pred_check
      _
    $region43: #{bert_classifier_forward.1} parent=1 // pred_check_branch
      %47 = sbr.rel (0) target = $region45
    $region44: #{bert_classifier_forward.1} parent=1 // pred_region
      _
    $region45: #{bert_classifier_forward.1} parent=1 // pred_fallthru
      _
    // Predicated region
    $region46: #{bert_classifier_forward.1} parent=1 // pred_check
      _
    $region47: #{bert_classifier_forward.1} parent=1 // pred_check_branch
      %49 = sbr.rel (0) target = $region49
    $region48: #{bert_classifier_forward.1} parent=1 // pred_region
      _
    $region49: #{bert_classifier_forward.1} parent=1 // pred_fallthru
      _
    // Predicated region
    $region50: #{bert_classifier_forward.1} parent=1 // pred_check
      _
    $region51: #{bert_classifier_forward.1} parent=1 // pred_check_branch
      %51 = sbr.rel (0) target = $region53
    $region52: #{bert_classifier_forward.1} parent=1 // pred_region
      _
    $region53: #{bert_classifier_forward.1} parent=1 // pred_fallthru
      _
    // Predicated region
    $region54: #{bert_classifier_forward.1} parent=1 // pred_check
      _
    $region55: #{bert_classifier_forward.1} parent=1 // pred_check_branch
      %53 = sbr.rel (0) target = $region57
    $region56: #{bert_classifier_forward.1} parent=1 // pred_region
      _
    $region57: #{bert_classifier_forward.1} parent=1 // pred_fallthru
      _
    // Predicated region
    $region58: #{bert_classifier_forward.1} parent=1 // pred_check
      _
    $region59: #{bert_classifier_forward.1} parent=1 // pred_check_branch
      %55 = sbr.rel (0) target = $region61
    $region60: #{bert_classifier_forward.1} parent=1 // pred_region
      _
    $region61: #{bert_classifier_forward.1} parent=1 // pred_fallthru
      _
    // Predicated region
    $region62: #{bert_classifier_forward.1} parent=1 // pred_check
      _
    $region63: #{bert_classifier_forward.1} parent=1 // pred_check_branch
      %57 = sbr.rel (0) target = $region65
    $region64: #{bert_classifier_forward.1} parent=1 // pred_region
      _
    $region65: #{bert_classifier_forward.1} parent=1 // pred_fallthru
      _
    // Predicated region
    $region66: #{bert_classifier_forward.1} parent=1 // pred_check
      _
    $region67: #{bert_classifier_forward.1} parent=1 // pred_check_branch
      %59 = sbr.rel (0) target = $region69
    $region68: #{bert_classifier_forward.1} parent=1 // pred_region
      _
    $region69: #{bert_classifier_forward.1} parent=1 // pred_fallthru
      _
    // Predicated region
    $region70: #{bert_classifier_forward.1} parent=1 // pred_check
      _
    $region71: #{bert_classifier_forward.1} parent=1 // pred_check_branch
      %61 = sbr.rel (0) target = $region73
    $region72: #{bert_classifier_forward.1} parent=1 // pred_region
      _
    $region73: #{bert_classifier_forward.1} parent=1 // pred_fallthru
      _
    // Predicated region
    $region74: #{bert_classifier_forward.1} parent=1 // pred_check
      _
    $region75: #{bert_classifier_forward.1} parent=1 // pred_check_branch
      %63 = sbr.rel (0) target = $region77
    $region76: #{bert_classifier_forward.1} parent=1 // pred_region
      _
    $region77: #{bert_classifier_forward.1} parent=1 // pred_fallthru
      _
    // Predicated region
    $region78: #{bert_classifier_forward.1} parent=1 // pred_check
      _
    $region79: #{bert_classifier_forward.1} parent=1 // pred_check_branch
      %65 = sbr.rel (0) target = $region81
    $region80: #{bert_classifier_forward.1} parent=1 // pred_region
      _
    $region81: #{bert_classifier_forward.1} parent=1 // pred_fallthru
      _
    %v66 = vld [vmem:[%s0] sm:$0xff]
    %v67 = vld [vmem:[%s0 + $0x8] sm:$0xff]
    %v68 = vld [vmem:[%s2] sm:$0x1]
    %v69 = vld [vmem:[%s3] sm:$0x1]
    %vm70 = vcmask 261120
    %v71 = vsel %vm70, %v66, 0.0
    %72 = vadd.xlane.f32.xlu0 %v71
    %v73 = vpop.xlane.xlu0 %72
    %v74 = vsel %vm70, %v67, 0.0
    %75 = vadd.xlane.f32.xlu0 %v74
    %v76 = vpop.xlane.xlu0 %75
    %v77 = vrcp.pop 32.0
    %v78 = vmul.f32 %v73, %v77
    %v79 = vmul.f32 %v76, %v77
    %v80 = vsub.f32 %v66, %v78
    %v81 = vsub.f32 %v67, %v79
    %v82 = vmul.f32 %v80, %v80
    %v83 = vmul.f32 %v81, %v81
    %v84 = vsel %vm70, %v82, 0.0
    %85 = vadd.xlane.f32.xlu0 %v84
    %v86 = vpop.xlane.xlu0 %85
    %v87 = vsel %vm70, %v83, 0.0
    %88 = vadd.xlane.f32.xlu0 %v87
    %v89 = vpop.xlane.xlu0 %88
    %v90 = vmul.f32 %v86, %v77
    %v91 = vmul.f32 %v89, %v77
    %v92 = vadd.f32 %v90, 1e-12
    %v93 = vadd.f32 %v91, 1e-12
    %v94 = vrsqrt.pop %v92
    %v95 = vrsqrt.pop %v93
    %v96 = vmul.f32 %v80, %v94
    %v97 = vmul.f32 %v81, %v95
    %v99 = vlaneseq
    %v100 = vshrl.u32 %v99, 7
    %v101 = vsub.s32 0, %v100
    %v102 = vrot.slane %v68, %v101
    %v104 = vmul.f32 %v96, %v102
    %v105 = vmul.f32 %v97, %v102
    %v107 = vlaneseq
    %v108 = vshrl.u32 %v107, 7
    %v109 = vsub.s32 0, %v108
    %v110 = vrot.slane %v69, %v109
    %v112 = vadd.f32 %v104, %v110
    %v113 = vadd.f32 %v105, %v110
    %v114 = vld [vmem:[%s1] sm:$0x3]
    %v115 = vsub.f32 1.0, %v114
    %v116 = vmul.f32 %v115, -10000.0
    %v117 = vld [vmem:[%s4] sm:$0xff]
    %v118 = vld [vmem:[%s4 + $0x8] sm:$0xff]
    %v119 = vld [vmem:[%s4 + $0x10] sm:$0xff]
    %v120 = vld [vmem:[%s4 + $0x18] sm:$0xff]
    %v121 = vld [vmem:[%s5] sm:$0x1]
    %v123 = vlaneseq
    %v124 = vshrl.u32 %v123, 7
    %v125 = vsub.s32 0, %v124
    %v126 = vrot.slane %v121, %v125
    %v129 = vsel %vm70, %v112, 0
    %v132 = vsel %vm70, %v113, 0
    %134 = vmatprep.subr.mxu0 0.0
    %135 = vmatpush1.msra.mxu0 %v117
    %136 = vmatprep.subr.mxu0 0.0
    %137 = vmatpush1.msra.mxu0 %v118
    %138 = vmatprep.subr.mxu0 0.0
    %139 = vmatpush1.msra.mxu0 %v119
    %140 = vmatprep.subr.mxu0 0.0
    %141 = vmatpush1.msra.mxu0 %v120
    %142 = vmatprep.subr.mxu0 0.0
    %143 = vmatpush1.msra.mxu0 0.0
    %144 = vmatprep.subr.mxu0 0.0
    %145 = vmatpush1.msra.mxu0 0.0
    %146 = vmatprep.subr.mxu0 0.0
    %147 = vmatpush1.msra.mxu0 0.0
    %148 = vmatprep.subr.mxu0 0.0
    %149 = vmatpush1.msra.mxu0 0.0
    %150 = vmatprep.subr.mxu0 0.0
    %151 = vmatpush1.msra.mxu0 0.0
    %152 = vmatprep.subr.mxu0 0.0
    %153 = vmatpush1.msra.mxu0 0.0
    %154 = vmatprep.subr.mxu0 0.0
    %155 = vmatpush1.msra.mxu0 0.0
    %156 = vmatprep.subr.mxu0 0.0
    %157 = vmatpush1.msra.mxu0 0.0
    %158 = vmatprep.subr.mxu0 0.0
    %159 = vmatpush1.msra.mxu0 0.0
    %160 = vmatprep.subr.mxu0 0.0
    %161 = vmatpush1.msra.mxu0 0.0
    %162 = vmatprep.subr.mxu0 0.0
    %163 = vmatpush1.msra.mxu0 0.0
    %164 = vmatprep.subr.mxu0 0.0
    %165 = vmatpush1.msra.mxu0 0.0
    %166 = vmatprep.subr.mxu0 0.0
    %167 = vmatpush1.msra.mxu0 0.0
    %168 = vmatprep.subr.mxu0 0.0
    %169 = vmatpush1.msra.mxu0 0.0
    %170 = vmatprep.subr.mxu0 0.0
    %171 = vmatpush1.msra.mxu0 0.0
    %172 = vmatprep.subr.mxu0 0.0
    %173 = vmatpush1.msra.mxu0 0.0
    %174 = vmatprep.subr.mxu0 0.0
    %175 = vmatpush1.msra.mxu0 0.0
    %176 = vmatprep.subr.mxu0 0.0
    %177 = vmatpush1.msra.mxu0 0.0
    %178 = vmatprep.subr.mxu0 0.0
    %179 = vmatpush1.msra.mxu0 0.0
    %180 = vmatprep.subr.mxu0 0.0
    %181 = vmatpush1.msra.mxu0 0.0
    %182 = vmatprep.subr.mxu0 0.0
    %183 = vmatpush1.msra.mxu0 0.0
    %184 = vmatprep.subr.mxu0 0.0
    %185 = vmatpush1.msra.mxu0 0.0
    %186 = vmatprep.subr.mxu0 0.0
    %187 = vmatpush1.msra.mxu0 0.0
    %188 = vmatprep.subr.mxu0 0.0
    %189 = vmatpush1.msra.mxu0 0.0
    %190 = vmatprep.subr.mxu0 0.0
    %191 = vmatpush1.msra.mxu0 0.0
    %192 = vmatprep.subr.mxu0 0.0
    %193 = vmatpush1.msra.mxu0 0.0
    %194 = vmatprep.subr.mxu0 0.0
    %195 = vmatpush1.msra.mxu0 0.0
    %196 = vmatprep.subr.mxu0 0.0
    %197 = vmatpush1.msra.mxu0 0.0
    %198 = vmatprep.mubr.f32.mxu0 0.0
    %199 = vmatmul.mubr.f32.gmra.mrb[0].mxu0 %v129
    %v200 = vpop.f32.mrb[0].mxu0
    %v201 = vadd.f32 %v126, %v200
    %v202 = vpop.f32.mrb[0].mxu0
    %203 = vmatprep.mubr.f32.mxu0 0.0
    %204 = vmatmul.mubr.f32.gmra.mrb[0].mxu0 %v132
    %v205 = vpop.f32.mrb[0].mxu0
    %v206 = vadd.f32 %v126, %v205
    %v207 = vpop.f32.mrb[0].mxu0
    %208 = vdwg.mxu0
    %v209 = vlaneseq
    %v210 = vshrl.u32 %v209, 7
    %v211 = vsub.s32 0, %v210
    %v212 = vrot.slane %v116, %v211
    %214 = vrot.lane.b32.xlu0 %v201, 96
    %v215 = vpop.permute.xlu0 %214
    %vm216 = vcmask 64512
    %v217 = vsel %vm216, %v201, 0
    %v219 = vsel %vm216, %v215, 0
    %221 = vmatprep.subr.mxu0 0.0
    %222 = vmatpush1.xpose.msra.mxu0 %v219
    %223 = vmatprep.subr.mxu0 0.0
    %224 = vmatpush1.xpose.msra.mxu0 0.0
    %225 = vmatprep.subr.mxu0 0.0
    %226 = vmatpush1.xpose.msra.mxu0 0.0
    %227 = vmatprep.subr.mxu0 0.0
    %228 = vmatpush1.xpose.msra.mxu0 0.0
    %229 = vmatprep.subr.mxu0 0.0
    %230 = vmatpush1.xpose.msra.mxu0 0.0
    %231 = vmatprep.subr.mxu0 0.0
    %232 = vmatpush1.xpose.msra.mxu0 0.0
    %233 = vmatprep.subr.mxu0 0.0
    %234 = vmatpush1.xpose.msra.mxu0 0.0
    %235 = vmatprep.subr.mxu0 0.0
    %236 = vmatpush1.xpose.msra.mxu0 0.0
    %237 = vmatprep.subr.mxu0 0.0
    %238 = vmatpush1.xpose.msra.mxu0 0.0
    %239 = vmatprep.subr.mxu0 0.0
    %240 = vmatpush1.xpose.msra.mxu0 0.0
    %241 = vmatprep.subr.mxu0 0.0
    %242 = vmatpush1.xpose.msra.mxu0 0.0
    %243 = vmatprep.subr.mxu0 0.0
    %244 = vmatpush1.xpose.msra.mxu0 0.0
    %245 = vmatprep.subr.mxu0 0.0
    %246 = vmatpush1.xpose.msra.mxu0 0.0
    %247 = vmatprep.subr.mxu0 0.0
    %248 = vmatpush1.xpose.msra.mxu0 0.0
    %249 = vmatprep.subr.mxu0 0.0
    %250 = vmatpush1.xpose.msra.mxu0 0.0
    %251 = vmatprep.subr.mxu0 0.0
    %252 = vmatpush1.xpose.msra.mxu0 0.0
    %253 = vmatprep.subr.mxu0 0.0
    %254 = vmatpush1.xpose.msra.mxu0 0.0
    %255 = vmatprep.subr.mxu0 0.0
    %256 = vmatpush1.xpose.msra.mxu0 0.0
    %257 = vmatprep.subr.mxu0 0.0
    %258 = vmatpush1.xpose.msra.mxu0 0.0
    %259 = vmatprep.subr.mxu0 0.0
    %260 = vmatpush1.xpose.msra.mxu0 0.0
    %261 = vmatprep.subr.mxu0 0.0
    %262 = vmatpush1.xpose.msra.mxu0 0.0
    %263 = vmatprep.subr.mxu0 0.0
    %264 = vmatpush1.xpose.msra.mxu0 0.0
    %265 = vmatprep.subr.mxu0 0.0
    %266 = vmatpush1.xpose.msra.mxu0 0.0
    %267 = vmatprep.subr.mxu0 0.0
    %268 = vmatpush1.xpose.msra.mxu0 0.0
    %269 = vmatprep.subr.mxu0 0.0
    %270 = vmatpush1.xpose.msra.mxu0 0.0
    %271 = vmatprep.subr.mxu0 0.0
    %272 = vmatpush1.xpose.msra.mxu0 0.0
    %273 = vmatprep.subr.mxu0 0.0
    %274 = vmatpush1.xpose.msra.mxu0 0.0
    %275 = vmatprep.subr.mxu0 0.0
    %276 = vmatpush1.xpose.msra.mxu0 0.0
    %277 = vmatprep.subr.mxu0 0.0
    %278 = vmatpush1.xpose.msra.mxu0 0.0
    %279 = vmatprep.subr.mxu0 0.0
    %280 = vmatpush1.xpose.msra.mxu0 0.0
    %281 = vmatprep.subr.mxu0 0.0
    %282 = vmatpush1.xpose.msra.mxu0 0.0
    %283 = vmatprep.subr.mxu0 0.0
    %284 = vmatpush1.xpose.msra.mxu0 0.0
    %285 = vmatprep.mubr.f32.mxu0 0.0
    %286 = vmatmul.mubr.f32.gmra.mrb[0].mxu0 %v217
    %v287 = vpop.f32.mrb[0].mxu0
    %v288 = vadd.f32 %v212, %v287
    %v289 = vpop.f32.mrb[0].mxu0
    %290 = vdwg.mxu0
    %v291 = vsel %vm216, %v288, -inf
    %292 = vmax.xlane.f32.xlu0 %v291
    %v293 = vpop.xlane.xlu0 %292
    %v294 = vsub.f32 %v288, %v293
    %v295 = vmul.f32 %v294, 1.442695
    %v296 = vpow.pop %v295
    %v297 = vsel %vm216, %v296, 0.0
    %298 = vadd.xlane.f32.xlu0 %v297
    %v299 = vpop.xlane.xlu0 %298
    %v300 = vrcp.pop %v299
    %v301 = vmul.f32 %v296, %v300
    %302 = vrot.lane.b32.xlu0 %v201, 64
    %v303 = vpop.permute.xlu0 %302
    %v306 = vsel %vm216, %v301, 0
    %308 = vmatprep.subr.mxu0 0.0
    %309 = vmatpush1.msra.mxu0 %v303
    %310 = vmatprep.subr.mxu0 0.0
    %311 = vmatpush1.msra.mxu0 0.0
    %312 = vmatprep.subr.mxu0 0.0
    %313 = vmatpush1.msra.mxu0 0.0
    %314 = vmatprep.subr.mxu0 0.0
    %315 = vmatpush1.msra.mxu0 0.0
    %316 = vmatprep.subr.mxu0 0.0
    %317 = vmatpush1.msra.mxu0 0.0
    %318 = vmatprep.subr.mxu0 0.0
    %319 = vmatpush1.msra.mxu0 0.0
    %320 = vmatprep.subr.mxu0 0.0
    %321 = vmatpush1.msra.mxu0 0.0
    %322 = vmatprep.subr.mxu0 0.0
    %323 = vmatpush1.msra.mxu0 0.0
    %324 = vmatprep.subr.mxu0 0.0
    %325 = vmatpush1.msra.mxu0 0.0
    %326 = vmatprep.subr.mxu0 0.0
    %327 = vmatpush1.msra.mxu0 0.0
    %328 = vmatprep.subr.mxu0 0.0
    %329 = vmatpush1.msra.mxu0 0.0
    %330 = vmatprep.subr.mxu0 0.0
    %331 = vmatpush1.msra.mxu0 0.0
    %332 = vmatprep.subr.mxu0 0.0
    %333 = vmatpush1.msra.mxu0 0.0
    %334 = vmatprep.subr.mxu0 0.0
    %335 = vmatpush1.msra.mxu0 0.0
    %336 = vmatprep.subr.mxu0 0.0
    %337 = vmatpush1.msra.mxu0 0.0
    %338 = vmatprep.subr.mxu0 0.0
    %339 = vmatpush1.msra.mxu0 0.0
    %340 = vmatprep.subr.mxu0 0.0
    %341 = vmatpush1.msra.mxu0 0.0
    %342 = vmatprep.subr.mxu0 0.0
    %343 = vmatpush1.msra.mxu0 0.0
    %344 = vmatprep.subr.mxu0 0.0
    %345 = vmatpush1.msra.mxu0 0.0
    %346 = vmatprep.subr.mxu0 0.0
    %347 = vmatpush1.msra.mxu0 0.0
    %348 = vmatprep.subr.mxu0 0.0
    %349 = vmatpush1.msra.mxu0 0.0
    %350 = vmatprep.subr.mxu0 0.0
    %351 = vmatpush1.msra.mxu0 0.0
    %352 = vmatprep.subr.mxu0 0.0
    %353 = vmatpush1.msra.mxu0 0.0
    %354 = vmatprep.subr.mxu0 0.0
    %355 = vmatpush1.msra.mxu0 0.0
    %356 = vmatprep.subr.mxu0 0.0
    %357 = vmatpush1.msra.mxu0 0.0
    %358 = vmatprep.subr.mxu0 0.0
    %359 = vmatpush1.msra.mxu0 0.0
    %360 = vmatprep.subr.mxu0 0.0
    %361 = vmatpush1.msra.mxu0 0.0
    %362 = vmatprep.subr.mxu0 0.0
    %363 = vmatpush1.msra.mxu0 0.0
    %364 = vmatprep.subr.mxu0 0.0
    %365 = vmatpush1.msra.mxu0 0.0
    %366 = vmatprep.subr.mxu0 0.0
    %367 = vmatpush1.msra.mxu0 0.0
    %368 = vmatprep.subr.mxu0 0.0
    %369 = vmatpush1.msra.mxu0 0.0
    %370 = vmatprep.subr.mxu0 0.0
    %371 = vmatpush1.msra.mxu0 0.0
    %372 = vmatprep.mubr.f32.mxu0 0.0
    %373 = vmatmul.mubr.f32.gmra.mrb[0].mxu0 %v306
    %v374 = vpop.f32.mrb[0].mxu0
    %v375 = vadd.f32 0.0, %v374
    %v376 = vpop.f32.mrb[0].mxu0
    %377 = vdwg.mxu0
    %378 = vrot.lane.b32.xlu0 %v201, 120
    %v379 = vpop.permute.xlu0 %378
    %380 = vrot.lane.b32.xlu0 %v201, 88
    %v381 = vpop.permute.xlu0 %380
    %v382 = vsel %vm216, %v379, 0
    %v384 = vsel %vm216, %v381, 0
    %386 = vmatprep.subr.mxu0 0.0
    %387 = vmatpush1.xpose.msra.mxu0 %v384
    %388 = vmatprep.subr.mxu0 0.0
    %389 = vmatpush1.xpose.msra.mxu0 0.0
    %390 = vmatprep.subr.mxu0 0.0
    %391 = vmatpush1.xpose.msra.mxu0 0.0
    %392 = vmatprep.subr.mxu0 0.0
    %393 = vmatpush1.xpose.msra.mxu0 0.0
    %394 = vmatprep.subr.mxu0 0.0
    %395 = vmatpush1.xpose.msra.mxu0 0.0
    %396 = vmatprep.subr.mxu0 0.0
    %397 = vmatpush1.xpose.msra.mxu0 0.0
    %398 = vmatprep.subr.mxu0 0.0
    %399 = vmatpush1.xpose.msra.mxu0 0.0
    %400 = vmatprep.subr.mxu0 0.0
    %401 = vmatpush1.xpose.msra.mxu0 0.0
    %402 = vmatprep.subr.mxu0 0.0
    %403 = vmatpush1.xpose.msra.mxu0 0.0
    %404 = vmatprep.subr.mxu0 0.0
    %405 = vmatpush1.xpose.msra.mxu0 0.0
    %406 = vmatprep.subr.mxu0 0.0
    %407 = vmatpush1.xpose.msra.mxu0 0.0
    %408 = vmatprep.subr.mxu0 0.0
    %409 = vmatpush1.xpose.msra.mxu0 0.0
    %410 = vmatprep.subr.mxu0 0.0
    %411 = vmatpush1.xpose.msra.mxu0 0.0
    %412 = vmatprep.subr.mxu0 0.0
    %413 = vmatpush1.xpose.msra.mxu0 0.0
    %414 = vmatprep.subr.mxu0 0.0
    %415 = vmatpush1.xpose.msra.mxu0 0.0
    %416 = vmatprep.subr.mxu0 0.0
    %417 = vmatpush1.xpose.msra.mxu0 0.0
    %418 = vmatprep.subr.mxu0 0.0
    %419 = vmatpush1.xpose.msra.mxu0 0.0
    %420 = vmatprep.subr.mxu0 0.0
    %421 = vmatpush1.xpose.msra.mxu0 0.0
    %422 = vmatprep.subr.mxu0 0.0
    %423 = vmatpush1.xpose.msra.mxu0 0.0
    %424 = vmatprep.subr.mxu0 0.0
    %425 = vmatpush1.xpose.msra.mxu0 0.0
    %426 = vmatprep.subr.mxu0 0.0
    %427 = vmatpush1.xpose.msra.mxu0 0.0
    %428 = vmatprep.subr.mxu0 0.0
    %429 = vmatpush1.xpose.msra.mxu0 0.0
    %430 = vmatprep.subr.mxu0 0.0
    %431 = vmatpush1.xpose.msra.mxu0 0.0
    %432 = vmatprep.subr.mxu0 0.0
    %433 = vmatpush1.xpose.msra.mxu0 0.0
    %434 = vmatprep.subr.mxu0 0.0
    %435 = vmatpush1.xpose.msra.mxu0 0.0
    %436 = vmatprep.subr.mxu0 0.0
    %437 = vmatpush1.xpose.msra.mxu0 0.0
    %438 = vmatprep.subr.mxu0 0.0
    %439 = vmatpush1.xpose.msra.mxu0 0.0
    %440 = vmatprep.subr.mxu0 0.0
    %441 = vmatpush1.xpose.msra.mxu0 0.0
    %442 = vmatprep.subr.mxu0 0.0
    %443 = vmatpush1.xpose.msra.mxu0 0.0
    %444 = vmatprep.subr.mxu0 0.0
    %445 = vmatpush1.xpose.msra.mxu0 0.0
    %446 = vmatprep.subr.mxu0 0.0
    %447 = vmatpush1.xpose.msra.mxu0 0.0
    %448 = vmatprep.subr.mxu0 0.0
    %449 = vmatpush1.xpose.msra.mxu0 0.0
    %450 = vmatprep.mubr.f32.mxu0 0.0
    %451 = vmatmul.mubr.f32.gmra.mrb[0].mxu0 %v382
    %v452 = vpop.f32.mrb[0].mxu0
    %v453 = vadd.f32 %v212, %v452
    %v454 = vpop.f32.mrb[0].mxu0
    %455 = vdwg.mxu0
    %v456 = vsel %vm216, %v453, -inf
    %457 = vmax.xlane.f32.xlu0 %v456
    %v458 = vpop.xlane.xlu0 %457
    %v459 = vsub.f32 %v453, %v458
    %v460 = vmul.f32 %v459, 1.442695
    %v461 = vpow.pop %v460
    %v462 = vsel %vm216, %v461, 0.0
    %463 = vadd.xlane.f32.xlu0 %v462
    %v464 = vpop.xlane.xlu0 %463
    %v465 = vrcp.pop %v464
    %v466 = vmul.f32 %v461, %v465
    %467 = vrot.lane.b32.xlu0 %v201, 56
    %v468 = vpop.permute.xlu0 %467
    %v471 = vsel %vm216, %v466, 0
    %473 = vmatprep.subr.mxu0 0.0
    %474 = vmatpush1.msra.mxu0 %v468
    %475 = vmatprep.subr.mxu0 0.0
    %476 = vmatpush1.msra.mxu0 0.0
    %477 = vmatprep.subr.mxu0 0.0
    %478 = vmatpush1.msra.mxu0 0.0
    %479 = vmatprep.subr.mxu0 0.0
    %480 = vmatpush1.msra.mxu0 0.0
    %481 = vmatprep.subr.mxu0 0.0
    %482 = vmatpush1.msra.mxu0 0.0
    %483 = vmatprep.subr.mxu0 0.0
    %484 = vmatpush1.msra.mxu0 0.0
    %485 = vmatprep.subr.mxu0 0.0
    %486 = vmatpush1.msra.mxu0 0.0
    %487 = vmatprep.subr.mxu0 0.0
    %488 = vmatpush1.msra.mxu0 0.0
    %489 = vmatprep.subr.mxu0 0.0
    %490 = vmatpush1.msra.mxu0 0.0
    %491 = vmatprep.subr.mxu0 0.0
    %492 = vmatpush1.msra.mxu0 0.0
    %493 = vmatprep.subr.mxu0 0.0
    %494 = vmatpush1.msra.mxu0 0.0
    %495 = vmatprep.subr.mxu0 0.0
    %496 = vmatpush1.msra.mxu0 0.0
    %497 = vmatprep.subr.mxu0 0.0
    %498 = vmatpush1.msra.mxu0 0.0
    %499 = vmatprep.subr.mxu0 0.0
    %500 = vmatpush1.msra.mxu0 0.0
    %501 = vmatprep.subr.mxu0 0.0
    %502 = vmatpush1.msra.mxu0 0.0
    %503 = vmatprep.subr.mxu0 0.0
    %504 = vmatpush1.msra.mxu0 0.0
    %505 = vmatprep.subr.mxu0 0.0
    %506 = vmatpush1.msra.mxu0 0.0
    %507 = vmatprep.subr.mxu0 0.0
    %508 = vmatpush1.msra.mxu0 0.0
    %509 = vmatprep.subr.mxu0 0.0
    %510 = vmatpush1.msra.mxu0 0.0
    %511 = vmatprep.subr.mxu0 0.0
    %512 = vmatpush1.msra.mxu0 0.0
    %513 = vmatprep.subr.mxu0 0.0
    %514 = vmatpush1.msra.mxu0 0.0
    %515 = vmatprep.subr.mxu0 0.0
    %516 = vmatpush1.msra.mxu0 0.0
    %517 = vmatprep.subr.mxu0 0.0
    %518 = vmatpush1.msra.mxu0 0.0
    %519 = vmatprep.subr.mxu0 0.0
    %520 = vmatpush1.msra.mxu0 0.0
    %521 = vmatprep.subr.mxu0 0.0
    %522 = vmatpush1.msra.mxu0 0.0
    %523 = vmatprep.subr.mxu0 0.0
    %524 = vmatpush1.msra.mxu0 0.0
    %525 = vmatprep.subr.mxu0 0.0
    %526 = vmatpush1.msra.mxu0 0.0
    %527 = vmatprep.subr.mxu0 0.0
    %528 = vmatpush1.msra.mxu0 0.0
    %529 = vmatprep.subr.mxu0 0.0
    %530 = vmatpush1.msra.mxu0 0.0
    %531 = vmatprep.subr.mxu0 0.0
    %532 = vmatpush1.msra.mxu0 0.0
    %533 = vmatprep.subr.mxu0 0.0
    %534 = vmatpush1.msra.mxu0 0.0
    %535 = vmatprep.subr.mxu0 0.0
    %536 = vmatpush1.msra.mxu0 0.0
    %537 = vmatprep.mubr.f32.mxu0 0.0
    %538 = vmatmul.mubr.f32.gmra.mrb[0].mxu0 %v471
    %v539 = vpop.f32.mrb[0].mxu0
    %v540 = vadd.f32 0.0, %v539
    %v541 = vpop.f32.mrb[0].mxu0
    %542 = vdwg.mxu0
    %543 = vrot.lane.b32.xlu0 %v201, 112
    %v544 = vpop.permute.xlu0 %543
    %545 = vrot.lane.b32.xlu0 %v201, 80
    %v546 = vpop.permute.xlu0 %545
    %v547 = vsel %vm216, %v544, 0
    %v549 = vsel %vm216, %v546, 0
    %551 = vmatprep.subr.mxu0 0.0
    %552 = vmatpush1.xpose.msra.mxu0 %v549
    %553 = vmatprep.subr.mxu0 0.0
    %554 = vmatpush1.xpose.msra.mxu0 0.0
    %555 = vmatprep.subr.mxu0 0.0
    %556 = vmatpush1.xpose.msra.mxu0 0.0
    %557 = vmatprep.subr.mxu0 0.0
    %558 = vmatpush1.xpose.msra.mxu0 0.0
    %559 = vmatprep.subr.mxu0 0.0
    %560 = vmatpush1.xpose.msra.mxu0 0.0
    %561 = vmatprep.subr.mxu0 0.0
    %562 = vmatpush1.xpose.msra.mxu0 0.0
    %563 = vmatprep.subr.mxu0 0.0
    %564 = vmatpush1.xpose.msra.mxu0 0.0
    %565 = vmatprep.subr.mxu0 0.0
    %566 = vmatpush1.xpose.msra.mxu0 0.0
    %567 = vmatprep.subr.mxu0 0.0
    %568 = vmatpush1.xpose.msra.mxu0 0.0
    %569 = vmatprep.subr.mxu0 0.0
    %570 = vmatpush1.xpose.msra.mxu0 0.0
    %571 = vmatprep.subr.mxu0 0.0
    %572 = vmatpush1.xpose.msra.mxu0 0.0
    %573 = vmatprep.subr.mxu0 0.0
    %574 = vmatpush1.xpose.msra.mxu0 0.0
    %575 = vmatprep.subr.mxu0 0.0
    %576 = vmatpush1.xpose.msra.mxu0 0.0
    %577 = vmatprep.subr.mxu0 0.0
    %578 = vmatpush1.xpose.msra.mxu0 0.0
    %579 = vmatprep.subr.mxu0 0.0
    %580 = vmatpush1.xpose.msra.mxu0 0.0
    %581 = vmatprep.subr.mxu0 0.0
    %582 = vmatpush1.xpose.msra.mxu0 0.0
    %583 = vmatprep.subr.mxu0 0.0
    %584 = vmatpush1.xpose.msra.mxu0 0.0
    %585 = vmatprep.subr.mxu0 0.0
    %586 = vmatpush1.xpose.msra.mxu0 0.0
    %587 = vmatprep.subr.mxu0 0.0
    %588 = vmatpush1.xpose.msra.mxu0 0.0
    %589 = vmatprep.subr.mxu0 0.0
    %590 = vmatpush1.xpose.msra.mxu0 0.0
    %591 = vmatprep.subr.mxu0 0.0
    %592 = vmatpush1.xpose.msra.mxu0 0.0
    %593 = vmatprep.subr.mxu0 0.0
    %594 = vmatpush1.xpose.msra.mxu0 0.0
    %595 = vmatprep.subr.mxu0 0.0
    %596 = vmatpush1.xpose.msra.mxu0 0.0
    %597 = vmatprep.subr.mxu0 0.0
    %598 = vmatpush1.xpose.msra.mxu0 0.0
    %599 = vmatprep.subr.mxu0 0.0
    %600 = vmatpush1.xpose.msra.mxu0 0.0
    %601 = vmatprep.subr.mxu0 0.0
    %602 = vmatpush1.xpose.msra.mxu0 0.0
    %603 = vmatprep.subr.mxu0 0.0
    %604 = vmatpush1.xpose.msra.mxu0 0.0
    %605 = vmatprep.subr.mxu0 0.0
    %606 = vmatpush1.xpose.msra.mxu0 0.0
    %607 = vmatprep.subr.mxu0 0.0
    %608 = vmatpush1.xpose.msra.mxu0 0.0
    %609 = vmatprep.subr.mxu0 0.0
    %610 = vmatpush1.xpose.msra.mxu0 0.0
    %611 = vmatprep.subr.mxu0 0.0
    %612 = vmatpush1.xpose.msra.mxu0 0.0
    %613 = vmatprep.subr.mxu0 0.0
    %614 = vmatpush1.xpose.msra.mxu0 0.0
    %615 = vmatprep.mubr.f32.mxu0 0.0
    %616 = vmatmul.mubr.f32.gmra.mrb[0].mxu0 %v547
    %v617 = vpop.f32.mrb[0].mxu0
    %v618 = vadd.f32 %v212, %v617
    %v619 = vpop.f32.mrb[0].mxu0
    %620 = vdwg.mxu0
    %v621 = vsel %vm216, %v618, -inf
    %622 = vmax.xlane.f32.xlu0 %v621
    %v623 = vpop.xlane.xlu0 %622
    %v624 = vsub.f32 %v618, %v623
    %v625 = vmul.f32 %v624, 1.442695
    %v626 = vpow.pop %v625
    %v627 = vsel %vm216, %v626, 0.0
    %628 = vadd.xlane.f32.xlu0 %v627
    %v629 = vpop.xlane.xlu0 %628
    %v630 = vrcp.pop %v629
    %v631 = vmul.f32 %v626, %v630
    %632 = vrot.lane.b32.xlu0 %v201, 48
    %v633 = vpop.permute.xlu0 %632
    %v636 = vsel %vm216, %v631, 0
    %638 = vmatprep.subr.mxu0 0.0
    %639 = vmatpush1.msra.mxu0 %v633
    %640 = vmatprep.subr.mxu0 0.0
    %641 = vmatpush1.msra.mxu0 0.0
    %642 = vmatprep.subr.mxu0 0.0
    %643 = vmatpush1.msra.mxu0 0.0
    %644 = vmatprep.subr.mxu0 0.0
    %645 = vmatpush1.msra.mxu0 0.0
    %646 = vmatprep.subr.mxu0 0.0
    %647 = vmatpush1.msra.mxu0 0.0
    %648 = vmatprep.subr.mxu0 0.0
    %649 = vmatpush1.msra.mxu0 0.0
    %650 = vmatprep.subr.mxu0 0.0
    %651 = vmatpush1.msra.mxu0 0.0
    %652 = vmatprep.subr.mxu0 0.0
    %653 = vmatpush1.msra.mxu0 0.0
    %654 = vmatprep.subr.mxu0 0.0
    %655 = vmatpush1.msra.mxu0 0.0
    %656 = vmatprep.subr.mxu0 0.0
    %657 = vmatpush1.msra.mxu0 0.0
    %658 = vmatprep.subr.mxu0 0.0
    %659 = vmatpush1.msra.mxu0 0.0
    %660 = vmatprep.subr.mxu0 0.0
    %661 = vmatpush1.msra.mxu0 0.0
    %662 = vmatprep.subr.mxu0 0.0
    %663 = vmatpush1.msra.mxu0 0.0
    %664 = vmatprep.subr.mxu0 0.0
    %665 = vmatpush1.msra.mxu0 0.0
    %666 = vmatprep.subr.mxu0 0.0
    %667 = vmatpush1.msra.mxu0 0.0
    %668 = vmatprep.subr.mxu0 0.0
    %669 = vmatpush1.msra.mxu0 0.0
    %670 = vmatprep.subr.mxu0 0.0
    %671 = vmatpush1.msra.mxu0 0.0
    %672 = vmatprep.subr.mxu0 0.0
    %673 = vmatpush1.msra.mxu0 0.0
    %674 = vmatprep.subr.mxu0 0.0
    %675 = vmatpush1.msra.mxu0 0.0
    %676 = vmatprep.subr.mxu0 0.0
    %677 = vmatpush1.msra.mxu0 0.0
    %678 = vmatprep.subr.mxu0 0.0
    %679 = vmatpush1.msra.mxu0 0.0
    %680 = vmatprep.subr.mxu0 0.0
    %681 = vmatpush1.msra.mxu0 0.0
    %682 = vmatprep.subr.mxu0 0.0
    %683 = vmatpush1.msra.mxu0 0.0
    %684 = vmatprep.subr.mxu0 0.0
    %685 = vmatpush1.msra.mxu0 0.0
    %686 = vmatprep.subr.mxu0 0.0
    %687 = vmatpush1.msra.mxu0 0.0
    %688 = vmatprep.subr.mxu0 0.0
    %689 = vmatpush1.msra.mxu0 0.0
    %690 = vmatprep.subr.mxu0 0.0
    %691 = vmatpush1.msra.mxu0 0.0
    %692 = vmatprep.subr.mxu0 0.0
    %693 = vmatpush1.msra.mxu0 0.0
    %694 = vmatprep.subr.mxu0 0.0
    %695 = vmatpush1.msra.mxu0 0.0
    %696 = vmatprep.subr.mxu0 0.0
    %697 = vmatpush1.msra.mxu0 0.0
    %698 = vmatprep.subr.mxu0 0.0
    %699 = vmatpush1.msra.mxu0 0.0
    %700 = vmatprep.subr.mxu0 0.0
    %701 = vmatpush1.msra.mxu0 0.0
    %702 = vmatprep.mubr.f32.mxu0 0.0
    %703 = vmatmul.mubr.f32.gmra.mrb[0].mxu0 %v636
    %v704 = vpop.f32.mrb[0].mxu0
    %v705 = vadd.f32 0.0, %v704
    %v706 = vpop.f32.mrb[0].mxu0
    %707 = vdwg.mxu0
    %708 = vrot.lane.b32.xlu0 %v201, 104
    %v709 = vpop.permute.xlu0 %708
    %710 = vrot.lane.b32.xlu0 %v201, 72
    %v711 = vpop.permute.xlu0 %710
    %v712 = vsel %vm216, %v709, 0
    %v714 = vsel %vm216, %v711, 0
    %716 = vmatprep.subr.mxu0 0.0
    %717 = vmatpush1.xpose.msra.mxu0 %v714
    %718 = vmatprep.subr.mxu0 0.0
    %719 = vmatpush1.xpose.msra.mxu0 0.0
    %720 = vmatprep.subr.mxu0 0.0
    %721 = vmatpush1.xpose.msra.mxu0 0.0
    %722 = vmatprep.subr.mxu0 0.0
    %723 = vmatpush1.xpose.msra.mxu0 0.0
    %724 = vmatprep.subr.mxu0 0.0
    %725 = vmatpush1.xpose.msra.mxu0 0.0
    %726 = vmatprep.subr.mxu0 0.0
    %727 = vmatpush1.xpose.msra.mxu0 0.0
    %728 = vmatprep.subr.mxu0 0.0
    %729 = vmatpush1.xpose.msra.mxu0 0.0
    %730 = vmatprep.subr.mxu0 0.0
    %731 = vmatpush1.xpose.msra.mxu0 0.0
    %732 = vmatprep.subr.mxu0 0.0
    %733 = vmatpush1.xpose.msra.mxu0 0.0
    %734 = vmatprep.subr.mxu0 0.0
    %735 = vmatpush1.xpose.msra.mxu0 0.0
    %736 = vmatprep.subr.mxu0 0.0
    %737 = vmatpush1.xpose.msra.mxu0 0.0
    %738 = vmatprep.subr.mxu0 0.0
    %739 = vmatpush1.xpose.msra.mxu0 0.0
    %740 = vmatprep.subr.mxu0 0.0
    %741 = vmatpush1.xpose.msra.mxu0 0.0
    %742 = vmatprep.subr.mxu0 0.0
    %743 = vmatpush1.xpose.msra.mxu0 0.0
    %744 = vmatprep.subr.mxu0 0.0
    %745 = vmatpush1.xpose.msra.mxu0 0.0
    %746 = vmatprep.subr.mxu0 0.0
    %747 = vmatpush1.xpose.msra.mxu0 0.0
    %748 = vmatprep.subr.mxu0 0.0
    %749 = vmatpush1.xpose.msra.mxu0 0.0
    %750 = vmatprep.subr.mxu0 0.0
    %751 = vmatpush1.xpose.msra.mxu0 0.0
    %752 = vmatprep.subr.mxu0 0.0
    %753 = vmatpush1.xpose.msra.mxu0 0.0
    %754 = vmatprep.subr.mxu0 0.0
    %755 = vmatpush1.xpose.msra.mxu0 0.0
    %756 = vmatprep.subr.mxu0 0.0
    %757 = vmatpush1.xpose.msra.mxu0 0.0
    %758 = vmatprep.subr.mxu0 0.0
    %759 = vmatpush1.xpose.msra.mxu0 0.0
    %760 = vmatprep.subr.mxu0 0.0
    %761 = vmatpush1.xpose.msra.mxu0 0.0
    %762 = vmatprep.subr.mxu0 0.0
    %763 = vmatpush1.xpose.msra.mxu0 0.0
    %764 = vmatprep.subr.mxu0 0.0
    %765 = vmatpush1.xpose.msra.mxu0 0.0
    %766 = vmatprep.subr.mxu0 0.0
    %767 = vmatpush1.xpose.msra.mxu0 0.0
    %768 = vmatprep.subr.mxu0 0.0
    %769 = vmatpush1.xpose.msra.mxu0 0.0
    %770 = vmatprep.subr.mxu0 0.0
    %771 = vmatpush1.xpose.msra.mxu0 0.0
    %772 = vmatprep.subr.mxu0 0.0
    %773 = vmatpush1.xpose.msra.mxu0 0.0
    %774 = vmatprep.subr.mxu0 0.0
    %775 = vmatpush1.xpose.msra.mxu0 0.0
    %776 = vmatprep.subr.mxu0 0.0
    %777 = vmatpush1.xpose.msra.mxu0 0.0
    %778 = vmatprep.subr.mxu0 0.0
    %779 = vmatpush1.xpose.msra.mxu0 0.0
    %780 = vmatprep.mubr.f32.mxu0 0.0
    %781 = vmatmul.mubr.f32.gmra.mrb[0].mxu0 %v712
    %v782 = vpop.f32.mrb[0].mxu0
    %v783 = vadd.f32 %v212, %v782
    %v784 = vpop.f32.mrb[0].mxu0
    %785 = vdwg.mxu0
    %v786 = vsel %vm216, %v783, -inf
    %787 = vmax.xlane.f32.xlu0 %v786
    %v788 = vpop.xlane.xlu0 %787
    %v789 = vsub.f32 %v783, %v788
    %v790 = vmul.f32 %v789, 1.442695
    %v791 = vpow.pop %v790
    %v792 = vsel %vm216, %v791, 0.0
    %793 = vadd.xlane.f32.xlu0 %v792
    %v794 = vpop.xlane.xlu0 %793
    %v795 = vrcp.pop %v794
    %v796 = vmul.f32 %v791, %v795
    %797 = vrot.lane.b32.xlu0 %v201, 40
    %v798 = vpop.permute.xlu0 %797
    %v801 = vsel %vm216, %v796, 0
    %803 = vmatprep.subr.mxu0 0.0
    %804 = vmatpush1.msra.mxu0 %v798
    %805 = vmatprep.subr.mxu0 0.0
    %806 = vmatpush1.msra.mxu0 0.0
    %807 = vmatprep.subr.mxu0 0.0
    %808 = vmatpush1.msra.mxu0 0.0
    %809 = vmatprep.subr.mxu0 0.0
    %810 = vmatpush1.msra.mxu0 0.0
    %811 = vmatprep.subr.mxu0 0.0
    %812 = vmatpush1.msra.mxu0 0.0
    %813 = vmatprep.subr.mxu0 0.0
    %814 = vmatpush1.msra.mxu0 0.0
    %815 = vmatprep.subr.mxu0 0.0
    %816 = vmatpush1.msra.mxu0 0.0
    %817 = vmatprep.subr.mxu0 0.0
    %818 = vmatpush1.msra.mxu0 0.0
    %819 = vmatprep.subr.mxu0 0.0
    %820 = vmatpush1.msra.mxu0 0.0
    %821 = vmatprep.subr.mxu0 0.0
    %822 = vmatpush1.msra.mxu0 0.0
    %823 = vmatprep.subr.mxu0 0.0
    %824 = vmatpush1.msra.mxu0 0.0
    %825 = vmatprep.subr.mxu0 0.0
    %826 = vmatpush1.msra.mxu0 0.0
    %827 = vmatprep.subr.mxu0 0.0
    %828 = vmatpush1.msra.mxu0 0.0
    %829 = vmatprep.subr.mxu0 0.0
    %830 = vmatpush1.msra.mxu0 0.0
    %831 = vmatprep.subr.mxu0 0.0
    %832 = vmatpush1.msra.mxu0 0.0
    %833 = vmatprep.subr.mxu0 0.0
    %834 = vmatpush1.msra.mxu0 0.0
    %835 = vmatprep.subr.mxu0 0.0
    %836 = vmatpush1.msra.mxu0 0.0
    %837 = vmatprep.subr.mxu0 0.0
    %838 = vmatpush1.msra.mxu0 0.0
    %839 = vmatprep.subr.mxu0 0.0
    %840 = vmatpush1.msra.mxu0 0.0
    %841 = vmatprep.subr.mxu0 0.0
    %842 = vmatpush1.msra.mxu0 0.0
    %843 = vmatprep.subr.mxu0 0.0
    %844 = vmatpush1.msra.mxu0 0.0
    %845 = vmatprep.subr.mxu0 0.0
    %846 = vmatpush1.msra.mxu0 0.0
    %847 = vmatprep.subr.mxu0 0.0
    %848 = vmatpush1.msra.mxu0 0.0
    %849 = vmatprep.subr.mxu0 0.0
    %850 = vmatpush1.msra.mxu0 0.0
    %851 = vmatprep.subr.mxu0 0.0
    %852 = vmatpush1.msra.mxu0 0.0
    %853 = vmatprep.subr.mxu0 0.0
    %854 = vmatpush1.msra.mxu0 0.0
    %855 = vmatprep.subr.mxu0 0.0
    %856 = vmatpush1.msra.mxu0 0.0
    %857 = vmatprep.subr.mxu0 0.0
    %858 = vmatpush1.msra.mxu0 0.0
    %859 = vmatprep.subr.mxu0 0.0
    %860 = vmatpush1.msra.mxu0 0.0
    %861 = vmatprep.subr.mxu0 0.0
    %862 = vmatpush1.msra.mxu0 0.0
    %863 = vmatprep.subr.mxu0 0.0
    %864 = vmatpush1.msra.mxu0 0.0
    %865 = vmatprep.subr.mxu0 0.0
    %866 = vmatpush1.msra.mxu0 0.0
    %867 = vmatprep.mubr.f32.mxu0 0.0
    %868 = vmatmul.mubr.f32.gmra.mrb[0].mxu0 %v801
    %v869 = vpop.f32.mrb[0].mxu0
    %v870 = vadd.f32 0.0, %v869
    %v871 = vpop.f32.mrb[0].mxu0
    %872 = vdwg.mxu0
    %874 = vrot.lane.b32.xlu0 %v540, 8
    %v875 = vpop.permute.xlu0 %874
    %878 = vrot.lane.b32.xlu0 %v705, 16
    %v879 = vpop.permute.xlu0 %878
    %882 = vrot.lane.b32.xlu0 %v870, 24
    %v883 = vpop.permute.xlu0 %882
    %v885 = vsel %vm216, %v375, %v875
    %vm886 = vcmask 130048
    %v887 = vsel %vm886, %v885, %v879
    %vm888 = vcmask 195584
    %v889 = vsel %vm888, %v887, %v883
    %v890 = vlaneseq
    %v891 = vshrl.u32 %v890, 7
    %v892 = vsub.s32 1, %v891
    %v893 = vrot.slane %v116, %v892
    %895 = vrot.lane.b32.xlu0 %v206, 96
    %v896 = vpop.permute.xlu0 %895
    %v897 = vsel %vm216, %v206, 0
    %v899 = vsel %vm216, %v896, 0
    %901 = vmatprep.subr.mxu0 0.0
    %902 = vmatpush1.xpose.msra.mxu0 %v899
    %903 = vmatprep.subr.mxu0 0.0
    %904 = vmatpush1.xpose.msra.mxu0 0.0
    %905 = vmatprep.subr.mxu0 0.0
    %906 = vmatpush1.xpose.msra.mxu0 0.0
    %907 = vmatprep.subr.mxu0 0.0
    %908 = vmatpush1.xpose.msra.mxu0 0.0
    %909 = vmatprep.subr.mxu0 0.0
    %910 = vmatpush1.xpose.msra.mxu0 0.0
    %911 = vmatprep.subr.mxu0 0.0
    %912 = vmatpush1.xpose.msra.mxu0 0.0
    %913 = vmatprep.subr.mxu0 0.0
    %914 = vmatpush1.xpose.msra.mxu0 0.0
    %915 = vmatprep.subr.mxu0 0.0
    %916 = vmatpush1.xpose.msra.mxu0 0.0
    %917 = vmatprep.subr.mxu0 0.0
    %918 = vmatpush1.xpose.msra.mxu0 0.0
    %919 = vmatprep.subr.mxu0 0.0
    %920 = vmatpush1.xpose.msra.mxu0 0.0
    %921 = vmatprep.subr.mxu0 0.0
    %922 = vmatpush1.xpose.msra.mxu0 0.0
    %923 = vmatprep.subr.mxu0 0.0
    %924 = vmatpush1.xpose.msra.mxu0 0.0
    %925 = vmatprep.subr.mxu0 0.0
    %926 = vmatpush1.xpose.msra.mxu0 0.0
    %927 = vmatprep.subr.mxu0 0.0
    %928 = vmatpush1.xpose.msra.mxu0 0.0
    %929 = vmatprep.subr.mxu0 0.0
    %930 = vmatpush1.xpose.msra.mxu0 0.0
    %931 = vmatprep.subr.mxu0 0.0
    %932 = vmatpush1.xpose.msra.mxu0 0.0
    %933 = vmatprep.subr.mxu0 0.0
    %934 = vmatpush1.xpose.msra.mxu0 0.0
    %935 = vmatprep.subr.mxu0 0.0
    %936 = vmatpush1.xpose.msra.mxu0 0.0
    %937 = vmatprep.subr.mxu0 0.0
    %938 = vmatpush1.xpose.msra.mxu0 0.0
    %939 = vmatprep.subr.mxu0 0.0
    %940 = vmatpush1.xpose.msra.mxu0 0.0
    %941 = vmatprep.subr.mxu0 0.0
    %942 = vmatpush1.xpose.msra.mxu0 0.0
    %943 = vmatprep.subr.mxu0 0.0
    %944 = vmatpush1.xpose.msra.mxu0 0.0
    %945 = vmatprep.subr.mxu0 0.0
    %946 = vmatpush1.xpose.msra.mxu0 0.0
    %947 = vmatprep.subr.mxu0 0.0
    %948 = vmatpush1.xpose.msra.mxu0 0.0
    %949 = vmatprep.subr.mxu0 0.0
    %950 = vmatpush1.xpose.msra.mxu0 0.0
    %951 = vmatprep.subr.mxu0 0.0
    %952 = vmatpush1.xpose.msra.mxu0 0.0
    %953 = vmatprep.subr.mxu0 0.0
    %954 = vmatpush1.xpose.msra.mxu0 0.0
    %955 = vmatprep.subr.mxu0 0.0
    %956 = vmatpush1.xpose.msra.mxu0 0.0
    %957 = vmatprep.subr.mxu0 0.0
    %958 = vmatpush1.xpose.msra.mxu0 0.0
    %959 = vmatprep.subr.mxu0 0.0
    %960 = vmatpush1.xpose.msra.mxu0 0.0
    %961 = vmatprep.subr.mxu0 0.0
    %962 = vmatpush1.xpose.msra.mxu0 0.0
    %963 = vmatprep.subr.mxu0 0.0
    %964 = vmatpush1.xpose.msra.mxu0 0.0
    %965 = vmatprep.mubr.f32.mxu0 0.0
    %966 = vmatmul.mubr.f32.gmra.mrb[0].mxu0 %v897
    %v967 = vpop.f32.mrb[0].mxu0
    %v968 = vadd.f32 %v893, %v967
    %v969 = vpop.f32.mrb[0].mxu0
    %970 = vdwg.mxu0
    %v971 = vsel %vm216, %v968, -inf
    %972 = vmax.xlane.f32.xlu0 %v971
    %v973 = vpop.xlane.xlu0 %972
    %v974 = vsub.f32 %v968, %v973
    %v975 = vmul.f32 %v974, 1.442695
    %v976 = vpow.pop %v975
    %v977 = vsel %vm216, %v976, 0.0
    %978 = vadd.xlane.f32.xlu0 %v977
    %v979 = vpop.xlane.xlu0 %978
    %v980 = vrcp.pop %v979
    %v981 = vmul.f32 %v976, %v980
    %982 = vrot.lane.b32.xlu0 %v206, 64
    %v983 = vpop.permute.xlu0 %982
    %v986 = vsel %vm216, %v981, 0
    %988 = vmatprep.subr.mxu0 0.0
    %989 = vmatpush1.msra.mxu0 %v983
    %990 = vmatprep.subr.mxu0 0.0
    %991 = vmatpush1.msra.mxu0 0.0
    %992 = vmatprep.subr.mxu0 0.0
    %993 = vmatpush1.msra.mxu0 0.0
    %994 = vmatprep.subr.mxu0 0.0
    %995 = vmatpush1.msra.mxu0 0.0
    %996 = vmatprep.subr.mxu0 0.0
    %997 = vmatpush1.msra.mxu0 0.0
    %998 = vmatprep.subr.mxu0 0.0
    %999 = vmatpush1.msra.mxu0 0.0
    %1000 = vmatprep.subr.mxu0 0.0
    %1001 = vmatpush1.msra.mxu0 0.0
    %1002 = vmatprep.subr.mxu0 0.0
    %1003 = vmatpush1.msra.mxu0 0.0
    %1004 = vmatprep.subr.mxu0 0.0
    %1005 = vmatpush1.msra.mxu0 0.0
    %1006 = vmatprep.subr.mxu0 0.0
    %1007 = vmatpush1.msra.mxu0 0.0
    %1008 = vmatprep.subr.mxu0 0.0
    %1009 = vmatpush1.msra.mxu0 0.0
    %1010 = vmatprep.subr.mxu0 0.0
    %1011 = vmatpush1.msra.mxu0 0.0
    %1012 = vmatprep.subr.mxu0 0.0
    %1013 = vmatpush1.msra.mxu0 0.0
    %1014 = vmatprep.subr.mxu0 0.0
    %1015 = vmatpush1.msra.mxu0 0.0
    %1016 = vmatprep.subr.mxu0 0.0
    %1017 = vmatpush1.msra.mxu0 0.0
    %1018 = vmatprep.subr.mxu0 0.0
    %1019 = vmatpush1.msra.mxu0 0.0
    %1020 = vmatprep.subr.mxu0 0.0
    %1021 = vmatpush1.msra.mxu0 0.0
    %1022 = vmatprep.subr.mxu0 0.0
    %1023 = vmatpush1.msra.mxu0 0.0
    %1024 = vmatprep.subr.mxu0 0.0
    %1025 = vmatpush1.msra.mxu0 0.0
    %1026 = vmatprep.subr.mxu0 0.0
    %1027 = vmatpush1.msra.mxu0 0.0
    %1028 = vmatprep.subr.mxu0 0.0
    %1029 = vmatpush1.msra.mxu0 0.0
    %1030 = vmatprep.subr.mxu0 0.0
    %1031 = vmatpush1.msra.mxu0 0.0
    %1032 = vmatprep.subr.mxu0 0.0
    %1033 = vmatpush1.msra.mxu0 0.0
    %1034 = vmatprep.subr.mxu0 0.0
    %1035 = vmatpush1.msra.mxu0 0.0
    %1036 = vmatprep.subr.mxu0 0.0
    %1037 = vmatpush1.msra.mxu0 0.0
    %1038 = vmatprep.subr.mxu0 0.0
    %1039 = vmatpush1.msra.mxu0 0.0
    %1040 = vmatprep.subr.mxu0 0.0
    %1041 = vmatpush1.msra.mxu0 0.0
    %1042 = vmatprep.subr.mxu0 0.0
    %1043 = vmatpush1.msra.mxu0 0.0
    %1044 = vmatprep.subr.mxu0 0.0
    %1045 = vmatpush1.msra.mxu0 0.0
    %1046 = vmatprep.subr.mxu0 0.0
    %1047 = vmatpush1.msra.mxu0 0.0
    %1048 = vmatprep.subr.mxu0 0.0
    %1049 = vmatpush1.msra.mxu0 0.0
    %1050 = vmatprep.subr.mxu0 0.0
    %1051 = vmatpush1.msra.mxu0 0.0
    %1052 = vmatprep.mubr.f32.mxu0 0.0
    %1053 = vmatmul.mubr.f32.gmra.mrb[0].mxu0 %v986
    %v1054 = vpop.f32.mrb[0].mxu0
    %v1055 = vadd.f32 0.0, %v1054
    %v1056 = vpop.f32.mrb[0].mxu0
    %1057 = vdwg.mxu0
    %1058 = vrot.lane.b32.xlu0 %v206, 120
    %v1059 = vpop.permute.xlu0 %1058
    %1060 = vrot.lane.b32.xlu0 %v206, 88
    %v1061 = vpop.permute.xlu0 %1060
    %v1062 = vsel %vm216, %v1059, 0
    %v1064 = vsel %vm216, %v1061, 0
    %1066 = vmatprep.subr.mxu0 0.0
    %1067 = vmatpush1.xpose.msra.mxu0 %v1064
    %1068 = vmatprep.subr.mxu0 0.0
    %1069 = vmatpush1.xpose.msra.mxu0 0.0
    %1070 = vmatprep.subr.mxu0 0.0
    %1071 = vmatpush1.xpose.msra.mxu0 0.0
    %1072 = vmatprep.subr.mxu0 0.0
    %1073 = vmatpush1.xpose.msra.mxu0 0.0
    %1074 = vmatprep.subr.mxu0 0.0
    %1075 = vmatpush1.xpose.msra.mxu0 0.0
    %1076 = vmatprep.subr.mxu0 0.0
    %1077 = vmatpush1.xpose.msra.mxu0 0.0
    %1078 = vmatprep.subr.mxu0 0.0
    %1079 = vmatpush1.xpose.msra.mxu0 0.0
    %1080 = vmatprep.subr.mxu0 0.0
    %1081 = vmatpush1.xpose.msra.mxu0 0.0
    %1082 = vmatprep.subr.mxu0 0.0
    %1083 = vmatpush1.xpose.msra.mxu0 0.0
    %1084 = vmatprep.subr.mxu0 0.0
    %1085 = vmatpush1.xpose.msra.mxu0 0.0
    %1086 = vmatprep.subr.mxu0 0.0
    %1087 = vmatpush1.xpose.msra.mxu0 0.0
    %1088 = vmatprep.subr.mxu0 0.0
    %1089 = vmatpush1.xpose.msra.mxu0 0.0
    %1090 = vmatprep.subr.mxu0 0.0
    %1091 = vmatpush1.xpose.msra.mxu0 0.0
    %1092 = vmatprep.subr.mxu0 0.0
    %1093 = vmatpush1.xpose.msra.mxu0 0.0
    %1094 = vmatprep.subr.mxu0 0.0
    %1095 = vmatpush1.xpose.msra.mxu0 0.0
    %1096 = vmatprep.subr.mxu0 0.0
    %1097 = vmatpush1.xpose.msra.mxu0 0.0
    %1098 = vmatprep.subr.mxu0 0.0
    %1099 = vmatpush1.xpose.msra.mxu0 0.0
    %1100 = vmatprep.subr.mxu0 0.0
    %1101 = vmatpush1.xpose.msra.mxu0 0.0
    %1102 = vmatprep.subr.mxu0 0.0
    %1103 = vmatpush1.xpose.msra.mxu0 0.0
    %1104 = vmatprep.subr.mxu0 0.0
    %1105 = vmatpush1.xpose.msra.mxu0 0.0
    %1106 = vmatprep.subr.mxu0 0.0
    %1107 = vmatpush1.xpose.msra.mxu0 0.0
    %1108 = vmatprep.subr.mxu0 0.0
    %1109 = vmatpush1.xpose.msra.mxu0 0.0
    %1110 = vmatprep.subr.mxu0 0.0
    %1111 = vmatpush1.xpose.msra.mxu0 0.0
    %1112 = vmatprep.subr.mxu0 0.0
    %1113 = vmatpush1.xpose.msra.mxu0 0.0
    %1114 = vmatprep.subr.mxu0 0.0
    %1115 = vmatpush1.xpose.msra.mxu0 0.0
    %1116 = vmatprep.subr.mxu0 0.0
    %1117 = vmatpush1.xpose.msra.mxu0 0.0
    %1118 = vmatprep.subr.mxu0 0.0
    %1119 = vmatpush1.xpose.msra.mxu0 0.0
    %1120 = vmatprep.subr.mxu0 0.0
    %1121 = vmatpush1.xpose.msra.mxu0 0.0
    %1122 = vmatprep.subr.mxu0 0.0
    %1123 = vmatpush1.xpose.msra.mxu0 0.0
    %1124 = vmatprep.subr.mxu0 0.0
    %1125 = vmatpush1.xpose.msra.mxu0 0.0
    %1126 = vmatprep.subr.mxu0 0.0
    %1127 = vmatpush1.xpose.msra.mxu0 0.0
    %1128 = vmatprep.subr.mxu0 0.0
    %1129 = vmatpush1.xpose.msra.mxu0 0.0
    %1130 = vmatprep.mubr.f32.mxu0 0.0
    %1131 = vmatmul.mubr.f32.gmra.mrb[0].mxu0 %v1062
    %v1132 = vpop.f32.mrb[0].mxu0
    %v1133 = vadd.f32 %v893, %v1132
    %v1134 = vpop.f32.mrb[0].mxu0
    %1135 = vdwg.mxu0
    %v1136 = vsel %vm216, %v1133, -inf
    %1137 = vmax.xlane.f32.xlu0 %v1136
    %v1138 = vpop.xlane.xlu0 %1137
    %v1139 = vsub.f32 %v1133, %v1138
    %v1140 = vmul.f32 %v1139, 1.442695
    %v1141 = vpow.pop %v1140
    %v1142 = vsel %vm216, %v1141, 0.0
    %1143 = vadd.xlane.f32.xlu0 %v1142
    %v1144 = vpop.xlane.xlu0 %1143
    %v1145 = vrcp.pop %v1144
    %v1146 = vmul.f32 %v1141, %v1145
    %1147 = vrot.lane.b32.xlu0 %v206, 56
    %v1148 = vpop.permute.xlu0 %1147
    %v1151 = vsel %vm216, %v1146, 0
    %1153 = vmatprep.subr.mxu0 0.0
    %1154 = vmatpush1.msra.mxu0 %v1148
    %1155 = vmatprep.subr.mxu0 0.0
    %1156 = vmatpush1.msra.mxu0 0.0
    %1157 = vmatprep.subr.mxu0 0.0
    %1158 = vmatpush1.msra.mxu0 0.0
    %1159 = vmatprep.subr.mxu0 0.0
    %1160 = vmatpush1.msra.mxu0 0.0
    %1161 = vmatprep.subr.mxu0 0.0
    %1162 = vmatpush1.msra.mxu0 0.0
    %1163 = vmatprep.subr.mxu0 0.0
    %1164 = vmatpush1.msra.mxu0 0.0
    %1165 = vmatprep.subr.mxu0 0.0
    %1166 = vmatpush1.msra.mxu0 0.0
    %1167 = vmatprep.subr.mxu0 0.0
    %1168 = vmatpush1.msra.mxu0 0.0
    %1169 = vmatprep.subr.mxu0 0.0
    %1170 = vmatpush1.msra.mxu0 0.0
    %1171 = vmatprep.subr.mxu0 0.0
    %1172 = vmatpush1.msra.mxu0 0.0
    %1173 = vmatprep.subr.mxu0 0.0
    %1174 = vmatpush1.msra.mxu0 0.0
    %1175 = vmatprep.subr.mxu0 0.0
    %1176 = vmatpush1.msra.mxu0 0.0
    %1177 = vmatprep.subr.mxu0 0.0
    %1178 = vmatpush1.msra.mxu0 0.0
    %1179 = vmatprep.subr.mxu0 0.0
    %1180 = vmatpush1.msra.mxu0 0.0
    %1181 = vmatprep.subr.mxu0 0.0
    %1182 = vmatpush1.msra.mxu0 0.0
    %1183 = vmatprep.subr.mxu0 0.0
    %1184 = vmatpush1.msra.mxu0 0.0
    %1185 = vmatprep.subr.mxu0 0.0
    %1186 = vmatpush1.msra.mxu0 0.0
    %1187 = vmatprep.subr.mxu0 0.0
    %1188 = vmatpush1.msra.mxu0 0.0
    %1189 = vmatprep.subr.mxu0 0.0
    %1190 = vmatpush1.msra.mxu0 0.0
    %1191 = vmatprep.subr.mxu0 0.0
    %1192 = vmatpush1.msra.mxu0 0.0
    %1193 = vmatprep.subr.mxu0 0.0
    %1194 = vmatpush1.msra.mxu0 0.0
    %1195 = vmatprep.subr.mxu0 0.0
    %1196 = vmatpush1.msra.mxu0 0.0
    %1197 = vmatprep.subr.mxu0 0.0
    %1198 = vmatpush1.msra.mxu0 0.0
    %1199 = vmatprep.subr.mxu0 0.0
    %1200 = vmatpush1.msra.mxu0 0.0
    %1201 = vmatprep.subr.mxu0 0.0
    %1202 = vmatpush1.msra.mxu0 0.0
    %1203 = vmatprep.subr.mxu0 0.0
    %1204 = vmatpush1.msra.mxu0 0.0
    %1205 = vmatprep.subr.mxu0 0.0
    %1206 = vmatpush1.msra.mxu0 0.0
    %1207 = vmatprep.subr.mxu0 0.0
    %1208 = vmatpush1.msra.mxu0 0.0
    %1209 = vmatprep.subr.mxu0 0.0
    %1210 = vmatpush1.msra.mxu0 0.0
    %1211 = vmatprep.subr.mxu0 0.0
    %1212 = vmatpush1.msra.mxu0 0.0
    %1213 = vmatprep.subr.mxu0 0.0
    %1214 = vmatpush1.msra.mxu0 0.0
    %1215 = vmatprep.subr.mxu0 0.0
    %1216 = vmatpush1.msra.mxu0 0.0
    %1217 = vmatprep.mubr.f32.mxu0 0.0
    %1218 = vmatmul.mubr.f32.gmra.mrb[0].mxu0 %v1151
    %v1219 = vpop.f32.mrb[0].mxu0
    %v1220 = vadd.f32 0.0, %v1219
    %v1221 = vpop.f32.mrb[0].mxu0
    %1222 = vdwg.mxu0
    %1223 = vrot.lane.b32.xlu0 %v206, 112
    %v1224 = vpop.permute.xlu0 %1223
    %1225 = vrot.lane.b32.xlu0 %v206, 80
    %v1226 = vpop.permute.xlu0 %1225
    %v1227 = vsel %vm216, %v1224, 0
    %v1229 = vsel %vm216, %v1226, 0
    %1231 = vmatprep.subr.mxu0 0.0
    %1232 = vmatpush1.xpose.msra.mxu0 %v1229
    %1233 = vmatprep.subr.mxu0 0.0
    %1234 = vmatpush1.xpose.msra.mxu0 0.0
    %1235 = vmatprep.subr.mxu0 0.0
    %1236 = vmatpush1.xpose.msra.mxu0 0.0
    %1237 = vmatprep.subr.mxu0 0.0
    %1238 = vmatpush1.xpose.msra.mxu0 0.0
    %1239 = vmatprep.subr.mxu0 0.0
    %1240 = vmatpush1.xpose.msra.mxu0 0.0
    %1241 = vmatprep.subr.mxu0 0.0
    %1242 = vmatpush1.xpose.msra.mxu0 0.0
    %1243 = vmatprep.subr.mxu0 0.0
    %1244 = vmatpush1.xpose.msra.mxu0 0.0
    %1245 = vmatprep.subr.mxu0 0.0
    %1246 = vmatpush1.xpose.msra.mxu0 0.0
    %1247 = vmatprep.subr.mxu0 0.0
    %1248 = vmatpush1.xpose.msra.mxu0 0.0
    %1249 = vmatprep.subr.mxu0 0.0
    %1250 = vmatpush1.xpose.msra.mxu0 0.0
    %1251 = vmatprep.subr.mxu0 0.0
    %1252 = vmatpush1.xpose.msra.mxu0 0.0
    %1253 = vmatprep.subr.mxu0 0.0
    %1254 = vmatpush1.xpose.msra.mxu0 0.0
    %1255 = vmatprep.subr.mxu0 0.0
    %1256 = vmatpush1.xpose.msra.mxu0 0.0
    %1257 = vmatprep.subr.mxu0 0.0
    %1258 = vmatpush1.xpose.msra.mxu0 0.0
    %1259 = vmatprep.subr.mxu0 0.0
    %1260 = vmatpush1.xpose.msra.mxu0 0.0
    %1261 = vmatprep.subr.mxu0 0.0
    %1262 = vmatpush1.xpose.msra.mxu0 0.0
    %1263 = vmatprep.subr.mxu0 0.0
    %1264 = vmatpush1.xpose.msra.mxu0 0.0
    %1265 = vmatprep.subr.mxu0 0.0
    %1266 = vmatpush1.xpose.msra.mxu0 0.0
    %1267 = vmatprep.subr.mxu0 0.0
    %1268 = vmatpush1.xpose.msra.mxu0 0.0
    %1269 = vmatprep.subr.mxu0 0.0
    %1270 = vmatpush1.xpose.msra.mxu0 0.0
    %1271 = vmatprep.subr.mxu0 0.0
    %1272 = vmatpush1.xpose.msra.mxu0 0.0
    %1273 = vmatprep.subr.mxu0 0.0
    %1274 = vmatpush1.xpose.msra.mxu0 0.0
    %1275 = vmatprep.subr.mxu0 0.0
    %1276 = vmatpush1.xpose.msra.mxu0 0.0
    %1277 = vmatprep.subr.mxu0 0.0
    %1278 = vmatpush1.xpose.msra.mxu0 0.0
    %1279 = vmatprep.subr.mxu0 0.0
    %1280 = vmatpush1.xpose.msra.mxu0 0.0
    %1281 = vmatprep.subr.mxu0 0.0
    %1282 = vmatpush1.xpose.msra.mxu0 0.0
    %1283 = vmatprep.subr.mxu0 0.0
    %1284 = vmatpush1.xpose.msra.mxu0 0.0
    %1285 = vmatprep.subr.mxu0 0.0
    %1286 = vmatpush1.xpose.msra.mxu0 0.0
    %1287 = vmatprep.subr.mxu0 0.0
    %1288 = vmatpush1.xpose.msra.mxu0 0.0
    %1289 = vmatprep.subr.mxu0 0.0
    %1290 = vmatpush1.xpose.msra.mxu0 0.0
    %1291 = vmatprep.subr.mxu0 0.0
    %1292 = vmatpush1.xpose.msra.mxu0 0.0
    %1293 = vmatprep.subr.mxu0 0.0
    %1294 = vmatpush1.xpose.msra.mxu0 0.0
    %1295 = vmatprep.mubr.f32.mxu0 0.0
    %1296 = vmatmul.mubr.f32.gmra.mrb[0].mxu0 %v1227
    %v1297 = vpop.f32.mrb[0].mxu0
    %v1298 = vadd.f32 %v893, %v1297
    %v1299 = vpop.f32.mrb[0].mxu0
    %1300 = vdwg.mxu0
    %v1301 = vsel %vm216, %v1298, -inf
    %1302 = vmax.xlane.f32.xlu0 %v1301
    %v1303 = vpop.xlane.xlu0 %1302
    %v1304 = vsub.f32 %v1298, %v1303
    %v1305 = vmul.f32 %v1304, 1.442695
    %v1306 = vpow.pop %v1305
    %v1307 = vsel %vm216, %v1306, 0.0
    %1308 = vadd.xlane.f32.xlu0 %v1307
    %v1309 = vpop.xlane.xlu0 %1308
    %v1310 = vrcp.pop %v1309
    %v1311 = vmul.f32 %v1306, %v1310
    %1312 = vrot.lane.b32.xlu0 %v206, 48
    %v1313 = vpop.permute.xlu0 %1312
    %v1316 = vsel %vm216, %v1311, 0
    %1318 = vmatprep.subr.mxu0 0.0
    %1319 = vmatpush1.msra.mxu0 %v1313
    %1320 = vmatprep.subr.mxu0 0.0
    %1321 = vmatpush1.msra.mxu0 0.0
    %1322 = vmatprep.subr.mxu0 0.0
    %1323 = vmatpush1.msra.mxu0 0.0
    %1324 = vmatprep.subr.mxu0 0.0
    %1325 = vmatpush1.msra.mxu0 0.0
    %1326 = vmatprep.subr.mxu0 0.0
    %1327 = vmatpush1.msra.mxu0 0.0
    %1328 = vmatprep.subr.mxu0 0.0
    %1329 = vmatpush1.msra.mxu0 0.0
    %1330 = vmatprep.subr.mxu0 0.0
    %1331 = vmatpush1.msra.mxu0 0.0
    %1332 = vmatprep.subr.mxu0 0.0
    %1333 = vmatpush1.msra.mxu0 0.0
    %1334 = vmatprep.subr.mxu0 0.0
    %1335 = vmatpush1.msra.mxu0 0.0
    %1336 = vmatprep.subr.mxu0 0.0
    %1337 = vmatpush1.msra.mxu0 0.0
    %1338 = vmatprep.subr.mxu0 0.0
    %1339 = vmatpush1.msra.mxu0 0.0
    %1340 = vmatprep.subr.mxu0 0.0
    %1341 = vmatpush1.msra.mxu0 0.0
    %1342 = vmatprep.subr.mxu0 0.0
    %1343 = vmatpush1.msra.mxu0 0.0
    %1344 = vmatprep.subr.mxu0 0.0
    %1345 = vmatpush1.msra.mxu0 0.0
    %1346 = vmatprep.subr.mxu0 0.0
    %1347 = vmatpush1.msra.mxu0 0.0
    %1348 = vmatprep.subr.mxu0 0.0
    %1349 = vmatpush1.msra.mxu0 0.0
    %1350 = vmatprep.subr.mxu0 0.0
    %1351 = vmatpush1.msra.mxu0 0.0
    %1352 = vmatprep.subr.mxu0 0.0
    %1353 = vmatpush1.msra.mxu0 0.0
    %1354 = vmatprep.subr.mxu0 0.0
    %1355 = vmatpush1.msra.mxu0 0.0
    %1356 = vmatprep.subr.mxu0 0.0
    %1357 = vmatpush1.msra.mxu0 0.0
    %1358 = vmatprep.subr.mxu0 0.0
    %1359 = vmatpush1.msra.mxu0 0.0
    %1360 = vmatprep.subr.mxu0 0.0
    %1361 = vmatpush1.msra.mxu0 0.0
    %1362 = vmatprep.subr.mxu0 0.0
    %1363 = vmatpush1.msra.mxu0 0.0
    %1364 = vmatprep.subr.mxu0 0.0
    %1365 = vmatpush1.msra.mxu0 0.0
    %1366 = vmatprep.subr.mxu0 0.0
    %1367 = vmatpush1.msra.mxu0 0.0
    %1368 = vmatprep.subr.mxu0 0.0
    %1369 = vmatpush1.msra.mxu0 0.0
    %1370 = vmatprep.subr.mxu0 0.0
    %1371 = vmatpush1.msra.mxu0 0.0
    %1372 = vmatprep.subr.mxu0 0.0
    %1373 = vmatpush1.msra.mxu0 0.0
    %1374 = vmatprep.subr.mxu0 0.0
    %1375 = vmatpush1.msra.mxu0 0.0
    %1376 = vmatprep.subr.mxu0 0.0
    %1377 = vmatpush1.msra.mxu0 0.0
    %1378 = vmatprep.subr.mxu0 0.0
    %1379 = vmatpush1.msra.mxu0 0.0
    %1380 = vmatprep.subr.mxu0 0.0
    %1381 = vmatpush1.msra.mxu0 0.0
    %1382 = vmatprep.mubr.f32.mxu0 0.0
    %1383 = vmatmul.mubr.f32.gmra.mrb[0].mxu0 %v1316
    %v1384 = vpop.f32.mrb[0].mxu0
    %v1385 = vadd.f32 0.0, %v1384
    %v1386 = vpop.f32.mrb[0].mxu0
    %1387 = vdwg.mxu0
    %1388 = vrot.lane.b32.xlu0 %v206, 104
    %v1389 = vpop.permute.xlu0 %1388
    %1390 = vrot.lane.b32.xlu0 %v206, 72
    %v1391 = vpop.permute.xlu0 %1390
    %v1392 = vsel %vm216, %v1389, 0
    %v1394 = vsel %vm216, %v1391, 0
    %1396 = vmatprep.subr.mxu0 0.0
    %1397 = vmatpush1.xpose.msra.mxu0 %v1394
    %1398 = vmatprep.subr.mxu0 0.0
    %1399 = vmatpush1.xpose.msra.mxu0 0.0
    %1400 = vmatprep.subr.mxu0 0.0
    %1401 = vmatpush1.xpose.msra.mxu0 0.0
    %1402 = vmatprep.subr.mxu0 0.0
    %1403 = vmatpush1.xpose.msra.mxu0 0.0
    %1404 = vmatprep.subr.mxu0 0.0
    %1405 = vmatpush1.xpose.msra.mxu0 0.0
    %1406 = vmatprep.subr.mxu0 0.0
    %1407 = vmatpush1.xpose.msra.mxu0 0.0
    %1408 = vmatprep.subr.mxu0 0.0
    %1409 = vmatpush1.xpose.msra.mxu0 0.0
    %1410 = vmatprep.subr.mxu0 0.0
    %1411 = vmatpush1.xpose.msra.mxu0 0.0
    %1412 = vmatprep.subr.mxu0 0.0
    %1413 = vmatpush1.xpose.msra.mxu0 0.0
    %1414 = vmatprep.subr.mxu0 0.0
    %1415 = vmatpush1.xpose.msra.mxu0 0.0
    %1416 = vmatprep.subr.mxu0 0.0
    %1417 = vmatpush1.xpose.msra.mxu0 0.0
    %1418 = vmatprep.subr.mxu0 0.0
    %1419 = vmatpush1.xpose.msra.mxu0 0.0
    %1420 = vmatprep.subr.mxu0 0.0
    %1421 = vmatpush1.xpose.msra.mxu0 0.0
    %1422 = vmatprep.subr.mxu0 0.0
    %1423 = vmatpush1.xpose.msra.mxu0 0.0
    %1424 = vmatprep.subr.mxu0 0.0
    %1425 = vmatpush1.xpose.msra.mxu0 0.0
    %1426 = vmatprep.subr.mxu0 0.0
    %1427 = vmatpush1.xpose.msra.mxu0 0.0
    %1428 = vmatprep.subr.mxu0 0.0
    %1429 = vmatpush1.xpose.msra.mxu0 0.0
    %1430 = vmatprep.subr.mxu0 0.0
    %1431 = vmatpush1.xpose.msra.mxu0 0.0
    %1432 = vmatprep.subr.mxu0 0.0
    %1433 = vmatpush1.xpose.msra.mxu0 0.0
    %1434 = vmatprep.subr.mxu0 0.0
    %1435 = vmatpush1.xpose.msra.mxu0 0.0
    %1436 = vmatprep.subr.mxu0 0.0
    %1437 = vmatpush1.xpose.msra.mxu0 0.0
    %1438 = vmatprep.subr.mxu0 0.0
    %1439 = vmatpush1.xpose.msra.mxu0 0.0
    %1440 = vmatprep.subr.mxu0 0.0
    %1441 = vmatpush1.xpose.msra.mxu0 0.0
    %1442 = vmatprep.subr.mxu0 0.0
    %1443 = vmatpush1.xpose.msra.mxu0 0.0
    %1444 = vmatprep.subr.mxu0 0.0
    %1445 = vmatpush1.xpose.msra.mxu0 0.0
    %1446 = vmatprep.subr.mxu0 0.0
    %1447 = vmatpush1.xpose.msra.mxu0 0.0
    %1448 = vmatprep.subr.mxu0 0.0
    %1449 = vmatpush1.xpose.msra.mxu0 0.0
    %1450 = vmatprep.subr.mxu0 0.0
    %1451 = vmatpush1.xpose.msra.mxu0 0.0
    %1452 = vmatprep.subr.mxu0 0.0
    %1453 = vmatpush1.xpose.msra.mxu0 0.0
    %1454 = vmatprep.subr.mxu0 0.0
    %1455 = vmatpush1.xpose.msra.mxu0 0.0
    %1456 = vmatprep.subr.mxu0 0.0
    %1457 = vmatpush1.xpose.msra.mxu0 0.0
    %1458 = vmatprep.subr.mxu0 0.0
    %1459 = vmatpush1.xpose.msra.mxu0 0.0
    %1460 = vmatprep.mubr.f32.mxu0 0.0
    %1461 = vmatmul.mubr.f32.gmra.mrb[0].mxu0 %v1392
    %v1462 = vpop.f32.mrb[0].mxu0
    %v1463 = vadd.f32 %v893, %v1462
    %v1464 = vpop.f32.mrb[0].mxu0
    %1465 = vdwg.mxu0
    %v1466 = vsel %vm216, %v1463, -inf
    %1467 = vmax.xlane.f32.xlu0 %v1466
    %v1468 = vpop.xlane.xlu0 %1467
    %v1469 = vsub.f32 %v1463, %v1468
    %v1470 = vmul.f32 %v1469, 1.442695
    %v1471 = vpow.pop %v1470
    %v1472 = vsel %vm216, %v1471, 0.0
    %1473 = vadd.xlane.f32.xlu0 %v1472
    %v1474 = vpop.xlane.xlu0 %1473
    %v1475 = vrcp.pop %v1474
    %v1476 = vmul.f32 %v1471, %v1475
    %1477 = vrot.lane.b32.xlu0 %v206, 40
    %v1478 = vpop.permute.xlu0 %1477
    %v1481 = vsel %vm216, %v1476, 0
    %1483 = vmatprep.subr.mxu0 0.0
    %1484 = vmatpush1.msra.mxu0 %v1478
    %1485 = vmatprep.subr.mxu0 0.0
    %1486 = vmatpush1.msra.mxu0 0.0
    %1487 = vmatprep.subr.mxu0 0.0
    %1488 = vmatpush1.msra.mxu0 0.0
    %1489 = vmatprep.subr.mxu0 0.0
    %1490 = vmatpush1.msra.mxu0 0.0
    %1491 = vmatprep.subr.mxu0 0.0
    %1492 = vmatpush1.msra.mxu0 0.0
    %1493 = vmatprep.subr.mxu0 0.0
    %1494 = vmatpush1.msra.mxu0 0.0
    %1495 = vmatprep.subr.mxu0 0.0
    %1496 = vmatpush1.msra.mxu0 0.0
    %1497 = vmatprep.subr.mxu0 0.0
    %1498 = vmatpush1.msra.mxu0 0.0
    %1499 = vmatprep.subr.mxu0 0.0
    %1500 = vmatpush1.msra.mxu0 0.0
    %1501 = vmatprep.subr.mxu0 0.0
    %1502 = vmatpush1.msra.mxu0 0.0
    %1503 = vmatprep.subr.mxu0 0.0
    %1504 = vmatpush1.msra.mxu0 0.0
    %1505 = vmatprep.subr.mxu0 0.0
    %1506 = vmatpush1.msra.mxu0 0.0
    %1507 = vmatprep.subr.mxu0 0.0
    %1508 = vmatpush1.msra.mxu0 0.0
    %1509 = vmatprep.subr.mxu0 0.0
    %1510 = vmatpush1.msra.mxu0 0.0
    %1511 = vmatprep.subr.mxu0 0.0
    %1512 = vmatpush1.msra.mxu0 0.0
    %1513 = vmatprep.subr.mxu0 0.0
    %1514 = vmatpush1.msra.mxu0 0.0
    %1515 = vmatprep.subr.mxu0 0.0
    %1516 = vmatpush1.msra.mxu0 0.0
    %1517 = vmatprep.subr.mxu0 0.0
    %1518 = vmatpush1.msra.mxu0 0.0
    %1519 = vmatprep.subr.mxu0 0.0
    %1520 = vmatpush1.msra.mxu0 0.0
    %1521 = vmatprep.subr.mxu0 0.0
    %1522 = vmatpush1.msra.mxu0 0.0
    %1523 = vmatprep.subr.mxu0 0.0
    %1524 = vmatpush1.msra.mxu0 0.0
    %1525 = vmatprep.subr.mxu0 0.0
    %1526 = vmatpush1.msra.mxu0 0.0
    %1527 = vmatprep.subr.mxu0 0.0
    %1528 = vmatpush1.msra.mxu0 0.0
    %1529 = vmatprep.subr.mxu0 0.0
    %1530 = vmatpush1.msra.mxu0 0.0
    %1531 = vmatprep.subr.mxu0 0.0
    %1532 = vmatpush1.msra.mxu0 0.0
    %1533 = vmatprep.subr.mxu0 0.0
    %1534 = vmatpush1.msra.mxu0 0.0
    %1535 = vmatprep.subr.mxu0 0.0
    %1536 = vmatpush1.msra.mxu0 0.0
    %1537 = vmatprep.subr.mxu0 0.0
    %1538 = vmatpush1.msra.mxu0 0.0
    %1539 = vmatprep.subr.mxu0 0.0
    %1540 = vmatpush1.msra.mxu0 0.0
    %1541 = vmatprep.subr.mxu0 0.0
    %1542 = vmatpush1.msra.mxu0 0.0
    %1543 = vmatprep.subr.mxu0 0.0
    %1544 = vmatpush1.msra.mxu0 0.0
    %1545 = vmatprep.subr.mxu0 0.0
    %1546 = vmatpush1.msra.mxu0 0.0
    %1547 = vmatprep.mubr.f32.mxu0 0.0
    %1548 = vmatmul.mubr.f32.gmra.mrb[0].mxu0 %v1481
    %v1549 = vpop.f32.mrb[0].mxu0
    %v1550 = vadd.f32 0.0, %v1549
    %v1551 = vpop.f32.mrb[0].mxu0
    %1552 = vdwg.mxu0
    %1554 = vrot.lane.b32.xlu0 %v1220, 8
    %v1555 = vpop.permute.xlu0 %1554
    %1558 = vrot.lane.b32.xlu0 %v1385, 16
    %v1559 = vpop.permute.xlu0 %1558
    %1562 = vrot.lane.b32.xlu0 %v1550, 24
    %v1563 = vpop.permute.xlu0 %1562
    %v1565 = vsel %vm216, %v1055, %v1555
    %v1566 = vsel %vm886, %v1565, %v1559
    %v1567 = vsel %vm888, %v1566, %v1563
    %v1568 = vld [vmem:[%s6] sm:$0xff]
    %v1569 = vld [vmem:[%s6 + $0x8] sm:$0xff]
    %v1570 = vld [vmem:[%s6 + $0x10] sm:$0xff]
    %v1571 = vld [vmem:[%s6 + $0x18] sm:$0xff]
    %v1572 = vld [vmem:[%s7] sm:$0x1]
    %v1574 = vlaneseq
    %v1575 = vshrl.u32 %v1574, 7
    %v1576 = vsub.s32 0, %v1575
    %v1577 = vrot.slane %v1572, %v1576
    %v1580 = vsel %vm70, %v889, 0
    %v1583 = vsel %vm70, %v1567, 0
    %1585 = vmatprep.subr.mxu0 0.0
    %1586 = vmatpush1.msra.mxu0 %v1568
    %1587 = vmatprep.subr.mxu0 0.0
    %1588 = vmatpush1.msra.mxu0 %v1569
    %1589 = vmatprep.subr.mxu0 0.0
    %1590 = vmatpush1.msra.mxu0 %v1570
    %1591 = vmatprep.subr.mxu0 0.0
    %1592 = vmatpush1.msra.mxu0 %v1571
    %1593 = vmatprep.subr.mxu0 0.0
    %1594 = vmatpush1.msra.mxu0 0.0
    %1595 = vmatprep.subr.mxu0 0.0
    %1596 = vmatpush1.msra.mxu0 0.0
    %1597 = vmatprep.subr.mxu0 0.0
    %1598 = vmatpush1.msra.mxu0 0.0
    %1599 = vmatprep.subr.mxu0 0.0
    %1600 = vmatpush1.msra.mxu0 0.0
    %1601 = vmatprep.subr.mxu0 0.0
    %1602 = vmatpush1.msra.mxu0 0.0
    %1603 = vmatprep.subr.mxu0 0.0
    %1604 = vmatpush1.msra.mxu0 0.0
    %1605 = vmatprep.subr.mxu0 0.0
    %1606 = vmatpush1.msra.mxu0 0.0
    %1607 = vmatprep.subr.mxu0 0.0
    %1608 = vmatpush1.msra.mxu0 0.0
    %1609 = vmatprep.subr.mxu0 0.0
    %1610 = vmatpush1.msra.mxu0 0.0
    %1611 = vmatprep.subr.mxu0 0.0
    %1612 = vmatpush1.msra.mxu0 0.0
    %1613 = vmatprep.subr.mxu0 0.0
    %1614 = vmatpush1.msra.mxu0 0.0
    %1615 = vmatprep.subr.mxu0 0.0
    %1616 = vmatpush1.msra.mxu0 0.0
    %1617 = vmatprep.subr.mxu0 0.0
    %1618 = vmatpush1.msra.mxu0 0.0
    %1619 = vmatprep.subr.mxu0 0.0
    %1620 = vmatpush1.msra.mxu0 0.0
    %1621 = vmatprep.subr.mxu0 0.0
    %1622 = vmatpush1.msra.mxu0 0.0
    %1623 = vmatprep.subr.mxu0 0.0
    %1624 = vmatpush1.msra.mxu0 0.0
    %1625 = vmatprep.subr.mxu0 0.0
    %1626 = vmatpush1.msra.mxu0 0.0
    %1627 = vmatprep.subr.mxu0 0.0
    %1628 = vmatpush1.msra.mxu0 0.0
    %1629 = vmatprep.subr.mxu0 0.0
    %1630 = vmatpush1.msra.mxu0 0.0
    %1631 = vmatprep.subr.mxu0 0.0
    %1632 = vmatpush1.msra.mxu0 0.0
    %1633 = vmatprep.subr.mxu0 0.0
    %1634 = vmatpush1.msra.mxu0 0.0
    %1635 = vmatprep.subr.mxu0 0.0
    %1636 = vmatpush1.msra.mxu0 0.0
    %1637 = vmatprep.subr.mxu0 0.0
    %1638 = vmatpush1.msra.mxu0 0.0
    %1639 = vmatprep.subr.mxu0 0.0
    %1640 = vmatpush1.msra.mxu0 0.0
    %1641 = vmatprep.subr.mxu0 0.0
    %1642 = vmatpush1.msra.mxu0 0.0
    %1643 = vmatprep.subr.mxu0 0.0
    %1644 = vmatpush1.msra.mxu0 0.0
    %1645 = vmatprep.subr.mxu0 0.0
    %1646 = vmatpush1.msra.mxu0 0.0
    %1647 = vmatprep.subr.mxu0 0.0
    %1648 = vmatpush1.msra.mxu0 0.0
    %1649 = vmatprep.mubr.f32.mxu0 0.0
    %1650 = vmatmul.mubr.f32.gmra.mrb[0].mxu0 %v1580
    %v1651 = vpop.f32.mrb[0].mxu0
    %v1652 = vadd.f32 %v1577, %v1651
    %v1653 = vpop.f32.mrb[0].mxu0
    %1654 = vmatprep.mubr.f32.mxu0 0.0
    %1655 = vmatmul.mubr.f32.gmra.mrb[0].mxu0 %v1583
    %v1656 = vpop.f32.mrb[0].mxu0
    %v1657 = vadd.f32 %v1577, %v1656
    %v1658 = vpop.f32.mrb[0].mxu0
    %1659 = vdwg.mxu0
    %v1660 = vadd.f32 %v1652, %v112
    %v1661 = vadd.f32 %v1657, %v113
    %v1662 = vld [vmem:[%s8] sm:$0x1]
    %v1663 = vld [vmem:[%s9] sm:$0x1]
    %v1664 = vsel %vm70, %v1660, 0.0
    %1665 = vadd.xlane.f32.xlu0 %v1664
    %v1666 = vpop.xlane.xlu0 %1665
    %v1667 = vsel %vm70, %v1661, 0.0
    %1668 = vadd.xlane.f32.xlu0 %v1667
    %v1669 = vpop.xlane.xlu0 %1668
    %v1670 = vmul.f32 %v1666, %v77
    %v1671 = vmul.f32 %v1669, %v77
    %v1672 = vsub.f32 %v1660, %v1670
    %v1673 = vsub.f32 %v1661, %v1671
    %v1674 = vmul.f32 %v1672, %v1672
    %v1675 = vmul.f32 %v1673, %v1673
    %v1676 = vsel %vm70, %v1674, 0.0
    %1677 = vadd.xlane.f32.xlu0 %v1676
    %v1678 = vpop.xlane.xlu0 %1677
    %v1679 = vsel %vm70, %v1675, 0.0
    %1680 = vadd.xlane.f32.xlu0 %v1679
    %v1681 = vpop.xlane.xlu0 %1680
    %v1682 = vmul.f32 %v1678, %v77
    %v1683 = vmul.f32 %v1681, %v77
    %v1684 = vadd.f32 %v1682, 1e-12
    %v1685 = vadd.f32 %v1683, 1e-12
    %v1686 = vrsqrt.pop %v1684
    %v1687 = vrsqrt.pop %v1685
    %v1688 = vmul.f32 %v1672, %v1686
    %v1689 = vmul.f32 %v1673, %v1687
    %v1691 = vlaneseq
    %v1692 = vshrl.u32 %v1691, 7
    %v1693 = vsub.s32 0, %v1692
    %v1694 = vrot.slane %v1662, %v1693
    %v1696 = vmul.f32 %v1688, %v1694
    %v1697 = vmul.f32 %v1689, %v1694
    %v1699 = vlaneseq
    %v1700 = vshrl.u32 %v1699, 7
    %v1701 = vsub.s32 0, %v1700
    %v1702 = vrot.slane %v1663, %v1701
    %v1704 = vadd.f32 %v1696, %v1702
    %v1705 = vadd.f32 %v1697, %v1702
    %v1706 = vld [vmem:[%s10] sm:$0xff]
    %v1707 = vld [vmem:[%s10 + $0x8] sm:$0xff]
    %v1708 = vld [vmem:[%s10 + $0x10] sm:$0xff]
    %v1709 = vld [vmem:[%s10 + $0x18] sm:$0xff]
    %v1710 = vld [vmem:[%s11] sm:$0x1]
    %v1712 = vlaneseq
    %v1713 = vshrl.u32 %v1712, 7
    %v1714 = vsub.s32 0, %v1713
    %v1715 = vrot.slane %v1710, %v1714
    %v1718 = vsel %vm70, %v1704, 0
    %v1721 = vsel %vm70, %v1705, 0
    %1723 = vmatprep.subr.mxu0 0.0
    %1724 = vmatpush1.msra.mxu0 %v1706
    %1725 = vmatprep.subr.mxu0 0.0
    %1726 = vmatpush1.msra.mxu0 %v1707
    %1727 = vmatprep.subr.mxu0 0.0
    %1728 = vmatpush1.msra.mxu0 %v1708
    %1729 = vmatprep.subr.mxu0 0.0
    %1730 = vmatpush1.msra.mxu0 %v1709
    %1731 = vmatprep.subr.mxu0 0.0
    %1732 = vmatpush1.msra.mxu0 0.0
    %1733 = vmatprep.subr.mxu0 0.0
    %1734 = vmatpush1.msra.mxu0 0.0
    %1735 = vmatprep.subr.mxu0 0.0
    %1736 = vmatpush1.msra.mxu0 0.0
    %1737 = vmatprep.subr.mxu0 0.0
    %1738 = vmatpush1.msra.mxu0 0.0
    %1739 = vmatprep.subr.mxu0 0.0
    %1740 = vmatpush1.msra.mxu0 0.0
    %1741 = vmatprep.subr.mxu0 0.0
    %1742 = vmatpush1.msra.mxu0 0.0
    %1743 = vmatprep.subr.mxu0 0.0
    %1744 = vmatpush1.msra.mxu0 0.0
    %1745 = vmatprep.subr.mxu0 0.0
    %1746 = vmatpush1.msra.mxu0 0.0
    %1747 = vmatprep.subr.mxu0 0.0
    %1748 = vmatpush1.msra.mxu0 0.0
    %1749 = vmatprep.subr.mxu0 0.0
    %1750 = vmatpush1.msra.mxu0 0.0
    %1751 = vmatprep.subr.mxu0 0.0
    %1752 = vmatpush1.msra.mxu0 0.0
    %1753 = vmatprep.subr.mxu0 0.0
    %1754 = vmatpush1.msra.mxu0 0.0
    %1755 = vmatprep.subr.mxu0 0.0
    %1756 = vmatpush1.msra.mxu0 0.0
    %1757 = vmatprep.subr.mxu0 0.0
    %1758 = vmatpush1.msra.mxu0 0.0
    %1759 = vmatprep.subr.mxu0 0.0
    %1760 = vmatpush1.msra.mxu0 0.0
    %1761 = vmatprep.subr.mxu0 0.0
    %1762 = vmatpush1.msra.mxu0 0.0
    %1763 = vmatprep.subr.mxu0 0.0
    %1764 = vmatpush1.msra.mxu0 0.0
    %1765 = vmatprep.subr.mxu0 0.0
    %1766 = vmatpush1.msra.mxu0 0.0
    %1767 = vmatprep.subr.mxu0 0.0
    %1768 = vmatpush1.msra.mxu0 0.0
    %1769 = vmatprep.subr.mxu0 0.0
    %1770 = vmatpush1.msra.mxu0 0.0
    %1771 = vmatprep.subr.mxu0 0.0
    %1772 = vmatpush1.msra.mxu0 0.0
    %1773 = vmatprep.subr.mxu0 0.0
    %1774 = vmatpush1.msra.mxu0 0.0
    %1775 = vmatprep.subr.mxu0 0.0
    %1776 = vmatpush1.msra.mxu0 0.0
    %1777 = vmatprep.subr.mxu0 0.0
    %1778 = vmatpush1.msra.mxu0 0.0
    %1779 = vmatprep.subr.mxu0 0.0
    %1780 = vmatpush1.msra.mxu0 0.0
    %1781 = vmatprep.subr.mxu0 0.0
    %1782 = vmatpush1.msra.mxu0 0.0
    %1783 = vmatprep.subr.mxu0 0.0
    %1784 = vmatpush1.msra.mxu0 0.0
    %1785 = vmatprep.subr.mxu0 0.0
    %1786 = vmatpush1.msra.mxu0 0.0
    %1787 = vmatprep.mubr.f32.mxu0 0.0
    %1788 = vmatmul.mubr.f32.gmra.mrb[0].mxu0 %v1718
    %v1789 = vpop.f32.mrb[0].mxu0
    %v1790 = vadd.f32 %v1715, %v1789
    %v1791 = vpop.f32.mrb[0].mxu0
    %1792 = vmatprep.mubr.f32.mxu0 0.0
    %1793 = vmatmul.mubr.f32.gmra.mrb[0].mxu0 %v1721
    %v1794 = vpop.f32.mrb[0].mxu0
    %v1795 = vadd.f32 %v1715, %v1794
    %v1796 = vpop.f32.mrb[0].mxu0
    %1797 = vdwg.mxu0
    %v1798 = vmul.f32 %v1790, 0.5
    %v1799 = vmul.f32 %v1795, 0.5
    %v1800 = vmul.f32 %v1790, 0.044715
    %v1801 = vmul.f32 %v1795, 0.044715
    %v1802 = vmul.f32 %v1800, %v1790
    %v1803 = vmul.f32 %v1801, %v1795
    %v1804 = vmul.f32 %v1802, %v1790
    %v1805 = vmul.f32 %v1803, %v1795
    %v1806 = vadd.f32 %v1790, %v1804
    %v1807 = vadd.f32 %v1795, %v1805
    %v1808 = vmul.f32 %v1806, 0.7978846
    %v1809 = vmul.f32 %v1807, 0.7978846
    %v1810 = vtanh.pop %v1808
    %v1811 = vtanh.pop %v1809
    %v1812 = vadd.f32 %v1810, 1.0
    %v1813 = vadd.f32 %v1811, 1.0
    %v1814 = vmul.f32 %v1798, %v1812
    %v1815 = vmul.f32 %v1799, %v1813
    %v1816 = vld [vmem:[%s12] sm:$0xff]
    %v1817 = vld [vmem:[%s12 + $0x8] sm:$0xff]
    %v1818 = vld [vmem:[%s12 + $0x10] sm:$0xff]
    %v1819 = vld [vmem:[%s12 + $0x18] sm:$0xff]
    %v1820 = vld [vmem:[%s12 + $0x20] sm:$0xff]
    %v1821 = vld [vmem:[%s12 + $0x28] sm:$0xff]
    %v1822 = vld [vmem:[%s12 + $0x30] sm:$0xff]
    %v1823 = vld [vmem:[%s12 + $0x38] sm:$0xff]
    %v1824 = vld [vmem:[%s12 + $0x40] sm:$0xff]
    %v1825 = vld [vmem:[%s12 + $0x48] sm:$0xff]
    %v1826 = vld [vmem:[%s12 + $0x50] sm:$0xff]
    %v1827 = vld [vmem:[%s12 + $0x58] sm:$0xff]
    %v1828 = vld [vmem:[%s12 + $0x60] sm:$0xff]
    %v1829 = vld [vmem:[%s12 + $0x68] sm:$0xff]
    %v1830 = vld [vmem:[%s12 + $0x70] sm:$0xff]
    %v1831 = vld [vmem:[%s12 + $0x78] sm:$0xff]
    %v1832 = vld [vmem:[%s13] sm:$0x1]
    %v1834 = vlaneseq
    %v1835 = vshrl.u32 %v1834, 7
    %v1836 = vsub.s32 0, %v1835
    %v1837 = vrot.slane %v1832, %v1836
    %1839 = vmatprep.subr.mxu0 0.0
    %1840 = vmatpush1.msra.mxu0 %v1816
    %1841 = vmatprep.subr.mxu0 0.0
    %1842 = vmatpush1.msra.mxu0 %v1817
    %1843 = vmatprep.subr.mxu0 0.0
    %1844 = vmatpush1.msra.mxu0 %v1818
    %1845 = vmatprep.subr.mxu0 0.0
    %1846 = vmatpush1.msra.mxu0 %v1819
    %1847 = vmatprep.subr.mxu0 0.0
    %1848 = vmatpush1.msra.mxu0 %v1820
    %1849 = vmatprep.subr.mxu0 0.0
    %1850 = vmatpush1.msra.mxu0 %v1821
    %1851 = vmatprep.subr.mxu0 0.0
    %1852 = vmatpush1.msra.mxu0 %v1822
    %1853 = vmatprep.subr.mxu0 0.0
    %1854 = vmatpush1.msra.mxu0 %v1823
    %1855 = vmatprep.subr.mxu0 0.0
    %1856 = vmatpush1.msra.mxu0 %v1824
    %1857 = vmatprep.subr.mxu0 0.0
    %1858 = vmatpush1.msra.mxu0 %v1825
    %1859 = vmatprep.subr.mxu0 0.0
    %1860 = vmatpush1.msra.mxu0 %v1826
    %1861 = vmatprep.subr.mxu0 0.0
    %1862 = vmatpush1.msra.mxu0 %v1827
    %1863 = vmatprep.subr.mxu0 0.0
    %1864 = vmatpush1.msra.mxu0 %v1828
    %1865 = vmatprep.subr.mxu0 0.0
    %1866 = vmatpush1.msra.mxu0 %v1829
    %1867 = vmatprep.subr.mxu0 0.0
    %1868 = vmatpush1.msra.mxu0 %v1830
    %1869 = vmatprep.subr.mxu0 0.0
    %1870 = vmatpush1.msra.mxu0 %v1831
    %1871 = vmatprep.subr.mxu0 0.0
    %1872 = vmatpush1.msra.mxu0 0.0
    %1873 = vmatprep.subr.mxu0 0.0
    %1874 = vmatpush1.msra.mxu0 0.0
    %1875 = vmatprep.subr.mxu0 0.0
    %1876 = vmatpush1.msra.mxu0 0.0
    %1877 = vmatprep.subr.mxu0 0.0
    %1878 = vmatpush1.msra.mxu0 0.0
    %1879 = vmatprep.subr.mxu0 0.0
    %1880 = vmatpush1.msra.mxu0 0.0
    %1881 = vmatprep.subr.mxu0 0.0
    %1882 = vmatpush1.msra.mxu0 0.0
    %1883 = vmatprep.subr.mxu0 0.0
    %1884 = vmatpush1.msra.mxu0 0.0
    %1885 = vmatprep.subr.mxu0 0.0
    %1886 = vmatpush1.msra.mxu0 0.0
    %1887 = vmatprep.subr.mxu0 0.0
    %1888 = vmatpush1.msra.mxu0 0.0
    %1889 = vmatprep.subr.mxu0 0.0
    %1890 = vmatpush1.msra.mxu0 0.0
    %1891 = vmatprep.subr.mxu0 0.0
    %1892 = vmatpush1.msra.mxu0 0.0
    %1893 = vmatprep.subr.mxu0 0.0
    %1894 = vmatpush1.msra.mxu0 0.0
    %1895 = vmatprep.subr.mxu0 0.0
    %1896 = vmatpush1.msra.mxu0 0.0
    %1897 = vmatprep.subr.mxu0 0.0
    %1898 = vmatpush1.msra.mxu0 0.0
    %1899 = vmatprep.subr.mxu0 0.0
    %1900 = vmatpush1.msra.mxu0 0.0
    %1901 = vmatprep.subr.mxu0 0.0
    %1902 = vmatpush1.msra.mxu0 0.0
    %1903 = vmatprep.mubr.f32.mxu0 0.0
    %1904 = vmatmul.mubr.f32.gmra.mrb[0].mxu0 %v1814
    %v1905 = vpop.f32.mrb[0].mxu0
    %v1906 = vadd.f32 %v1837, %v1905
    %v1907 = vpop.f32.mrb[0].mxu0
    %1908 = vmatprep.mubr.f32.mxu0 0.0
    %1909 = vmatmul.mubr.f32.gmra.mrb[0].mxu0 %v1815
    %v1910 = vpop.f32.mrb[0].mxu0
    %v1911 = vadd.f32 %v1837, %v1910
    %v1912 = vpop.f32.mrb[0].mxu0
    %1913 = vdwg.mxu0
    %v1914 = vadd.f32 %v1906, %v1704
    %v1915 = vadd.f32 %v1911, %v1705
    %v1916 = vld [vmem:[%s14] sm:$0x1]
    %v1917 = vld [vmem:[%s15] sm:$0x1]
    %v1918 = vsel %vm70, %v1914, 0.0
    %1919 = vadd.xlane.f32.xlu0 %v1918
    %v1920 = vpop.xlane.xlu0 %1919
    %v1921 = vsel %vm70, %v1915, 0.0
    %1922 = vadd.xlane.f32.xlu0 %v1921
    %v1923 = vpop.xlane.xlu0 %1922
    %v1924 = vmul.f32 %v1920, %v77
    %v1925 = vmul.f32 %v1923, %v77
    %v1926 = vsub.f32 %v1914, %v1924
    %v1927 = vsub.f32 %v1915, %v1925
    %v1928 = vmul.f32 %v1926, %v1926
    %v1929 = vmul.f32 %v1927, %v1927
    %v1930 = vsel %vm70, %v1928, 0.0
    %1931 = vadd.xlane.f32.xlu0 %v1930
    %v1932 = vpop.xlane.xlu0 %1931
    %v1933 = vsel %vm70, %v1929, 0.0
    %1934 = vadd.xlane.f32.xlu0 %v1933
    %v1935 = vpop.xlane.xlu0 %1934
    %v1936 = vmul.f32 %v1932, %v77
    %v1937 = vmul.f32 %v1935, %v77
    %v1938 = vadd.f32 %v1936, 1e-12
    %v1939 = vadd.f32 %v1937, 1e-12
    %v1940 = vrsqrt.pop %v1938
    %v1941 = vrsqrt.pop %v1939
    %v1942 = vmul.f32 %v1926, %v1940
    %v1943 = vmul.f32 %v1927, %v1941
    %v1945 = vlaneseq
    %v1946 = vshrl.u32 %v1945, 7
    %v1947 = vsub.s32 0, %v1946
    %v1948 = vrot.slane %v1916, %v1947
    %v1950 = vmul.f32 %v1942, %v1948
    %v1951 = vmul.f32 %v1943, %v1948
    %v1953 = vlaneseq
    %v1954 = vshrl.u32 %v1953, 7
    %v1955 = vsub.s32 0, %v1954
    %v1956 = vrot.slane %v1917, %v1955
    %v1958 = vadd.f32 %v1950, %v1956
    %v1959 = vadd.f32 %v1951, %v1956
    %s1960 = scalar_lea.vmem %s4, 32
    %v1961 = vld [vmem:[%s1960] sm:$0xff]
    %v1962 = vld [vmem:[%s1960 + $0x8] sm:$0xff]
    %v1963 = vld [vmem:[%s1960 + $0x10] sm:$0xff]
    %v1964 = vld [vmem:[%s1960 + $0x18] sm:$0xff]
    %s1965 = scalar_lea.vmem %s5, 1
    %v1966 = vld [vmem:[%s1965] sm:$0x1]
    %v1968 = vlaneseq
    %v1969 = vshrl.u32 %v1968, 7
    %v1970 = vsub.s32 0, %v1969
    %v1971 = vrot.slane %v1966, %v1970
    %v1974 = vsel %vm70, %v1958, 0
    %v1977 = vsel %vm70, %v1959, 0
    %1979 = vmatprep.subr.mxu0 0.0
    %1980 = vmatpush1.msra.mxu0 %v1961
    %1981 = vmatprep.subr.mxu0 0.0
    %1982 = vmatpush1.msra.mxu0 %v1962
    %1983 = vmatprep.subr.mxu0 0.0
    %1984 = vmatpush1.msra.mxu0 %v1963
    %1985 = vmatprep.subr.mxu0 0.0
    %1986 = vmatpush1.msra.mxu0 %v1964
    %1987 = vmatprep.subr.mxu0 0.0
    %1988 = vmatpush1.msra.mxu0 0.0
    %1989 = vmatprep.subr.mxu0 0.0
    %1990 = vmatpush1.msra.mxu0 0.0
    %1991 = vmatprep.subr.mxu0 0.0
    %1992 = vmatpush1.msra.mxu0 0.0
    %1993 = vmatprep.subr.mxu0 0.0
    %1994 = vmatpush1.msra.mxu0 0.0
    %1995 = vmatprep.subr.mxu0 0.0
    %1996 = vmatpush1.msra.mxu0 0.0
    %1997 = vmatprep.subr.mxu0 0.0
    %1998 = vmatpush1.msra.mxu0 0.0
    %1999 = vmatprep.subr.mxu0 0.0
    %2000 = vmatpush1.msra.mxu0 0.0
    %2001 = vmatprep.subr.mxu0 0.0
    %2002 = vmatpush1.msra.mxu0 0.0
    %2003 = vmatprep.subr.mxu0 0.0
    %2004 = vmatpush1.msra.mxu0 0.0
    %2005 = vmatprep.subr.mxu0 0.0
    %2006 = vmatpush1.msra.mxu0 0.0
    %2007 = vmatprep.subr.mxu0 0.0
    %2008 = vmatpush1.msra.mxu0 0.0
    %2009 = vmatprep.subr.mxu0 0.0
    %2010 = vmatpush1.msra.mxu0 0.0
    %2011 = vmatprep.subr.mxu0 0.0
    %2012 = vmatpush1.msra.mxu0 0.0
    %2013 = vmatprep.subr.mxu0 0.0
    %2014 = vmatpush1.msra.mxu0 0.0
    %2015 = vmatprep.subr.mxu0 0.0
    %2016 = vmatpush1.msra.mxu0 0.0
    %2017 = vmatprep.subr.mxu0 0.0
    %2018 = vmatpush1.msra.mxu0 0.0
    %2019 = vmatprep.subr.mxu0 0.0
    %2020 = vmatpush1.msra.mxu0 0.0
    %2021 = vmatprep.subr.mxu0 0.0
    %2022 = vmatpush1.msra.mxu0 0.0
    %2023 = vmatprep.subr.mxu0 0.0
    %2024 = vmatpush1.msra.mxu0 0.0
    %2025 = vmatprep.subr.mxu0 0.0
    %2026 = vmatpush1.msra.mxu0 0.0
    %2027 = vmatprep.subr.mxu0 0.0
    %2028 = vmatpush1.msra.mxu0 0.0
    %2029 = vmatprep.subr.mxu0 0.0
    %2030 = vmatpush1.msra.mxu0 0.0
    %2031 = vmatprep.subr.mxu0 0.0
    %2032 = vmatpush1.msra.mxu0 0.0
    %2033 = vmatprep.subr.mxu0 0.0
    %2034 = vmatpush1.msra.mxu0 0.0
    %2035 = vmatprep.subr.mxu0 0.0
    %2036 = vmatpush1.msra.mxu0 0.0
    %2037 = vmatprep.subr.mxu0 0.0
    %2038 = vmatpush1.msra.mxu0 0.0
    %2039 = vmatprep.subr.mxu0 0.0
    %2040 = vmatpush1.msra.mxu0 0.0
    %2041 = vmatprep.subr.mxu0 0.0
    %2042 = vmatpush1.msra.mxu0 0.0
    %2043 = vmatprep.mubr.f32.mxu0 0.0
    %2044 = vmatmul.mubr.f32.gmra.mrb[0].mxu0 %v1974
    %v2045 = vpop.f32.mrb[0].mxu0
    %v2046 = vadd.f32 %v1971, %v2045
    %v2047 = vpop.f32.mrb[0].mxu0
    %2048 = vmatprep.mubr.f32.mxu0 0.0
    %2049 = vmatmul.mubr.f32.gmra.mrb[0].mxu0 %v1977
    %v2050 = vpop.f32.mrb[0].mxu0
    %v2051 = vadd.f32 %v1971, %v2050
    %v2052 = vpop.f32.mrb[0].mxu0
    %2053 = vdwg.mxu0
    %2055 = vrot.lane.b32.xlu0 %v2046, 96
    %v2056 = vpop.permute.xlu0 %2055
    %v2057 = vsel %vm216, %v2046, 0
    %v2059 = vsel %vm216, %v2056, 0
    %2061 = vmatprep.subr.mxu0 0.0
    %2062 = vmatpush1.xpose.msra.mxu0 %v2059
    %2063 = vmatprep.subr.mxu0 0.0
    %2064 = vmatpush1.xpose.msra.mxu0 0.0
    %2065 = vmatprep.subr.mxu0 0.0
    %2066 = vmatpush1.xpose.msra.mxu0 0.0
    %2067 = vmatprep.subr.mxu0 0.0
    %2068 = vmatpush1.xpose.msra.mxu0 0.0
    %2069 = vmatprep.subr.mxu0 0.0
    %2070 = vmatpush1.xpose.msra.mxu0 0.0
    %2071 = vmatprep.subr.mxu0 0.0
    %2072 = vmatpush1.xpose.msra.mxu0 0.0
    %2073 = vmatprep.subr.mxu0 0.0
    %2074 = vmatpush1.xpose.msra.mxu0 0.0
    %2075 = vmatprep.subr.mxu0 0.0
    %2076 = vmatpush1.xpose.msra.mxu0 0.0
    %2077 = vmatprep.subr.mxu0 0.0
    %2078 = vmatpush1.xpose.msra.mxu0 0.0
    %2079 = vmatprep.subr.mxu0 0.0
    %2080 = vmatpush1.xpose.msra.mxu0 0.0
    %2081 = vmatprep.subr.mxu0 0.0
    %2082 = vmatpush1.xpose.msra.mxu0 0.0
    %2083 = vmatprep.subr.mxu0 0.0
    %2084 = vmatpush1.xpose.msra.mxu0 0.0
    %2085 = vmatprep.subr.mxu0 0.0
    %2086 = vmatpush1.xpose.msra.mxu0 0.0
    %2087 = vmatprep.subr.mxu0 0.0
    %2088 = vmatpush1.xpose.msra.mxu0 0.0
    %2089 = vmatprep.subr.mxu0 0.0
    %2090 = vmatpush1.xpose.msra.mxu0 0.0
    %2091 = vmatprep.subr.mxu0 0.0
    %2092 = vmatpush1.xpose.msra.mxu0 0.0
    %2093 = vmatprep.subr.mxu0 0.0
    %2094 = vmatpush1.xpose.msra.mxu0 0.0
    %2095 = vmatprep.subr.mxu0 0.0
    %2096 = vmatpush1.xpose.msra.mxu0 0.0
    %2097 = vmatprep.subr.mxu0 0.0
    %2098 = vmatpush1.xpose.msra.mxu0 0.0
    %2099 = vmatprep.subr.mxu0 0.0
    %2100 = vmatpush1.xpose.msra.mxu0 0.0
    %2101 = vmatprep.subr.mxu0 0.0
    %2102 = vmatpush1.xpose.msra.mxu0 0.0
    %2103 = vmatprep.subr.mxu0 0.0
    %2104 = vmatpush1.xpose.msra.mxu0 0.0
    %2105 = vmatprep.subr.mxu0 0.0
    %2106 = vmatpush1.xpose.msra.mxu0 0.0
    %2107 = vmatprep.subr.mxu0 0.0
    %2108 = vmatpush1.xpose.msra.mxu0 0.0
    %2109 = vmatprep.subr.mxu0 0.0
    %2110 = vmatpush1.xpose.msra.mxu0 0.0
    %2111 = vmatprep.subr.mxu0 0.0
    %2112 = vmatpush1.xpose.msra.mxu0 0.0
    %2113 = vmatprep.subr.mxu0 0.0
    %2114 = vmatpush1.xpose.msra.mxu0 0.0
    %2115 = vmatprep.subr.mxu0 0.0
    %2116 = vmatpush1.xpose.msra.mxu0 0.0
    %2117 = vmatprep.subr.mxu0 0.0
    %2118 = vmatpush1.xpose.msra.mxu0 0.0
    %2119 = vmatprep.subr.mxu0 0.0
    %2120 = vmatpush1.xpose.msra.mxu0 0.0
    %2121 = vmatprep.subr.mxu0 0.0
    %2122 = vmatpush1.xpose.msra.mxu0 0.0
    %2123 = vmatprep.subr.mxu0 0.0
    %2124 = vmatpush1.xpose.msra.mxu0 0.0
    %2125 = vmatprep.mubr.f32.mxu0 0.0
    %2126 = vmatmul.mubr.f32.gmra.mrb[0].mxu0 %v2057
    %v2127 = vpop.f32.mrb[0].mxu0
    %v2128 = vadd.f32 %v212, %v2127
    %v2129 = vpop.f32.mrb[0].mxu0
    %2130 = vdwg.mxu0
    %v2131 = vsel %vm216, %v2128, -inf
    %2132 = vmax.xlane.f32.xlu0 %v2131
    %v2133 = vpop.xlane.xlu0 %2132
    %v2134 = vsub.f32 %v2128, %v2133
    %v2135 = vmul.f32 %v2134, 1.442695
    %v2136 = vpow.pop %v2135
    %v2137 = vsel %vm216, %v2136, 0.0
    %2138 = vadd.xlane.f32.xlu0 %v2137
    %v2139 = vpop.xlane.xlu0 %2138
    %v2140 = vrcp.pop %v2139
    %v2141 = vmul.f32 %v2136, %v2140
    %2142 = vrot.lane.b32.xlu0 %v2046, 64
    %v2143 = vpop.permute.xlu0 %2142
    %v2146 = vsel %vm216, %v2141, 0
    %2148 = vmatprep.subr.mxu0 0.0
    %2149 = vmatpush1.msra.mxu0 %v2143
    %2150 = vmatprep.subr.mxu0 0.0
    %2151 = vmatpush1.msra.mxu0 0.0
    %2152 = vmatprep.subr.mxu0 0.0
    %2153 = vmatpush1.msra.mxu0 0.0
    %2154 = vmatprep.subr.mxu0 0.0
    %2155 = vmatpush1.msra.mxu0 0.0
    %2156 = vmatprep.subr.mxu0 0.0
    %2157 = vmatpush1.msra.mxu0 0.0
    %2158 = vmatprep.subr.mxu0 0.0
    %2159 = vmatpush1.msra.mxu0 0.0
    %2160 = vmatprep.subr.mxu0 0.0
    %2161 = vmatpush1.msra.mxu0 0.0
    %2162 = vmatprep.subr.mxu0 0.0
    %2163 = vmatpush1.msra.mxu0 0.0
    %2164 = vmatprep.subr.mxu0 0.0
    %2165 = vmatpush1.msra.mxu0 0.0
    %2166 = vmatprep.subr.mxu0 0.0
    %2167 = vmatpush1.msra.mxu0 0.0
    %2168 = vmatprep.subr.mxu0 0.0
    %2169 = vmatpush1.msra.mxu0 0.0
    %2170 = vmatprep.subr.mxu0 0.0
    %2171 = vmatpush1.msra.mxu0 0.0
    %2172 = vmatprep.subr.mxu0 0.0
    %2173 = vmatpush1.msra.mxu0 0.0
    %2174 = vmatprep.subr.mxu0 0.0
    %2175 = vmatpush1.msra.mxu0 0.0
    %2176 = vmatprep.subr.mxu0 0.0
    %2177 = vmatpush1.msra.mxu0 0.0
    %2178 = vmatprep.subr.mxu0 0.0
    %2179 = vmatpush1.msra.mxu0 0.0
    %2180 = vmatprep.subr.mxu0 0.0
    %2181 = vmatpush1.msra.mxu0 0.0
    %2182 = vmatprep.subr.mxu0 0.0
    %2183 = vmatpush1.msra.mxu0 0.0
    %2184 = vmatprep.subr.mxu0 0.0
    %2185 = vmatpush1.msra.mxu0 0.0
    %2186 = vmatprep.subr.mxu0 0.0
    %2187 = vmatpush1.msra.mxu0 0.0
    %2188 = vmatprep.subr.mxu0 0.0
    %2189 = vmatpush1.msra.mxu0 0.0
    %2190 = vmatprep.subr.mxu0 0.0
    %2191 = vmatpush1.msra.mxu0 0.0
    %2192 = vmatprep.subr.mxu0 0.0
    %2193 = vmatpush1.msra.mxu0 0.0
    %2194 = vmatprep.subr.mxu0 0.0
    %2195 = vmatpush1.msra.mxu0 0.0
    %2196 = vmatprep.subr.mxu0 0.0
    %2197 = vmatpush1.msra.mxu0 0.0
    %2198 = vmatprep.subr.mxu0 0.0
    %2199 = vmatpush1.msra.mxu0 0.0
    %2200 = vmatprep.subr.mxu0 0.0
    %2201 = vmatpush1.msra.mxu0 0.0
    %2202 = vmatprep.subr.mxu0 0.0
    %2203 = vmatpush1.msra.mxu0 0.0
    %2204 = vmatprep.subr.mxu0 0.0
    %2205 = vmatpush1.msra.mxu0 0.0
    %2206 = vmatprep.subr.mxu0 0.0
    %2207 = vmatpush1.msra.mxu0 0.0
    %2208 = vmatprep.subr.mxu0 0.0
    %2209 = vmatpush1.msra.mxu0 0.0
    %2210 = vmatprep.subr.mxu0 0.0
    %2211 = vmatpush1.msra.mxu0 0.0
    %2212 = vmatprep.mubr.f32.mxu0 0.0
    %2213 = vmatmul.mubr.f32.gmra.mrb[0].mxu0 %v2146
    %v2214 = vpop.f32.mrb[0].mxu0
    %v2215 = vadd.f32 0.0, %v2214
    %v2216 = vpop.f32.mrb[0].mxu0
    %2217 = vdwg.mxu0
    %2218 = vrot.lane.b32.xlu0 %v2046, 120
    %v2219 = vpop.permute.xlu0 %2218
    %2220 = vrot.lane.b32.xlu0 %v2046, 88
    %v2221 = vpop.permute.xlu0 %2220
    %v2222 = vsel %vm216, %v2219, 0
    %v2224 = vsel %vm216, %v2221, 0
    %2226 = vmatprep.subr.mxu0 0.0
    %2227 = vmatpush1.xpose.msra.mxu0 %v2224
    %2228 = vmatprep.subr.mxu0 0.0
    %2229 = vmatpush1.xpose.msra.mxu0 0.0
    %2230 = vmatprep.subr.mxu0 0.0
    %2231 = vmatpush1.xpose.msra.mxu0 0.0
    %2232 = vmatprep.subr.mxu0 0.0
    %2233 = vmatpush1.xpose.msra.mxu0 0.0
    %2234 = vmatprep.subr.mxu0 0.0
    %2235 = vmatpush1.xpose.msra.mxu0 0.0
    %2236 = vmatprep.subr.mxu0 0.0
    %2237 = vmatpush1.xpose.msra.mxu0 0.0
    %2238 = vmatprep.subr.mxu0 0.0
    %2239 = vmatpush1.xpose.msra.mxu0 0.0
    %2240 = vmatprep.subr.mxu0 0.0
    %2241 = vmatpush1.xpose.msra.mxu0 0.0
    %2242 = vmatprep.subr.mxu0 0.0
    %2243 = vmatpush1.xpose.msra.mxu0 0.0
    %2244 = vmatprep.subr.mxu0 0.0
    %2245 = vmatpush1.xpose.msra.mxu0 0.0
    %2246 = vmatprep.subr.mxu0 0.0
    %2247 = vmatpush1.xpose.msra.mxu0 0.0
    %2248 = vmatprep.subr.mxu0 0.0
    %2249 = vmatpush1.xpose.msra.mxu0 0.0
    %2250 = vmatprep.subr.mxu0 0.0
    %2251 = vmatpush1.xpose.msra.mxu0 0.0
    %2252 = vmatprep.subr.mxu0 0.0
    %2253 = vmatpush1.xpose.msra.mxu0 0.0
    %2254 = vmatprep.subr.mxu0 0.0
    %2255 = vmatpush1.xpose.msra.mxu0 0.0
    %2256 = vmatprep.subr.mxu0 0.0
    %2257 = vmatpush1.xpose.msra.mxu0 0.0
    %2258 = vmatprep.subr.mxu0 0.0
    %2259 = vmatpush1.xpose.msra.mxu0 0.0
    %2260 = vmatprep.subr.mxu0 0.0
    %2261 = vmatpush1.xpose.msra.mxu0 0.0
    %2262 = vmatprep.subr.mxu0 0.0
    %2263 = vmatpush1.xpose.msra.mxu0 0.0
    %2264 = vmatprep.subr.mxu0 0.0
    %2265 = vmatpush1.xpose.msra.mxu0 0.0
    %2266 = vmatprep.subr.mxu0 0.0
    %2267 = vmatpush1.xpose.msra.mxu0 0.0
    %2268 = vmatprep.subr.mxu0 0.0
    %2269 = vmatpush1.xpose.msra.mxu0 0.0
    %2270 = vmatprep.subr.mxu0 0.0
    %2271 = vmatpush1.xpose.msra.mxu0 0.0
    %2272 = vmatprep.subr.mxu0 0.0
    %2273 = vmatpush1.xpose.msra.mxu0 0.0
    %2274 = vmatprep.subr.mxu0 0.0
    %2275 = vmatpush1.xpose.msra.mxu0 0.0
    %2276 = vmatprep.subr.mxu0 0.0
    %2277 = vmatpush1.xpose.msra.mxu0 0.0
    %2278 = vmatprep.subr.mxu0 0.0
    %2279 = vmatpush1.xpose.msra.mxu0 0.0
    %2280 = vmatprep.subr.mxu0 0.0
    %2281 = vmatpush1.xpose.msra.mxu0 0.0
    %2282 = vmatprep.subr.mxu0 0.0
    %2283 = vmatpush1.xpose.msra.mxu0 0.0
    %2284 = vmatprep.subr.mxu0 0.0
    %2285 = vmatpush1.xpose.msra.mxu0 0.0
    %2286 = vmatprep.subr.mxu0 0.0
    %2287 = vmatpush1.xpose.msra.mxu0 0.0
    %2288 = vmatprep.subr.mxu0 0.0
    %2289 = vmatpush1.xpose.msra.mxu0 0.0
    %2290 = vmatprep.mubr.f32.mxu0 0.0
    %2291 = vmatmul.mubr.f32.gmra.mrb[0].mxu0 %v2222
    %v2292 = vpop.f32.mrb[0].mxu0
    %v2293 = vadd.f32 %v212, %v2292
    %v2294 = vpop.f32.mrb[0].mxu0
    %2295 = vdwg.mxu0
    %v2296 = vsel %vm216, %v2293, -inf
    %2297 = vmax.xlane.f32.xlu0 %v2296
    %v2298 = vpop.xlane.xlu0 %2297
    %v2299 = vsub.f32 %v2293, %v2298
    %v2300 = vmul.f32 %v2299, 1.442695
    %v2301 = vpow.pop %v2300
    %v2302 = vsel %vm216, %v2301, 0.0
    %2303 = vadd.xlane.f32.xlu0 %v2302
    %v2304 = vpop.xlane.xlu0 %2303
    %v2305 = vrcp.pop %v2304
    %v2306 = vmul.f32 %v2301, %v2305
    %2307 = vrot.lane.b32.xlu0 %v2046, 56
    %v2308 = vpop.permute.xlu0 %2307
    %v2311 = vsel %vm216, %v2306, 0
    %2313 = vmatprep.subr.mxu0 0.0
    %2314 = vmatpush1.msra.mxu0 %v2308
    %2315 = vmatprep.subr.mxu0 0.0
    %2316 = vmatpush1.msra.mxu0 0.0
    %2317 = vmatprep.subr.mxu0 0.0
    %2318 = vmatpush1.msra.mxu0 0.0
    %2319 = vmatprep.subr.mxu0 0.0
    %2320 = vmatpush1.msra.mxu0 0.0
    %2321 = vmatprep.subr.mxu0 0.0
    %2322 = vmatpush1.msra.mxu0 0.0
    %2323 = vmatprep.subr.mxu0 0.0
    %2324 = vmatpush1.msra.mxu0 0.0
    %2325 = vmatprep.subr.mxu0 0.0
    %2326 = vmatpush1.msra.mxu0 0.0
    %2327 = vmatprep.subr.mxu0 0.0
    %2328 = vmatpush1.msra.mxu0 0.0
    %2329 = vmatprep.subr.mxu0 0.0
    %2330 = vmatpush1.msra.mxu0 0.0
    %2331 = vmatprep.subr.mxu0 0.0
    %2332 = vmatpush1.msra.mxu0 0.0
    %2333 = vmatprep.subr.mxu0 0.0
    %2334 = vmatpush1.msra.mxu0 0.0
    %2335 = vmatprep.subr.mxu0 0.0
    %2336 = vmatpush1.msra.mxu0 0.0
    %2337 = vmatprep.subr.mxu0 0.0
    %2338 = vmatpush1.msra.mxu0 0.0
    %2339 = vmatprep.subr.mxu0 0.0
    %2340 = vmatpush1.msra.mxu0 0.0
    %2341 = vmatprep.subr.mxu0 0.0
    %2342 = vmatpush1.msra.mxu0 0.0
    %2343 = vmatprep.subr.mxu0 0.0
    %2344 = vmatpush1.msra.mxu0 0.0
    %2345 = vmatprep.subr.mxu0 0.0
    %2346 = vmatpush1.msra.mxu0 0.0
    %2347 = vmatprep.subr.mxu0 0.0
    %2348 = vmatpush1.msra.mxu0 0.0
    %2349 = vmatprep.subr.mxu0 0.0
    %2350 = vmatpush1.msra.mxu0 0.0
    %2351 = vmatprep.subr.mxu0 0.0
    %2352 = vmatpush1.msra.mxu0 0.0
    %2353 = vmatprep.subr.mxu0 0.0
    %2354 = vmatpush1.msra.mxu0 0.0
    %2355 = vmatprep.subr.mxu0 0.0
    %2356 = vmatpush1.msra.mxu0 0.0
    %2357 = vmatprep.subr.mxu0 0.0
    %2358 = vmatpush1.msra.mxu0 0.0
    %2359 = vmatprep.subr.mxu0 0.0
    %2360 = vmatpush1.msra.mxu0 0.0
    %2361 = vmatprep.subr.mxu0 0.0
    %2362 = vmatpush1.msra.mxu0 0.0
    %2363 = vmatprep.subr.mxu0 0.0
    %2364 = vmatpush1.msra.mxu0 0.0
    %2365 = vmatprep.subr.mxu0 0.0
    %2366 = vmatpush1.msra.mxu0 0.0
    %2367 = vmatprep.subr.mxu0 0.0
    %2368 = vmatpush1.msra.mxu0 0.0
    %2369 = vmatprep.subr.mxu0 0.0
    %2370 = vmatpush1.msra.mxu0 0.0
    %2371 = vmatprep.subr.mxu0 0.0
    %2372 = vmatpush1.msra.mxu0 0.0
    %2373 = vmatprep.subr.mxu0 0.0
    %2374 = vmatpush1.msra.mxu0 0.0
    %2375 = vmatprep.subr.mxu0 0.0
    %2376 = vmatpush1.msra.mxu0 0.0
    %2377 = vmatprep.mubr.f32.mxu0 0.0
    %2378 = vmatmul.mubr.f32.gmra.mrb[0].mxu0 %v2311
    %v2379 = vpop.f32.mrb[0].mxu0
    %v2380 = vadd.f32 0.0, %v2379
    %v2381 = vpop.f32.mrb[0].mxu0
    %2382 = vdwg.mxu0
    %2383 = vrot.lane.b32.xlu0 %v2046, 112
    %v2384 = vpop.permute.xlu0 %2383
    %2385 = vrot.lane.b32.xlu0 %v2046, 80
    %v2386 = vpop.permute.xlu0 %2385
    %v2387 = vsel %vm216, %v2384, 0
    %v2389 = vsel %vm216, %v2386, 0
    %2391 = vmatprep.subr.mxu0 0.0
    %2392 = vmatpush1.xpose.msra.mxu0 %v2389
    %2393 = vmatprep.subr.mxu0 0.0
    %2394 = vmatpush1.xpose.msra.mxu0 0.0
    %2395 = vmatprep.subr.mxu0 0.0
    %2396 = vmatpush1.xpose.msra.mxu0 0.0
    %2397 = vmatprep.subr.mxu0 0.0
    %2398 = vmatpush1.xpose.msra.mxu0 0.0
    %2399 = vmatprep.subr.mxu0 0.0
    %2400 = vmatpush1.xpose.msra.mxu0 0.0
    %2401 = vmatprep.subr.mxu0 0.0
    %2402 = vmatpush1.xpose.msra.mxu0 0.0
    %2403 = vmatprep.subr.mxu0 0.0
    %2404 = vmatpush1.xpose.msra.mxu0 0.0
    %2405 = vmatprep.subr.mxu0 0.0
    %2406 = vmatpush1.xpose.msra.mxu0 0.0
    %2407 = vmatprep.subr.mxu0 0.0
    %2408 = vmatpush1.xpose.msra.mxu0 0.0
    %2409 = vmatprep.subr.mxu0 0.0
    %2410 = vmatpush1.xpose.msra.mxu0 0.0
    %2411 = vmatprep.subr.mxu0 0.0
    %2412 = vmatpush1.xpose.msra.mxu0 0.0
    %2413 = vmatprep.subr.mxu0 0.0
    %2414 = vmatpush1.xpose.msra.mxu0 0.0
    %2415 = vmatprep.subr.mxu0 0.0
    %2416 = vmatpush1.xpose.msra.mxu0 0.0
    %2417 = vmatprep.subr.mxu0 0.0
    %2418 = vmatpush1.xpose.msra.mxu0 0.0
    %2419 = vmatprep.subr.mxu0 0.0
    %2420 = vmatpush1.xpose.msra.mxu0 0.0
    %2421 = vmatprep.subr.mxu0 0.0
    %2422 = vmatpush1.xpose.msra.mxu0 0.0
    %2423 = vmatprep.subr.mxu0 0.0
    %2424 = vmatpush1.xpose.msra.mxu0 0.0
    %2425 = vmatprep.subr.mxu0 0.0
    %2426 = vmatpush1.xpose.msra.mxu0 0.0
    %2427 = vmatprep.subr.mxu0 0.0
    %2428 = vmatpush1.xpose.msra.mxu0 0.0
    %2429 = vmatprep.subr.mxu0 0.0
    %2430 = vmatpush1.xpose.msra.mxu0 0.0
    %2431 = vmatprep.subr.mxu0 0.0
    %2432 = vmatpush1.xpose.msra.mxu0 0.0
    %2433 = vmatprep.subr.mxu0 0.0
    %2434 = vmatpush1.xpose.msra.mxu0 0.0
    %2435 = vmatprep.subr.mxu0 0.0
    %2436 = vmatpush1.xpose.msra.mxu0 0.0
    %2437 = vmatprep.subr.mxu0 0.0
    %2438 = vmatpush1.xpose.msra.mxu0 0.0
    %2439 = vmatprep.subr.mxu0 0.0
    %2440 = vmatpush1.xpose.msra.mxu0 0.0
    %2441 = vmatprep.subr.mxu0 0.0
    %2442 = vmatpush1.xpose.msra.mxu0 0.0
    %2443 = vmatprep.subr.mxu0 0.0
    %2444 = vmatpush1.xpose.msra.mxu0 0.0
    %2445 = vmatprep.subr.mxu0 0.0
    %2446 = vmatpush1.xpose.msra.mxu0 0.0
    %2447 = vmatprep.subr.mxu0 0.0
    %2448 = vmatpush1.xpose.msra.mxu0 0.0
    %2449 = vmatprep.subr.mxu0 0.0
    %2450 = vmatpush1.xpose.msra.mxu0 0.0
    %2451 = vmatprep.subr.mxu0 0.0
    %2452 = vmatpush1.xpose.msra.mxu0 0.0
    %2453 = vmatprep.subr.mxu0 0.0
    %2454 = vmatpush1.xpose.msra.mxu0 0.0
    %2455 = vmatprep.mubr.f32.mxu0 0.0
    %2456 = vmatmul.mubr.f32.gmra.mrb[0].mxu0 %v2387
    %v2457 = vpop.f32.mrb[0].mxu0
    %v2458 = vadd.f32 %v212, %v2457
    %v2459 = vpop.f32.mrb[0].mxu0
    %2460 = vdwg.mxu0
    %v2461 = vsel %vm216, %v2458, -inf
    %2462 = vmax.xlane.f32.xlu0 %v2461
    %v2463 = vpop.xlane.xlu0 %2462
    %v2464 = vsub.f32 %v2458, %v2463
    %v2465 = vmul.f32 %v2464, 1.442695
    %v2466 = vpow.pop %v2465
    %v2467 = vsel %vm216, %v2466, 0.0
    %2468 = vadd.xlane.f32.xlu0 %v2467
    %v2469 = vpop.xlane.xlu0 %2468
    %v2470 = vrcp.pop %v2469
    %v2471 = vmul.f32 %v2466, %v2470
    %2472 = vrot.lane.b32.xlu0 %v2046, 48
    %v2473 = vpop.permute.xlu0 %2472
    %v2476 = vsel %vm216, %v2471, 0
    %2478 = vmatprep.subr.mxu0 0.0
    %2479 = vmatpush1.msra.mxu0 %v2473
    %2480 = vmatprep.subr.mxu0 0.0
    %2481 = vmatpush1.msra.mxu0 0.0
    %2482 = vmatprep.subr.mxu0 0.0
    %2483 = vmatpush1.msra.mxu0 0.0
    %2484 = vmatprep.subr.mxu0 0.0
    %2485 = vmatpush1.msra.mxu0 0.0
    %2486 = vmatprep.subr.mxu0 0.0
    %2487 = vmatpush1.msra.mxu0 0.0
    %2488 = vmatprep.subr.mxu0 0.0
    %2489 = vmatpush1.msra.mxu0 0.0
    %2490 = vmatprep.subr.mxu0 0.0
    %2491 = vmatpush1.msra.mxu0 0.0
    %2492 = vmatprep.subr.mxu0 0.0
    %2493 = vmatpush1.msra.mxu0 0.0
    %2494 = vmatprep.subr.mxu0 0.0
    %2495 = vmatpush1.msra.mxu0 0.0
    %2496 = vmatprep.subr.mxu0 0.0
    %2497 = vmatpush1.msra.mxu0 0.0
    %2498 = vmatprep.subr.mxu0 0.0
    %2499 = vmatpush1.msra.mxu0 0.0
    %2500 = vmatprep.subr.mxu0 0.0
    %2501 = vmatpush1.msra.mxu0 0.0
    %2502 = vmatprep.subr.mxu0 0.0
    %2503 = vmatpush1.msra.mxu0 0.0
    %2504 = vmatprep.subr.mxu0 0.0
    %2505 = vmatpush1.msra.mxu0 0.0
    %2506 = vmatprep.subr.mxu0 0.0
    %2507 = vmatpush1.msra.mxu0 0.0
    %2508 = vmatprep.subr.mxu0 0.0
    %2509 = vmatpush1.msra.mxu0 0.0
    %2510 = vmatprep.subr.mxu0 0.0
    %2511 = vmatpush1.msra.mxu0 0.0
    %2512 = vmatprep.subr.mxu0 0.0
    %2513 = vmatpush1.msra.mxu0 0.0
    %2514 = vmatprep.subr.mxu0 0.0
    %2515 = vmatpush1.msra.mxu0 0.0
    %2516 = vmatprep.subr.mxu0 0.0
    %2517 = vmatpush1.msra.mxu0 0.0
    %2518 = vmatprep.subr.mxu0 0.0
    %2519 = vmatpush1.msra.mxu0 0.0
    %2520 = vmatprep.subr.mxu0 0.0
    %2521 = vmatpush1.msra.mxu0 0.0
    %2522 = vmatprep.subr.mxu0 0.0
    %2523 = vmatpush1.msra.mxu0 0.0
    %2524 = vmatprep.subr.mxu0 0.0
    %2525 = vmatpush1.msra.mxu0 0.0
    %2526 = vmatprep.subr.mxu0 0.0
    %2527 = vmatpush1.msra.mxu0 0.0
    %2528 = vmatprep.subr.mxu0 0.0
    %2529 = vmatpush1.msra.mxu0 0.0
    %2530 = vmatprep.subr.mxu0 0.0
    %2531 = vmatpush1.msra.mxu0 0.0
    %2532 = vmatprep.subr.mxu0 0.0
    %2533 = vmatpush1.msra.mxu0 0.0
    %2534 = vmatprep.subr.mxu0 0.0
    %2535 = vmatpush1.msra.mxu0 0.0
    %2536 = vmatprep.subr.mxu0 0.0
    %2537 = vmatpush1.msra.mxu0 0.0
    %2538 = vmatprep.subr.mxu0 0.0
    %2539 = vmatpush1.msra.mxu0 0.0
    %2540 = vmatprep.subr.mxu0 0.0
    %2541 = vmatpush1.msra.mxu0 0.0
    %2542 = vmatprep.mubr.f32.mxu0 0.0
    %2543 = vmatmul.mubr.f32.gmra.mrb[0].mxu0 %v2476
    %v2544 = vpop.f32.mrb[0].mxu0
    %v2545 = vadd.f32 0.0, %v2544
    %v2546 = vpop.f32.mrb[0].mxu0
    %2547 = vdwg.mxu0
    %2548 = vrot.lane.b32.xlu0 %v2046, 104
    %v2549 = vpop.permute.xlu0 %2548
    %2550 = vrot.lane.b32.xlu0 %v2046, 72
    %v2551 = vpop.permute.xlu0 %2550
    %v2552 = vsel %vm216, %v2549, 0
    %v2554 = vsel %vm216, %v2551, 0
    %2556 = vmatprep.subr.mxu0 0.0
    %2557 = vmatpush1.xpose.msra.mxu0 %v2554
    %2558 = vmatprep.subr.mxu0 0.0
    %2559 = vmatpush1.xpose.msra.mxu0 0.0
    %2560 = vmatprep.subr.mxu0 0.0
    %2561 = vmatpush1.xpose.msra.mxu0 0.0
    %2562 = vmatprep.subr.mxu0 0.0
    %2563 = vmatpush1.xpose.msra.mxu0 0.0
    %2564 = vmatprep.subr.mxu0 0.0
    %2565 = vmatpush1.xpose.msra.mxu0 0.0
    %2566 = vmatprep.subr.mxu0 0.0
    %2567 = vmatpush1.xpose.msra.mxu0 0.0
    %2568 = vmatprep.subr.mxu0 0.0
    %2569 = vmatpush1.xpose.msra.mxu0 0.0
    %2570 = vmatprep.subr.mxu0 0.0
    %2571 = vmatpush1.xpose.msra.mxu0 0.0
    %2572 = vmatprep.subr.mxu0 0.0
    %2573 = vmatpush1.xpose.msra.mxu0 0.0
    %2574 = vmatprep.subr.mxu0 0.0
    %2575 = vmatpush1.xpose.msra.mxu0 0.0
    %2576 = vmatprep.subr.mxu0 0.0
    %2577 = vmatpush1.xpose.msra.mxu0 0.0
    %2578 = vmatprep.subr.mxu0 0.0
    %2579 = vmatpush1.xpose.msra.mxu0 0.0
    %2580 = vmatprep.subr.mxu0 0.0
    %2581 = vmatpush1.xpose.msra.mxu0 0.0
    %2582 = vmatprep.subr.mxu0 0.0
    %2583 = vmatpush1.xpose.msra.mxu0 0.0
    %2584 = vmatprep.subr.mxu0 0.0
    %2585 = vmatpush1.xpose.msra.mxu0 0.0
    %2586 = vmatprep.subr.mxu0 0.0
    %2587 = vmatpush1.xpose.msra.mxu0 0.0
    %2588 = vmatprep.subr.mxu0 0.0
    %2589 = vmatpush1.xpose.msra.mxu0 0.0
    %2590 = vmatprep.subr.mxu0 0.0
    %2591 = vmatpush1.xpose.msra.mxu0 0.0
    %2592 = vmatprep.subr.mxu0 0.0
    %2593 = vmatpush1.xpose.msra.mxu0 0.0
    %2594 = vmatprep.subr.mxu0 0.0
    %2595 = vmatpush1.xpose.msra.mxu0 0.0
    %2596 = vmatprep.subr.mxu0 0.0
    %2597 = vmatpush1.xpose.msra.mxu0 0.0
    %2598 = vmatprep.subr.mxu0 0.0
    %2599 = vmatpush1.xpose.msra.mxu0 0.0
    %2600 = vmatprep.subr.mxu0 0.0
    %2601 = vmatpush1.xpose.msra.mxu0 0.0
    %2602 = vmatprep.subr.mxu0 0.0
    %2603 = vmatpush1.xpose.msra.mxu0 0.0
    %2604 = vmatprep.subr.mxu0 0.0
    %2605 = vmatpush1.xpose.msra.mxu0 0.0
    %2606 = vmatprep.subr.mxu0 0.0
    %2607 = vmatpush1.xpose.msra.mxu0 0.0
    %2608 = vmatprep.subr.mxu0 0.0
    %2609 = vmatpush1.xpose.msra.mxu0 0.0
    %2610 = vmatprep.subr.mxu0 0.0
    %2611 = vmatpush1.xpose.msra.mxu0 0.0
    %2612 = vmatprep.subr.mxu0 0.0
    %2613 = vmatpush1.xpose.msra.mxu0 0.0
    %2614 = vmatprep.subr.mxu0 0.0
    %2615 = vmatpush1.xpose.msra.mxu0 0.0
    %2616 = vmatprep.subr.mxu0 0.0
    %2617 = vmatpush1.xpose.msra.mxu0 0.0
    %2618 = vmatprep.subr.mxu0 0.0
    %2619 = vmatpush1.xpose.msra.mxu0 0.0
    %2620 = vmatprep.mubr.f32.mxu0 0.0
    %2621 = vmatmul.mubr.f32.gmra.mrb[0].mxu0 %v2552
    %v2622 = vpop.f32.mrb[0].mxu0
    %v2623 = vadd.f32 %v212, %v2622
    %v2624 = vpop.f32.mrb[0].mxu0
    %2625 = vdwg.mxu0
    %v2626 = vsel %vm216, %v2623, -inf
    %2627 = vmax.xlane.f32.xlu0 %v2626
    %v2628 = vpop.xlane.xlu0 %2627
    %v2629 = vsub.f32 %v2623, %v2628
    %v2630 = vmul.f32 %v2629, 1.442695
    %v2631 = vpow.pop %v2630
    %v2632 = vsel %vm216, %v2631, 0.0
    %2633 = vadd.xlane.f32.xlu0 %v2632
    %v2634 = vpop.xlane.xlu0 %2633
    %v2635 = vrcp.pop %v2634
    %v2636 = vmul.f32 %v2631, %v2635
    %2637 = vrot.lane.b32.xlu0 %v2046, 40
    %v2638 = vpop.permute.xlu0 %2637
    %v2641 = vsel %vm216, %v2636, 0
    %2643 = vmatprep.subr.mxu0 0.0
    %2644 = vmatpush1.msra.mxu0 %v2638
    %2645 = vmatprep.subr.mxu0 0.0
    %2646 = vmatpush1.msra.mxu0 0.0
    %2647 = vmatprep.subr.mxu0 0.0
    %2648 = vmatpush1.msra.mxu0 0.0
    %2649 = vmatprep.subr.mxu0 0.0
    %2650 = vmatpush1.msra.mxu0 0.0
    %2651 = vmatprep.subr.mxu0 0.0
    %2652 = vmatpush1.msra.mxu0 0.0
    %2653 = vmatprep.subr.mxu0 0.0
    %2654 = vmatpush1.msra.mxu0 0.0
    %2655 = vmatprep.subr.mxu0 0.0
    %2656 = vmatpush1.msra.mxu0 0.0
    %2657 = vmatprep.subr.mxu0 0.0
    %2658 = vmatpush1.msra.mxu0 0.0
    %2659 = vmatprep.subr.mxu0 0.0
    %2660 = vmatpush1.msra.mxu0 0.0
    %2661 = vmatprep.subr.mxu0 0.0
    %2662 = vmatpush1.msra.mxu0 0.0
    %2663 = vmatprep.subr.mxu0 0.0
    %2664 = vmatpush1.msra.mxu0 0.0
    %2665 = vmatprep.subr.mxu0 0.0
    %2666 = vmatpush1.msra.mxu0 0.0
    %2667 = vmatprep.subr.mxu0 0.0
    %2668 = vmatpush1.msra.mxu0 0.0
    %2669 = vmatprep.subr.mxu0 0.0
    %2670 = vmatpush1.msra.mxu0 0.0
    %2671 = vmatprep.subr.mxu0 0.0
    %2672 = vmatpush1.msra.mxu0 0.0
    %2673 = vmatprep.subr.mxu0 0.0
    %2674 = vmatpush1.msra.mxu0 0.0
    %2675 = vmatprep.subr.mxu0 0.0
    %2676 = vmatpush1.msra.mxu0 0.0
    %2677 = vmatprep.subr.mxu0 0.0
    %2678 = vmatpush1.msra.mxu0 0.0
    %2679 = vmatprep.subr.mxu0 0.0
    %2680 = vmatpush1.msra.mxu0 0.0
    %2681 = vmatprep.subr.mxu0 0.0
    %2682 = vmatpush1.msra.mxu0 0.0
    %2683 = vmatprep.subr.mxu0 0.0
    %2684 = vmatpush1.msra.mxu0 0.0
    %2685 = vmatprep.subr.mxu0 0.0
    %2686 = vmatpush1.msra.mxu0 0.0
    %2687 = vmatprep.subr.mxu0 0.0
    %2688 = vmatpush1.msra.mxu0 0.0
    %2689 = vmatprep.subr.mxu0 0.0
    %2690 = vmatpush1.msra.mxu0 0.0
    %2691 = vmatprep.subr.mxu0 0.0
    %2692 = vmatpush1.msra.mxu0 0.0
    %2693 = vmatprep.subr.mxu0 0.0
    %2694 = vmatpush1.msra.mxu0 0.0
    %2695 = vmatprep.subr.mxu0 0.0
    %2696 = vmatpush1.msra.mxu0 0.0
    %2697 = vmatprep.subr.mxu0 0.0
    %2698 = vmatpush1.msra.mxu0 0.0
    %2699 = vmatprep.subr.mxu0 0.0
    %2700 = vmatpush1.msra.mxu0 0.0
    %2701 = vmatprep.subr.mxu0 0.0
    %2702 = vmatpush1.msra.mxu0 0.0
    %2703 = vmatprep.subr.mxu0 0.0
    %2704 = vmatpush1.msra.mxu0 0.0
    %2705 = vmatprep.subr.mxu0 0.0
    %2706 = vmatpush1.msra.mxu0 0.0
    %2707 = vmatprep.mubr.f32.mxu0 0.0
    %2708 = vmatmul.mubr.f32.gmra.mrb[0].mxu0 %v2641
    %v2709 = vpop.f32.mrb[0].mxu0
    %v2710 = vadd.f32 0.0, %v2709
    %v2711 = vpop.f32.mrb[0].mxu0
    %2712 = vdwg.mxu0
    %2714 = vrot.lane.b32.xlu0 %v2380, 8
    %v2715 = vpop.permute.xlu0 %2714
    %2718 = vrot.lane.b32.xlu0 %v2545, 16
    %v2719 = vpop.permute.xlu0 %2718
    %2722 = vrot.lane.b32.xlu0 %v2710, 24
    %v2723 = vpop.permute.xlu0 %2722
    %v2725 = vsel %vm216, %v2215, %v2715
    %v2726 = vsel %vm886, %v2725, %v2719
    %v2727 = vsel %vm888, %v2726, %v2723
    %2729 = vrot.lane.b32.xlu0 %v2051, 96
    %v2730 = vpop.permute.xlu0 %2729
    %v2731 = vsel %vm216, %v2051, 0
    %v2733 = vsel %vm216, %v2730, 0
    %2735 = vmatprep.subr.mxu0 0.0
    %2736 = vmatpush1.xpose.msra.mxu0 %v2733
    %2737 = vmatprep.subr.mxu0 0.0
    %2738 = vmatpush1.xpose.msra.mxu0 0.0
    %2739 = vmatprep.subr.mxu0 0.0
    %2740 = vmatpush1.xpose.msra.mxu0 0.0
    %2741 = vmatprep.subr.mxu0 0.0
    %2742 = vmatpush1.xpose.msra.mxu0 0.0
    %2743 = vmatprep.subr.mxu0 0.0
    %2744 = vmatpush1.xpose.msra.mxu0 0.0
    %2745 = vmatprep.subr.mxu0 0.0
    %2746 = vmatpush1.xpose.msra.mxu0 0.0
    %2747 = vmatprep.subr.mxu0 0.0
    %2748 = vmatpush1.xpose.msra.mxu0 0.0
    %2749 = vmatprep.subr.mxu0 0.0
    %2750 = vmatpush1.xpose.msra.mxu0 0.0
    %2751 = vmatprep.subr.mxu0 0.0
    %2752 = vmatpush1.xpose.msra.mxu0 0.0
    %2753 = vmatprep.subr.mxu0 0.0
    %2754 = vmatpush1.xpose.msra.mxu0 0.0
    %2755 = vmatprep.subr.mxu0 0.0
    %2756 = vmatpush1.xpose.msra.mxu0 0.0
    %2757 = vmatprep.subr.mxu0 0.0
    %2758 = vmatpush1.xpose.msra.mxu0 0.0
    %2759 = vmatprep.subr.mxu0 0.0
    %2760 = vmatpush1.xpose.msra.mxu0 0.0
    %2761 = vmatprep.subr.mxu0 0.0
    %2762 = vmatpush1.xpose.msra.mxu0 0.0
    %2763 = vmatprep.subr.mxu0 0.0
    %2764 = vmatpush1.xpose.msra.mxu0 0.0
    %2765 = vmatprep.subr.mxu0 0.0
    %2766 = vmatpush1.xpose.msra.mxu0 0.0
    %2767 = vmatprep.subr.mxu0 0.0
    %2768 = vmatpush1.xpose.msra.mxu0 0.0
    %2769 = vmatprep.subr.mxu0 0.0
    %2770 = vmatpush1.xpose.msra.mxu0 0.0
    %2771 = vmatprep.subr.mxu0 0.0
    %2772 = vmatpush1.xpose.msra.mxu0 0.0
    %2773 = vmatprep.subr.mxu0 0.0
    %2774 = vmatpush1.xpose.msra.mxu0 0.0
    %2775 = vmatprep.subr.mxu0 0.0
    %2776 = vmatpush1.xpose.msra.mxu0 0.0
    %2777 = vmatprep.subr.mxu0 0.0
    %2778 = vmatpush1.xpose.msra.mxu0 0.0
    %2779 = vmatprep.subr.mxu0 0.0
    %2780 = vmatpush1.xpose.msra.mxu0 0.0
    %2781 = vmatprep.subr.mxu0 0.0
    %2782 = vmatpush1.xpose.msra.mxu0 0.0
    %2783 = vmatprep.subr.mxu0 0.0
    %2784 = vmatpush1.xpose.msra.mxu0 0.0
    %2785 = vmatprep.subr.mxu0 0.0
    %2786 = vmatpush1.xpose.msra.mxu0 0.0
    %2787 = vmatprep.subr.mxu0 0.0
    %2788 = vmatpush1.xpose.msra.mxu0 0.0
    %2789 = vmatprep.subr.mxu0 0.0
    %2790 = vmatpush1.xpose.msra.mxu0 0.0
    %2791 = vmatprep.subr.mxu0 0.0
    %2792 = vmatpush1.xpose.msra.mxu0 0.0
    %2793 = vmatprep.subr.mxu0 0.0
    %2794 = vmatpush1.xpose.msra.mxu0 0.0
    %2795 = vmatprep.subr.mxu0 0.0
    %2796 = vmatpush1.xpose.msra.mxu0 0.0
    %2797 = vmatprep.subr.mxu0 0.0
    %2798 = vmatpush1.xpose.msra.mxu0 0.0
    %2799 = vmatprep.mubr.f32.mxu0 0.0
    %2800 = vmatmul.mubr.f32.gmra.mrb[0].mxu0 %v2731
    %v2801 = vpop.f32.mrb[0].mxu0
    %v2802 = vadd.f32 %v893, %v2801
    %v2803 = vpop.f32.mrb[0].mxu0
    %2804 = vdwg.mxu0
    %v2805 = vsel %vm216, %v2802, -inf
    %2806 = vmax.xlane.f32.xlu0 %v2805
    %v2807 = vpop.xlane.xlu0 %2806
    %v2808 = vsub.f32 %v2802, %v2807
    %v2809 = vmul.f32 %v2808, 1.442695
    %v2810 = vpow.pop %v2809
    %v2811 = vsel %vm216, %v2810, 0.0
    %2812 = vadd.xlane.f32.xlu0 %v2811
    %v2813 = vpop.xlane.xlu0 %2812
    %v2814 = vrcp.pop %v2813
    %v2815 = vmul.f32 %v2810, %v2814
    %2816 = vrot.lane.b32.xlu0 %v2051, 64
    %v2817 = vpop.permute.xlu0 %2816
    %v2820 = vsel %vm216, %v2815, 0
    %2822 = vmatprep.subr.mxu0 0.0
    %2823 = vmatpush1.msra.mxu0 %v2817
    %2824 = vmatprep.subr.mxu0 0.0
    %2825 = vmatpush1.msra.mxu0 0.0
    %2826 = vmatprep.subr.mxu0 0.0
    %2827 = vmatpush1.msra.mxu0 0.0
    %2828 = vmatprep.subr.mxu0 0.0
    %2829 = vmatpush1.msra.mxu0 0.0
    %2830 = vmatprep.subr.mxu0 0.0
    %2831 = vmatpush1.msra.mxu0 0.0
    %2832 = vmatprep.subr.mxu0 0.0
    %2833 = vmatpush1.msra.mxu0 0.0
    %2834 = vmatprep.subr.mxu0 0.0
    %2835 = vmatpush1.msra.mxu0 0.0
    %2836 = vmatprep.subr.mxu0 0.0
    %2837 = vmatpush1.msra.mxu0 0.0
    %2838 = vmatprep.subr.mxu0 0.0
    %2839 = vmatpush1.msra.mxu0 0.0
    %2840 = vmatprep.subr.mxu0 0.0
    %2841 = vmatpush1.msra.mxu0 0.0
    %2842 = vmatprep.subr.mxu0 0.0
    %2843 = vmatpush1.msra.mxu0 0.0
    %2844 = vmatprep.subr.mxu0 0.0
    %2845 = vmatpush1.msra.mxu0 0.0
    %2846 = vmatprep.subr.mxu0 0.0
    %2847 = vmatpush1.msra.mxu0 0.0
    %2848 = vmatprep.subr.mxu0 0.0
    %2849 = vmatpush1.msra.mxu0 0.0
    %2850 = vmatprep.subr.mxu0 0.0
    %2851 = vmatpush1.msra.mxu0 0.0
    %2852 = vmatprep.subr.mxu0 0.0
    %2853 = vmatpush1.msra.mxu0 0.0
    %2854 = vmatprep.subr.mxu0 0.0
    %2855 = vmatpush1.msra.mxu0 0.0
    %2856 = vmatprep.subr.mxu0 0.0
    %2857 = vmatpush1.msra.mxu0 0.0
    %2858 = vmatprep.subr.mxu0 0.0
    %2859 = vmatpush1.msra.mxu0 0.0
    %2860 = vmatprep.subr.mxu0 0.0
    %2861 = vmatpush1.msra.mxu0 0.0
    %2862 = vmatprep.subr.mxu0 0.0
    %2863 = vmatpush1.msra.mxu0 0.0
    %2864 = vmatprep.subr.mxu0 0.0
    %2865 = vmatpush1.msra.mxu0 0.0
    %2866 = vmatprep.subr.mxu0 0.0
    %2867 = vmatpush1.msra.mxu0 0.0
    %2868 = vmatprep.subr.mxu0 0.0
    %2869 = vmatpush1.msra.mxu0 0.0
    %2870 = vmatprep.subr.mxu0 0.0
    %2871 = vmatpush1.msra.mxu0 0.0
    %2872 = vmatprep.subr.mxu0 0.0
    %2873 = vmatpush1.msra.mxu0 0.0
    %2874 = vmatprep.subr.mxu0 0.0
    %2875 = vmatpush1.msra.mxu0 0.0
    %2876 = vmatprep.subr.mxu0 0.0
    %2877 = vmatpush1.msra.mxu0 0.0
    %2878 = vmatprep.subr.mxu0 0.0
    %2879 = vmatpush1.msra.mxu0 0.0
    %2880 = vmatprep.subr.mxu0 0.0
    %2881 = vmatpush1.msra.mxu0 0.0
    %2882 = vmatprep.subr.mxu0 0.0
    %2883 = vmatpush1.msra.mxu0 0.0
    %2884 = vmatprep.subr.mxu0 0.0
    %2885 = vmatpush1.msra.mxu0 0.0
    %2886 = vmatprep.mubr.f32.mxu0 0.0
    %2887 = vmatmul.mubr.f32.gmra.mrb[0].mxu0 %v2820
    %v2888 = vpop.f32.mrb[0].mxu0
    %v2889 = vadd.f32 0.0, %v2888
    %v2890 = vpop.f32.mrb[0].mxu0
    %2891 = vdwg.mxu0
    %2892 = vrot.lane.b32.xlu0 %v2051, 120
    %v2893 = vpop.permute.xlu0 %2892
    %2894 = vrot.lane.b32.xlu0 %v2051, 88
    %v2895 = vpop.permute.xlu0 %2894
    %v2896 = vsel %vm216, %v2893, 0
    %v2898 = vsel %vm216, %v2895, 0
    %2900 = vmatprep.subr.mxu0 0.0
    %2901 = vmatpush1.xpose.msra.mxu0 %v2898
    %2902 = vmatprep.subr.mxu0 0.0
    %2903 = vmatpush1.xpose.msra.mxu0 0.0
    %2904 = vmatprep.subr.mxu0 0.0
    %2905 = vmatpush1.xpose.msra.mxu0 0.0
    %2906 = vmatprep.subr.mxu0 0.0
    %2907 = vmatpush1.xpose.msra.mxu0 0.0
    %2908 = vmatprep.subr.mxu0 0.0
    %2909 = vmatpush1.xpose.msra.mxu0 0.0
    %2910 = vmatprep.subr.mxu0 0.0
    %2911 = vmatpush1.xpose.msra.mxu0 0.0
    %2912 = vmatprep.subr.mxu0 0.0
    %2913 = vmatpush1.xpose.msra.mxu0 0.0
    %2914 = vmatprep.subr.mxu0 0.0
    %2915 = vmatpush1.xpose.msra.mxu0 0.0
    %2916 = vmatprep.subr.mxu0 0.0
    %2917 = vmatpush1.xpose.msra.mxu0 0.0
    %2918 = vmatprep.subr.mxu0 0.0
    %2919 = vmatpush1.xpose.msra.mxu0 0.0
    %2920 = vmatprep.subr.mxu0 0.0
    %2921 = vmatpush1.xpose.msra.mxu0 0.0
    %2922 = vmatprep.subr.mxu0 0.0
    %2923 = vmatpush1.xpose.msra.mxu0 0.0
    %2924 = vmatprep.subr.mxu0 0.0
    %2925 = vmatpush1.xpose.msra.mxu0 0.0
    %2926 = vmatprep.subr.mxu0 0.0
    %2927 = vmatpush1.xpose.msra.mxu0 0.0
    %2928 = vmatprep.subr.mxu0 0.0
    %2929 = vmatpush1.xpose.msra.mxu0 0.0
    %2930 = vmatprep.subr.mxu0 0.0
    %2931 = vmatpush1.xpose.msra.mxu0 0.0
    %2932 = vmatprep.subr.mxu0 0.0
    %2933 = vmatpush1.xpose.msra.mxu0 0.0
    %2934 = vmatprep.subr.mxu0 0.0
    %2935 = vmatpush1.xpose.msra.mxu0 0.0
    %2936 = vmatprep.subr.mxu0 0.0
    %2937 = vmatpush1.xpose.msra.mxu0 0.0
    %2938 = vmatprep.subr.mxu0 0.0
    %2939 = vmatpush1.xpose.msra.mxu0 0.0
    %2940 = vmatprep.subr.mxu0 0.0
    %2941 = vmatpush1.xpose.msra.mxu0 0.0
    %2942 = vmatprep.subr.mxu0 0.0
    %2943 = vmatpush1.xpose.msra.mxu0 0.0
    %2944 = vmatprep.subr.mxu0 0.0
    %2945 = vmatpush1.xpose.msra.mxu0 0.0
    %2946 = vmatprep.subr.mxu0 0.0
    %2947 = vmatpush1.xpose.msra.mxu0 0.0
    %2948 = vmatprep.subr.mxu0 0.0
    %2949 = vmatpush1.xpose.msra.mxu0 0.0
    %2950 = vmatprep.subr.mxu0 0.0
    %2951 = vmatpush1.xpose.msra.mxu0 0.0
    %2952 = vmatprep.subr.mxu0 0.0
    %2953 = vmatpush1.xpose.msra.mxu0 0.0
    %2954 = vmatprep.subr.mxu0 0.0
    %2955 = vmatpush1.xpose.msra.mxu0 0.0
    %2956 = vmatprep.subr.mxu0 0.0
    %2957 = vmatpush1.xpose.msra.mxu0 0.0
    %2958 = vmatprep.subr.mxu0 0.0
    %2959 = vmatpush1.xpose.msra.mxu0 0.0
    %2960 = vmatprep.subr.mxu0 0.0
    %2961 = vmatpush1.xpose.msra.mxu0 0.0
    %2962 = vmatprep.subr.mxu0 0.0
    %2963 = vmatpush1.xpose.msra.mxu0 0.0
    %2964 = vmatprep.mubr.f32.mxu0 0.0
    %2965 = vmatmul.mubr.f32.gmra.mrb[0].mxu0 %v2896
    %v2966 = vpop.f32.mrb[0].mxu0
    %v2967 = vadd.f32 %v893, %v2966
    %v2968 = vpop.f32.mrb[0].mxu0
    %2969 = vdwg.mxu0
    %v2970 = vsel %vm216, %v2967, -inf
    %2971 = vmax.xlane.f32.xlu0 %v2970
    %v2972 = vpop.xlane.xlu0 %2971
    %v2973 = vsub.f32 %v2967, %v2972
    %v2974 = vmul.f32 %v2973, 1.442695
    %v2975 = vpow.pop %v2974
    %v2976 = vsel %vm216, %v2975, 0.0
    %2977 = vadd.xlane.f32.xlu0 %v2976
    %v2978 = vpop.xlane.xlu0 %2977
    %v2979 = vrcp.pop %v2978
    %v2980 = vmul.f32 %v2975, %v2979
    %2981 = vrot.lane.b32.xlu0 %v2051, 56
    %v2982 = vpop.permute.xlu0 %2981
    %v2985 = vsel %vm216, %v2980, 0
    %2987 = vmatprep.subr.mxu0 0.0
    %2988 = vmatpush1.msra.mxu0 %v2982
    %2989 = vmatprep.subr.mxu0 0.0
    %2990 = vmatpush1.msra.mxu0 0.0
    %2991 = vmatprep.subr.mxu0 0.0
    %2992 = vmatpush1.msra.mxu0 0.0
    %2993 = vmatprep.subr.mxu0 0.0
    %2994 = vmatpush1.msra.mxu0 0.0
    %2995 = vmatprep.subr.mxu0 0.0
    %2996 = vmatpush1.msra.mxu0 0.0
    %2997 = vmatprep.subr.mxu0 0.0
    %2998 = vmatpush1.msra.mxu0 0.0
    %2999 = vmatprep.subr.mxu0 0.0
    %3000 = vmatpush1.msra.mxu0 0.0
    %3001 = vmatprep.subr.mxu0 0.0
    %3002 = vmatpush1.msra.mxu0 0.0
    %3003 = vmatprep.subr.mxu0 0.0
    %3004 = vmatpush1.msra.mxu0 0.0
    %3005 = vmatprep.subr.mxu0 0.0
    %3006 = vmatpush1.msra.mxu0 0.0
    %3007 = vmatprep.subr.mxu0 0.0
    %3008 = vmatpush1.msra.mxu0 0.0
    %3009 = vmatprep.subr.mxu0 0.0
    %3010 = vmatpush1.msra.mxu0 0.0
    %3011 = vmatprep.subr.mxu0 0.0
    %3012 = vmatpush1.msra.mxu0 0.0
    %3013 = vmatprep.subr.mxu0 0.0
    %3014 = vmatpush1.msra.mxu0 0.0
    %3015 = vmatprep.subr.mxu0 0.0
    %3016 = vmatpush1.msra.mxu0 0.0
    %3017 = vmatprep.subr.mxu0 0.0
    %3018 = vmatpush1.msra.mxu0 0.0
    %3019 = vmatprep.subr.mxu0 0.0
    %3020 = vmatpush1.msra.mxu0 0.0
    %3021 = vmatprep.subr.mxu0 0.0
    %3022 = vmatpush1.msra.mxu0 0.0
    %3023 = vmatprep.subr.mxu0 0.0
    %3024 = vmatpush1.msra.mxu0 0.0
    %3025 = vmatprep.subr.mxu0 0.0
    %3026 = vmatpush1.msra.mxu0 0.0
    %3027 = vmatprep.subr.mxu0 0.0
    %3028 = vmatpush1.msra.mxu0 0.0
    %3029 = vmatprep.subr.mxu0 0.0
    %3030 = vmatpush1.msra.mxu0 0.0
    %3031 = vmatprep.subr.mxu0 0.0
    %3032 = vmatpush1.msra.mxu0 0.0
    %3033 = vmatprep.subr.mxu0 0.0
    %3034 = vmatpush1.msra.mxu0 0.0
    %3035 = vmatprep.subr.mxu0 0.0
    %3036 = vmatpush1.msra.mxu0 0.0
    %3037 = vmatprep.subr.mxu0 0.0
    %3038 = vmatpush1.msra.mxu0 0.0
    %3039 = vmatprep.subr.mxu0 0.0
    %3040 = vmatpush1.msra.mxu0 0.0
    %3041 = vmatprep.subr.mxu0 0.0
    %3042 = vmatpush1.msra.mxu0 0.0
    %3043 = vmatprep.subr.mxu0 0.0
    %3044 = vmatpush1.msra.mxu0 0.0
    %3045 = vmatprep.subr.mxu0 0.0
    %3046 = vmatpush1.msra.mxu0 0.0
    %3047 = vmatprep.subr.mxu0 0.0
    %3048 = vmatpush1.msra.mxu0 0.0
    %3049 = vmatprep.subr.mxu0 0.0
    %3050 = vmatpush1.msra.mxu0 0.0
    %3051 = vmatprep.mubr.f32.mxu0 0.0
    %3052 = vmatmul.mubr.f32.gmra.mrb[0].mxu0 %v2985
    %v3053 = vpop.f32.mrb[0].mxu0
    %v3054 = vadd.f32 0.0, %v3053
    %v3055 = vpop.f32.mrb[0].mxu0
    %3056 = vdwg.mxu0
    %3057 = vrot.lane.b32.xlu0 %v2051, 112
    %v3058 = vpop.permute.xlu0 %3057
    %3059 = vrot.lane.b32.xlu0 %v2051, 80
    %v3060 = vpop.permute.xlu0 %3059
    %v3061 = vsel %vm216, %v3058, 0
    %v3063 = vsel %vm216, %v3060, 0
    %3065 = vmatprep.subr.mxu0 0.0
    %3066 = vmatpush1.xpose.msra.mxu0 %v3063
    %3067 = vmatprep.subr.mxu0 0.0
    %3068 = vmatpush1.xpose.msra.mxu0 0.0
    %3069 = vmatprep.subr.mxu0 0.0
    %3070 = vmatpush1.xpose.msra.mxu0 0.0
    %3071 = vmatprep.subr.mxu0 0.0
    %3072 = vmatpush1.xpose.msra.mxu0 0.0
    %3073 = vmatprep.subr.mxu0 0.0
    %3074 = vmatpush1.xpose.msra.mxu0 0.0
    %3075 = vmatprep.subr.mxu0 0.0
    %3076 = vmatpush1.xpose.msra.mxu0 0.0
    %3077 = vmatprep.subr.mxu0 0.0
    %3078 = vmatpush1.xpose.msra.mxu0 0.0
    %3079 = vmatprep.subr.mxu0 0.0
    %3080 = vmatpush1.xpose.msra.mxu0 0.0
    %3081 = vmatprep.subr.mxu0 0.0
    %3082 = vmatpush1.xpose.msra.mxu0 0.0
    %3083 = vmatprep.subr.mxu0 0.0
    %3084 = vmatpush1.xpose.msra.mxu0 0.0
    %3085 = vmatprep.subr.mxu0 0.0
    %3086 = vmatpush1.xpose.msra.mxu0 0.0
    %3087 = vmatprep.subr.mxu0 0.0
    %3088 = vmatpush1.xpose.msra.mxu0 0.0
    %3089 = vmatprep.subr.mxu0 0.0
    %3090 = vmatpush1.xpose.msra.mxu0 0.0
    %3091 = vmatprep.subr.mxu0 0.0
    %3092 = vmatpush1.xpose.msra.mxu0 0.0
    %3093 = vmatprep.subr.mxu0 0.0
    %3094 = vmatpush1.xpose.msra.mxu0 0.0
    %3095 = vmatprep.subr.mxu0 0.0
    %3096 = vmatpush1.xpose.msra.mxu0 0.0
    %3097 = vmatprep.subr.mxu0 0.0
    %3098 = vmatpush1.xpose.msra.mxu0 0.0
    %3099 = vmatprep.subr.mxu0 0.0
    %3100 = vmatpush1.xpose.msra.mxu0 0.0
    %3101 = vmatprep.subr.mxu0 0.0
    %3102 = vmatpush1.xpose.msra.mxu0 0.0
    %3103 = vmatprep.subr.mxu0 0.0
    %3104 = vmatpush1.xpose.msra.mxu0 0.0
    %3105 = vmatprep.subr.mxu0 0.0
    %3106 = vmatpush1.xpose.msra.mxu0 0.0
    %3107 = vmatprep.subr.mxu0 0.0
    %3108 = vmatpush1.xpose.msra.mxu0 0.0
    %3109 = vmatprep.subr.mxu0 0.0
    %3110 = vmatpush1.xpose.msra.mxu0 0.0
    %3111 = vmatprep.subr.mxu0 0.0
    %3112 = vmatpush1.xpose.msra.mxu0 0.0
    %3113 = vmatprep.subr.mxu0 0.0
    %3114 = vmatpush1.xpose.msra.mxu0 0.0
    %3115 = vmatprep.subr.mxu0 0.0
    %3116 = vmatpush1.xpose.msra.mxu0 0.0
    %3117 = vmatprep.subr.mxu0 0.0
    %3118 = vmatpush1.xpose.msra.mxu0 0.0
    %3119 = vmatprep.subr.mxu0 0.0
    %3120 = vmatpush1.xpose.msra.mxu0 0.0
    %3121 = vmatprep.subr.mxu0 0.0
    %3122 = vmatpush1.xpose.msra.mxu0 0.0
    %3123 = vmatprep.subr.mxu0 0.0
    %3124 = vmatpush1.xpose.msra.mxu0 0.0
    %3125 = vmatprep.subr.mxu0 0.0
    %3126 = vmatpush1.xpose.msra.mxu0 0.0
    %3127 = vmatprep.subr.mxu0 0.0
    %3128 = vmatpush1.xpose.msra.mxu0 0.0
    %3129 = vmatprep.mubr.f32.mxu0 0.0
    %3130 = vmatmul.mubr.f32.gmra.mrb[0].mxu0 %v3061
    %v3131 = vpop.f32.mrb[0].mxu0
    %v3132 = vadd.f32 %v893, %v3131
    %v3133 = vpop.f32.mrb[0].mxu0
    %3134 = vdwg.mxu0
    %v3135 = vsel %vm216, %v3132, -inf
    %3136 = vmax.xlane.f32.xlu0 %v3135
    %v3137 = vpop.xlane.xlu0 %3136
    %v3138 = vsub.f32 %v3132, %v3137
    %v3139 = vmul.f32 %v3138, 1.442695
    %v3140 = vpow.pop %v3139
    %v3141 = vsel %vm216, %v3140, 0.0
    %3142 = vadd.xlane.f32.xlu0 %v3141
    %v3143 = vpop.xlane.xlu0 %3142
    %v3144 = vrcp.pop %v3143
    %v3145 = vmul.f32 %v3140, %v3144
    %3146 = vrot.lane.b32.xlu0 %v2051, 48
    %v3147 = vpop.permute.xlu0 %3146
    %v3150 = vsel %vm216, %v3145, 0
    %3152 = vmatprep.subr.mxu0 0.0
    %3153 = vmatpush1.msra.mxu0 %v3147
    %3154 = vmatprep.subr.mxu0 0.0
    %3155 = vmatpush1.msra.mxu0 0.0
    %3156 = vmatprep.subr.mxu0 0.0
    %3157 = vmatpush1.msra.mxu0 0.0
    %3158 = vmatprep.subr.mxu0 0.0
    %3159 = vmatpush1.msra.mxu0 0.0
    %3160 = vmatprep.subr.mxu0 0.0
    %3161 = vmatpush1.msra.mxu0 0.0
    %3162 = vmatprep.subr.mxu0 0.0
    %3163 = vmatpush1.msra.mxu0 0.0
    %3164 = vmatprep.subr.mxu0 0.0
    %3165 = vmatpush1.msra.mxu0 0.0
    %3166 = vmatprep.subr.mxu0 0.0
    %3167 = vmatpush1.msra.mxu0 0.0
    %3168 = vmatprep.subr.mxu0 0.0
    %3169 = vmatpush1.msra.mxu0 0.0
    %3170 = vmatprep.subr.mxu0 0.0
    %3171 = vmatpush1.msra.mxu0 0.0
    %3172 = vmatprep.subr.mxu0 0.0
    %3173 = vmatpush1.msra.mxu0 0.0
    %3174 = vmatprep.subr.mxu0 0.0
    %3175 = vmatpush1.msra.mxu0 0.0
    %3176 = vmatprep.subr.mxu0 0.0
    %3177 = vmatpush1.msra.mxu0 0.0
    %3178 = vmatprep.subr.mxu0 0.0
    %3179 = vmatpush1.msra.mxu0 0.0
    %3180 = vmatprep.subr.mxu0 0.0
    %3181 = vmatpush1.msra.mxu0 0.0
    %3182 = vmatprep.subr.mxu0 0.0
    %3183 = vmatpush1.msra.mxu0 0.0
    %3184 = vmatprep.subr.mxu0 0.0
    %3185 = vmatpush1.msra.mxu0 0.0
    %3186 = vmatprep.subr.mxu0 0.0
    %3187 = vmatpush1.msra.mxu0 0.0
    %3188 = vmatprep.subr.mxu0 0.0
    %3189 = vmatpush1.msra.mxu0 0.0
    %3190 = vmatprep.subr.mxu0 0.0
    %3191 = vmatpush1.msra.mxu0 0.0
    %3192 = vmatprep.subr.mxu0 0.0
    %3193 = vmatpush1.msra.mxu0 0.0
    %3194 = vmatprep.subr.mxu0 0.0
    %3195 = vmatpush1.msra.mxu0 0.0
    %3196 = vmatprep.subr.mxu0 0.0
    %3197 = vmatpush1.msra.mxu0 0.0
    %3198 = vmatprep.subr.mxu0 0.0
    %3199 = vmatpush1.msra.mxu0 0.0
    %3200 = vmatprep.subr.mxu0 0.0
    %3201 = vmatpush1.msra.mxu0 0.0
    %3202 = vmatprep.subr.mxu0 0.0
    %3203 = vmatpush1.msra.mxu0 0.0
    %3204 = vmatprep.subr.mxu0 0.0
    %3205 = vmatpush1.msra.mxu0 0.0
    %3206 = vmatprep.subr.mxu0 0.0
    %3207 = vmatpush1.msra.mxu0 0.0
    %3208 = vmatprep.subr.mxu0 0.0
    %3209 = vmatpush1.msra.mxu0 0.0
    %3210 = vmatprep.subr.mxu0 0.0
    %3211 = vmatpush1.msra.mxu0 0.0
    %3212 = vmatprep.subr.mxu0 0.0
    %3213 = vmatpush1.msra.mxu0 0.0
    %3214 = vmatprep.subr.mxu0 0.0
    %3215 = vmatpush1.msra.mxu0 0.0
    %3216 = vmatprep.mubr.f32.mxu0 0.0
    %3217 = vmatmul.mubr.f32.gmra.mrb[0].mxu0 %v3150
    %v3218 = vpop.f32.mrb[0].mxu0
    %v3219 = vadd.f32 0.0, %v3218
    %v3220 = vpop.f32.mrb[0].mxu0
    %3221 = vdwg.mxu0
    %3222 = vrot.lane.b32.xlu0 %v2051, 104
    %v3223 = vpop.permute.xlu0 %3222
    %3224 = vrot.lane.b32.xlu0 %v2051, 72
    %v3225 = vpop.permute.xlu0 %3224
    %v3226 = vsel %vm216, %v3223, 0
    %v3228 = vsel %vm216, %v3225, 0
    %3230 = vmatprep.subr.mxu0 0.0
    %3231 = vmatpush1.xpose.msra.mxu0 %v3228
    %3232 = vmatprep.subr.mxu0 0.0
    %3233 = vmatpush1.xpose.msra.mxu0 0.0
    %3234 = vmatprep.subr.mxu0 0.0
    %3235 = vmatpush1.xpose.msra.mxu0 0.0
    %3236 = vmatprep.subr.mxu0 0.0
    %3237 = vmatpush1.xpose.msra.mxu0 0.0
    %3238 = vmatprep.subr.mxu0 0.0
    %3239 = vmatpush1.xpose.msra.mxu0 0.0
    %3240 = vmatprep.subr.mxu0 0.0
    %3241 = vmatpush1.xpose.msra.mxu0 0.0
    %3242 = vmatprep.subr.mxu0 0.0
    %3243 = vmatpush1.xpose.msra.mxu0 0.0
    %3244 = vmatprep.subr.mxu0 0.0
    %3245 = vmatpush1.xpose.msra.mxu0 0.0
    %3246 = vmatprep.subr.mxu0 0.0
    %3247 = vmatpush1.xpose.msra.mxu0 0.0
    %3248 = vmatprep.subr.mxu0 0.0
    %3249 = vmatpush1.xpose.msra.mxu0 0.0
    %3250 = vmatprep.subr.mxu0 0.0
    %3251 = vmatpush1.xpose.msra.mxu0 0.0
    %3252 = vmatprep.subr.mxu0 0.0
    %3253 = vmatpush1.xpose.msra.mxu0 0.0
    %3254 = vmatprep.subr.mxu0 0.0
    %3255 = vmatpush1.xpose.msra.mxu0 0.0
    %3256 = vmatprep.subr.mxu0 0.0
    %3257 = vmatpush1.xpose.msra.mxu0 0.0
    %3258 = vmatprep.subr.mxu0 0.0
    %3259 = vmatpush1.xpose.msra.mxu0 0.0
    %3260 = vmatprep.subr.mxu0 0.0
    %3261 = vmatpush1.xpose.msra.mxu0 0.0
    %3262 = vmatprep.subr.mxu0 0.0
    %3263 = vmatpush1.xpose.msra.mxu0 0.0
    %3264 = vmatprep.subr.mxu0 0.0
    %3265 = vmatpush1.xpose.msra.mxu0 0.0
    %3266 = vmatprep.subr.mxu0 0.0
    %3267 = vmatpush1.xpose.msra.mxu0 0.0
    %3268 = vmatprep.subr.mxu0 0.0
    %3269 = vmatpush1.xpose.msra.mxu0 0.0
    %3270 = vmatprep.subr.mxu0 0.0
    %3271 = vmatpush1.xpose.msra.mxu0 0.0
    %3272 = vmatprep.subr.mxu0 0.0
    %3273 = vmatpush1.xpose.msra.mxu0 0.0
    %3274 = vmatprep.subr.mxu0 0.0
    %3275 = vmatpush1.xpose.msra.mxu0 0.0
    %3276 = vmatprep.subr.mxu0 0.0
    %3277 = vmatpush1.xpose.msra.mxu0 0.0
    %3278 = vmatprep.subr.mxu0 0.0
    %3279 = vmatpush1.xpose.msra.mxu0 0.0
    %3280 = vmatprep.subr.mxu0 0.0
    %3281 = vmatpush1.xpose.msra.mxu0 0.0
    %3282 = vmatprep.subr.mxu0 0.0
    %3283 = vmatpush1.xpose.msra.mxu0 0.0
    %3284 = vmatprep.subr.mxu0 0.0
    %3285 = vmatpush1.xpose.msra.mxu0 0.0
    %3286 = vmatprep.subr.mxu0 0.0
    %3287 = vmatpush1.xpose.msra.mxu0 0.0
    %3288 = vmatprep.subr.mxu0 0.0
    %3289 = vmatpush1.xpose.msra.mxu0 0.0
    %3290 = vmatprep.subr.mxu0 0.0
    %3291 = vmatpush1.xpose.msra.mxu0 0.0
    %3292 = vmatprep.subr.mxu0 0.0
    %3293 = vmatpush1.xpose.msra.mxu0 0.0
    %3294 = vmatprep.mubr.f32.mxu0 0.0
    %3295 = vmatmul.mubr.f32.gmra.mrb[0].mxu0 %v3226
    %v3296 = vpop.f32.mrb[0].mxu0
    %v3297 = vadd.f32 %v893, %v3296
    %v3298 = vpop.f32.mrb[0].mxu0
    %3299 = vdwg.mxu0
    %v3300 = vsel %vm216, %v3297, -inf
    %3301 = vmax.xlane.f32.xlu0 %v3300
    %v3302 = vpop.xlane.xlu0 %3301
    %v3303 = vsub.f32 %v3297, %v3302
    %v3304 = vmul.f32 %v3303, 1.442695
    %v3305 = vpow.pop %v3304
    %v3306 = vsel %vm216, %v3305, 0.0
    %3307 = vadd.xlane.f32.xlu0 %v3306
    %v3308 = vpop.xlane.xlu0 %3307
    %v3309 = vrcp.pop %v3308
    %v3310 = vmul.f32 %v3305, %v3309
    %3311 = vrot.lane.b32.xlu0 %v2051, 40
    %v3312 = vpop.permute.xlu0 %3311
    %v3315 = vsel %vm216, %v3310, 0
    %3317 = vmatprep.subr.mxu0 0.0
    %3318 = vmatpush1.msra.mxu0 %v3312
    %3319 = vmatprep.subr.mxu0 0.0
    %3320 = vmatpush1.msra.mxu0 0.0
    %3321 = vmatprep.subr.mxu0 0.0
    %3322 = vmatpush1.msra.mxu0 0.0
    %3323 = vmatprep.subr.mxu0 0.0
    %3324 = vmatpush1.msra.mxu0 0.0
    %3325 = vmatprep.subr.mxu0 0.0
    %3326 = vmatpush1.msra.mxu0 0.0
    %3327 = vmatprep.subr.mxu0 0.0
    %3328 = vmatpush1.msra.mxu0 0.0
    %3329 = vmatprep.subr.mxu0 0.0
    %3330 = vmatpush1.msra.mxu0 0.0
    %3331 = vmatprep.subr.mxu0 0.0
    %3332 = vmatpush1.msra.mxu0 0.0
    %3333 = vmatprep.subr.mxu0 0.0
    %3334 = vmatpush1.msra.mxu0 0.0
    %3335 = vmatprep.subr.mxu0 0.0
    %3336 = vmatpush1.msra.mxu0 0.0
    %3337 = vmatprep.subr.mxu0 0.0
    %3338 = vmatpush1.msra.mxu0 0.0
    %3339 = vmatprep.subr.mxu0 0.0
    %3340 = vmatpush1.msra.mxu0 0.0
    %3341 = vmatprep.subr.mxu0 0.0
    %3342 = vmatpush1.msra.mxu0 0.0
    %3343 = vmatprep.subr.mxu0 0.0
    %3344 = vmatpush1.msra.mxu0 0.0
    %3345 = vmatprep.subr.mxu0 0.0
    %3346 = vmatpush1.msra.mxu0 0.0
    %3347 = vmatprep.subr.mxu0 0.0
    %3348 = vmatpush1.msra.mxu0 0.0
    %3349 = vmatprep.subr.mxu0 0.0
    %3350 = vmatpush1.msra.mxu0 0.0
    %3351 = vmatprep.subr.mxu0 0.0
    %3352 = vmatpush1.msra.mxu0 0.0
    %3353 = vmatprep.subr.mxu0 0.0
    %3354 = vmatpush1.msra.mxu0 0.0
    %3355 = vmatprep.subr.mxu0 0.0
    %3356 = vmatpush1.msra.mxu0 0.0
    %3357 = vmatprep.subr.mxu0 0.0
    %3358 = vmatpush1.msra.mxu0 0.0
    %3359 = vmatprep.subr.mxu0 0.0
    %3360 = vmatpush1.msra.mxu0 0.0
    %3361 = vmatprep.subr.mxu0 0.0
    %3362 = vmatpush1.msra.mxu0 0.0
    %3363 = vmatprep.subr.mxu0 0.0
    %3364 = vmatpush1.msra.mxu0 0.0
    %3365 = vmatprep.subr.mxu0 0.0
    %3366 = vmatpush1.msra.mxu0 0.0
    %3367 = vmatprep.subr.mxu0 0.0
    %3368 = vmatpush1.msra.mxu0 0.0
    %3369 = vmatprep.subr.mxu0 0.0
    %3370 = vmatpush1.msra.mxu0 0.0
    %3371 = vmatprep.subr.mxu0 0.0
    %3372 = vmatpush1.msra.mxu0 0.0
    %3373 = vmatprep.subr.mxu0 0.0
    %3374 = vmatpush1.msra.mxu0 0.0
    %3375 = vmatprep.subr.mxu0 0.0
    %3376 = vmatpush1.msra.mxu0 0.0
    %3377 = vmatprep.subr.mxu0 0.0
    %3378 = vmatpush1.msra.mxu0 0.0
    %3379 = vmatprep.subr.mxu0 0.0
    %3380 = vmatpush1.msra.mxu0 0.0
    %3381 = vmatprep.mubr.f32.mxu0 0.0
    %3382 = vmatmul.mubr.f32.gmra.mrb[0].mxu0 %v3315
    %v3383 = vpop.f32.mrb[0].mxu0
    %v3384 = vadd.f32 0.0, %v3383
    %v3385 = vpop.f32.mrb[0].mxu0
    %3386 = vdwg.mxu0
    %3388 = vrot.lane.b32.xlu0 %v3054, 8
    %v3389 = vpop.permute.xlu0 %3388
    %3392 = vrot.lane.b32.xlu0 %v3219, 16
    %v3393 = vpop.permute.xlu0 %3392
    %3396 = vrot.lane.b32.xlu0 %v3384, 24
    %v3397 = vpop.permute.xlu0 %3396
    %v3399 = vsel %vm216, %v2889, %v3389
    %v3400 = vsel %vm886, %v3399, %v3393
    %v3401 = vsel %vm888, %v3400, %v3397
    %s3402 = scalar_lea.vmem %s6, 32
    %v3403 = vld [vmem:[%s3402] sm:$0xff]
    %v3404 = vld [vmem:[%s3402 + $0x8] sm:$0xff]
    %v3405 = vld [vmem:[%s3402 + $0x10] sm:$0xff]
    %v3406 = vld [vmem:[%s3402 + $0x18] sm:$0xff]
    %s3407 = scalar_lea.vmem %s7, 1
    %v3408 = vld [vmem:[%s3407] sm:$0x1]
    %v3410 = vlaneseq
    %v3411 = vshrl.u32 %v3410, 7
    %v3412 = vsub.s32 0, %v3411
    %v3413 = vrot.slane %v3408, %v3412
    %v3416 = vsel %vm70, %v2727, 0
    %v3419 = vsel %vm70, %v3401, 0
    %3421 = vmatprep.subr.mxu0 0.0
    %3422 = vmatpush1.msra.mxu0 %v3403
    %3423 = vmatprep.subr.mxu0 0.0
    %3424 = vmatpush1.msra.mxu0 %v3404
    %3425 = vmatprep.subr.mxu0 0.0
    %3426 = vmatpush1.msra.mxu0 %v3405
    %3427 = vmatprep.subr.mxu0 0.0
    %3428 = vmatpush1.msra.mxu0 %v3406
    %3429 = vmatprep.subr.mxu0 0.0
    %3430 = vmatpush1.msra.mxu0 0.0
    %3431 = vmatprep.subr.mxu0 0.0
    %3432 = vmatpush1.msra.mxu0 0.0
    %3433 = vmatprep.subr.mxu0 0.0
    %3434 = vmatpush1.msra.mxu0 0.0
    %3435 = vmatprep.subr.mxu0 0.0
    %3436 = vmatpush1.msra.mxu0 0.0
    %3437 = vmatprep.subr.mxu0 0.0
    %3438 = vmatpush1.msra.mxu0 0.0
    %3439 = vmatprep.subr.mxu0 0.0
    %3440 = vmatpush1.msra.mxu0 0.0
    %3441 = vmatprep.subr.mxu0 0.0
    %3442 = vmatpush1.msra.mxu0 0.0
    %3443 = vmatprep.subr.mxu0 0.0
    %3444 = vmatpush1.msra.mxu0 0.0
    %3445 = vmatprep.subr.mxu0 0.0
    %3446 = vmatpush1.msra.mxu0 0.0
    %3447 = vmatprep.subr.mxu0 0.0
    %3448 = vmatpush1.msra.mxu0 0.0
    %3449 = vmatprep.subr.mxu0 0.0
    %3450 = vmatpush1.msra.mxu0 0.0
    %3451 = vmatprep.subr.mxu0 0.0
    %3452 = vmatpush1.msra.mxu0 0.0
    %3453 = vmatprep.subr.mxu0 0.0
    %3454 = vmatpush1.msra.mxu0 0.0
    %3455 = vmatprep.subr.mxu0 0.0
    %3456 = vmatpush1.msra.mxu0 0.0
    %3457 = vmatprep.subr.mxu0 0.0
    %3458 = vmatpush1.msra.mxu0 0.0
    %3459 = vmatprep.subr.mxu0 0.0
    %3460 = vmatpush1.msra.mxu0 0.0
    %3461 = vmatprep.subr.mxu0 0.0
    %3462 = vmatpush1.msra.mxu0 0.0
    %3463 = vmatprep.subr.mxu0 0.0
    %3464 = vmatpush1.msra.mxu0 0.0
    %3465 = vmatprep.subr.mxu0 0.0
    %3466 = vmatpush1.msra.mxu0 0.0
    %3467 = vmatprep.subr.mxu0 0.0
    %3468 = vmatpush1.msra.mxu0 0.0
    %3469 = vmatprep.subr.mxu0 0.0
    %3470 = vmatpush1.msra.mxu0 0.0
    %3471 = vmatprep.subr.mxu0 0.0
    %3472 = vmatpush1.msra.mxu0 0.0
    %3473 = vmatprep.subr.mxu0 0.0
    %3474 = vmatpush1.msra.mxu0 0.0
    %3475 = vmatprep.subr.mxu0 0.0
    %3476 = vmatpush1.msra.mxu0 0.0
    %3477 = vmatprep.subr.mxu0 0.0
    %3478 = vmatpush1.msra.mxu0 0.0
    %3479 = vmatprep.subr.mxu0 0.0
    %3480 = vmatpush1.msra.mxu0 0.0
    %3481 = vmatprep.subr.mxu0 0.0
    %3482 = vmatpush1.msra.mxu0 0.0
    %3483 = vmatprep.subr.mxu0 0.0
    %3484 = vmatpush1.msra.mxu0 0.0
    %3485 = vmatprep.mubr.f32.mxu0 0.0
    %3486 = vmatmul.mubr.f32.gmra.mrb[0].mxu0 %v3416
    %v3487 = vpop.f32.mrb[0].mxu0
    %v3488 = vadd.f32 %v3413, %v3487
    %v3489 = vpop.f32.mrb[0].mxu0
    %3490 = vmatprep.mubr.f32.mxu0 0.0
    %3491 = vmatmul.mubr.f32.gmra.mrb[0].mxu0 %v3419
    %v3492 = vpop.f32.mrb[0].mxu0
    %v3493 = vadd.f32 %v3413, %v3492
    %v3494 = vpop.f32.mrb[0].mxu0
    %3495 = vdwg.mxu0
    %v3496 = vadd.f32 %v3488, %v1958
    %v3497 = vadd.f32 %v3493, %v1959
    %s3498 = scalar_lea.vmem %s8, 1
    %v3499 = vld [vmem:[%s3498] sm:$0x1]
    %s3500 = scalar_lea.vmem %s9, 1
    %v3501 = vld [vmem:[%s3500] sm:$0x1]
    %v3502 = vsel %vm70, %v3496, 0.0
    %3503 = vadd.xlane.f32.xlu0 %v3502
    %v3504 = vpop.xlane.xlu0 %3503
    %v3505 = vsel %vm70, %v3497, 0.0
    %3506 = vadd.xlane.f32.xlu0 %v3505
    %v3507 = vpop.xlane.xlu0 %3506
    %v3508 = vmul.f32 %v3504, %v77
    %v3509 = vmul.f32 %v3507, %v77
    %v3510 = vsub.f32 %v3496, %v3508
    %v3511 = vsub.f32 %v3497, %v3509
    %v3512 = vmul.f32 %v3510, %v3510
    %v3513 = vmul.f32 %v3511, %v3511
    %v3514 = vsel %vm70, %v3512, 0.0
    %3515 = vadd.xlane.f32.xlu0 %v3514
    %v3516 = vpop.xlane.xlu0 %3515
    %v3517 = vsel %vm70, %v3513, 0.0
    %3518 = vadd.xlane.f32.xlu0 %v3517
    %v3519 = vpop.xlane.xlu0 %3518
    %v3520 = vmul.f32 %v3516, %v77
    %v3521 = vmul.f32 %v3519, %v77
    %v3522 = vadd.f32 %v3520, 1e-12
    %v3523 = vadd.f32 %v3521, 1e-12
    %v3524 = vrsqrt.pop %v3522
    %v3525 = vrsqrt.pop %v3523
    %v3526 = vmul.f32 %v3510, %v3524
    %v3527 = vmul.f32 %v3511, %v3525
    %v3529 = vlaneseq
    %v3530 = vshrl.u32 %v3529, 7
    %v3531 = vsub.s32 0, %v3530
    %v3532 = vrot.slane %v3499, %v3531
    %v3534 = vmul.f32 %v3526, %v3532
    %v3535 = vmul.f32 %v3527, %v3532
    %v3537 = vlaneseq
    %v3538 = vshrl.u32 %v3537, 7
    %v3539 = vsub.s32 0, %v3538
    %v3540 = vrot.slane %v3501, %v3539
    %v3542 = vadd.f32 %v3534, %v3540
    %v3543 = vadd.f32 %v3535, %v3540
    %s3544 = scalar_lea.vmem %s10, 32
    %v3545 = vld [vmem:[%s3544] sm:$0xff]
    %v3546 = vld [vmem:[%s3544 + $0x8] sm:$0xff]
    %v3547 = vld [vmem:[%s3544 + $0x10] sm:$0xff]
    %v3548 = vld [vmem:[%s3544 + $0x18] sm:$0xff]
    %s3549 = scalar_lea.vmem %s11, 1
    %v3550 = vld [vmem:[%s3549] sm:$0x1]
    %v3552 = vlaneseq
    %v3553 = vshrl.u32 %v3552, 7
    %v3554 = vsub.s32 0, %v3553
    %v3555 = vrot.slane %v3550, %v3554
    %v3558 = vsel %vm70, %v3542, 0
    %v3561 = vsel %vm70, %v3543, 0
    %3563 = vmatprep.subr.mxu0 0.0
    %3564 = vmatpush1.msra.mxu0 %v3545
    %3565 = vmatprep.subr.mxu0 0.0
    %3566 = vmatpush1.msra.mxu0 %v3546
    %3567 = vmatprep.subr.mxu0 0.0
    %3568 = vmatpush1.msra.mxu0 %v3547
    %3569 = vmatprep.subr.mxu0 0.0
    %3570 = vmatpush1.msra.mxu0 %v3548
    %3571 = vmatprep.subr.mxu0 0.0
    %3572 = vmatpush1.msra.mxu0 0.0
    %3573 = vmatprep.subr.mxu0 0.0
    %3574 = vmatpush1.msra.mxu0 0.0
    %3575 = vmatprep.subr.mxu0 0.0
    %3576 = vmatpush1.msra.mxu0 0.0
    %3577 = vmatprep.subr.mxu0 0.0
    %3578 = vmatpush1.msra.mxu0 0.0
    %3579 = vmatprep.subr.mxu0 0.0
    %3580 = vmatpush1.msra.mxu0 0.0
    %3581 = vmatprep.subr.mxu0 0.0
    %3582 = vmatpush1.msra.mxu0 0.0
    %3583 = vmatprep.subr.mxu0 0.0
    %3584 = vmatpush1.msra.mxu0 0.0
    %3585 = vmatprep.subr.mxu0 0.0
    %3586 = vmatpush1.msra.mxu0 0.0
    %3587 = vmatprep.subr.mxu0 0.0
    %3588 = vmatpush1.msra.mxu0 0.0
    %3589 = vmatprep.subr.mxu0 0.0
    %3590 = vmatpush1.msra.mxu0 0.0
    %3591 = vmatprep.subr.mxu0 0.0
    %3592 = vmatpush1.msra.mxu0 0.0
    %3593 = vmatprep.subr.mxu0 0.0
    %3594 = vmatpush1.msra.mxu0 0.0
    %3595 = vmatprep.subr.mxu0 0.0
    %3596 = vmatpush1.msra.mxu0 0.0
    %3597 = vmatprep.subr.mxu0 0.0
    %3598 = vmatpush1.msra.mxu0 0.0
    %3599 = vmatprep.subr.mxu0 0.0
    %3600 = vmatpush1.msra.mxu0 0.0
    %3601 = vmatprep.subr.mxu0 0.0
    %3602 = vmatpush1.msra.mxu0 0.0
    %3603 = vmatprep.subr.mxu0 0.0
    %3604 = vmatpush1.msra.mxu0 0.0
    %3605 = vmatprep.subr.mxu0 0.0
    %3606 = vmatpush1.msra.mxu0 0.0
    %3607 = vmatprep.subr.mxu0 0.0
    %3608 = vmatpush1.msra.mxu0 0.0
    %3609 = vmatprep.subr.mxu0 0.0
    %3610 = vmatpush1.msra.mxu0 0.0
    %3611 = vmatprep.subr.mxu0 0.0
    %3612 = vmatpush1.msra.mxu0 0.0
    %3613 = vmatprep.subr.mxu0 0.0
    %3614 = vmatpush1.msra.mxu0 0.0
    %3615 = vmatprep.subr.mxu0 0.0
    %3616 = vmatpush1.msra.mxu0 0.0
    %3617 = vmatprep.subr.mxu0 0.0
    %3618 = vmatpush1.msra.mxu0 0.0
    %3619 = vmatprep.subr.mxu0 0.0
    %3620 = vmatpush1.msra.mxu0 0.0
    %3621 = vmatprep.subr.mxu0 0.0
    %3622 = vmatpush1.msra.mxu0 0.0
    %3623 = vmatprep.subr.mxu0 0.0
    %3624 = vmatpush1.msra.mxu0 0.0
    %3625 = vmatprep.subr.mxu0 0.0
    %3626 = vmatpush1.msra.mxu0 0.0
    %3627 = vmatprep.mubr.f32.mxu0 0.0
    %3628 = vmatmul.mubr.f32.gmra.mrb[0].mxu0 %v3558
    %v3629 = vpop.f32.mrb[0].mxu0
    %v3630 = vadd.f32 %v3555, %v3629
    %v3631 = vpop.f32.mrb[0].mxu0
    %3632 = vmatprep.mubr.f32.mxu0 0.0
    %3633 = vmatmul.mubr.f32.gmra.mrb[0].mxu0 %v3561
    %v3634 = vpop.f32.mrb[0].mxu0
    %v3635 = vadd.f32 %v3555, %v3634
    %v3636 = vpop.f32.mrb[0].mxu0
    %3637 = vdwg.mxu0
    %v3638 = vmul.f32 %v3630, 0.5
    %v3639 = vmul.f32 %v3635, 0.5
    %v3640 = vmul.f32 %v3630, 0.044715
    %v3641 = vmul.f32 %v3635, 0.044715
    %v3642 = vmul.f32 %v3640, %v3630
    %v3643 = vmul.f32 %v3641, %v3635
    %v3644 = vmul.f32 %v3642, %v3630
    %v3645 = vmul.f32 %v3643, %v3635
    %v3646 = vadd.f32 %v3630, %v3644
    %v3647 = vadd.f32 %v3635, %v3645
    %v3648 = vmul.f32 %v3646, 0.7978846
    %v3649 = vmul.f32 %v3647, 0.7978846
    %v3650 = vtanh.pop %v3648
    %v3651 = vtanh.pop %v3649
    %v3652 = vadd.f32 %v3650, 1.0
    %v3653 = vadd.f32 %v3651, 1.0
    %v3654 = vmul.f32 %v3638, %v3652
    %v3655 = vmul.f32 %v3639, %v3653
    %s3656 = scalar_lea.vmem %s12, 128
    %v3657 = vld [vmem:[%s3656] sm:$0xff]
    %v3658 = vld [vmem:[%s3656 + $0x8] sm:$0xff]
    %v3659 = vld [vmem:[%s3656 + $0x10] sm:$0xff]
    %v3660 = vld [vmem:[%s3656 + $0x18] sm:$0xff]
    %v3661 = vld [vmem:[%s3656 + $0x20] sm:$0xff]
    %v3662 = vld [vmem:[%s3656 + $0x28] sm:$0xff]
    %v3663 = vld [vmem:[%s3656 + $0x30] sm:$0xff]
    %v3664 = vld [vmem:[%s3656 + $0x38] sm:$0xff]
    %v3665 = vld [vmem:[%s3656 + $0x40] sm:$0xff]
    %v3666 = vld [vmem:[%s3656 + $0x48] sm:$0xff]
    %v3667 = vld [vmem:[%s3656 + $0x50] sm:$0xff]
    %v3668 = vld [vmem:[%s3656 + $0x58] sm:$0xff]
    %v3669 = vld [vmem:[%s3656 + $0x60] sm:$0xff]
    %v3670 = vld [vmem:[%s3656 + $0x68] sm:$0xff]
    %v3671 = vld [vmem:[%s3656 + $0x70] sm:$0xff]
    %v3672 = vld [vmem:[%s3656 + $0x78] sm:$0xff]
    %s3673 = scalar_lea.vmem %s13, 1
    %v3674 = vld [vmem:[%s3673] sm:$0x1]
    %v3676 = vlaneseq
    %v3677 = vshrl.u32 %v3676, 7
    %v3678 = vsub.s32 0, %v3677
    %v3679 = vrot.slane %v3674, %v3678
    %3681 = vmatprep.subr.mxu0 0.0
    %3682 = vmatpush1.msra.mxu0 %v3657
    %3683 = vmatprep.subr.mxu0 0.0
    %3684 = vmatpush1.msra.mxu0 %v3658
    %3685 = vmatprep.subr.mxu0 0.0
    %3686 = vmatpush1.msra.mxu0 %v3659
    %3687 = vmatprep.subr.mxu0 0.0
    %3688 = vmatpush1.msra.mxu0 %v3660
    %3689 = vmatprep.subr.mxu0 0.0
    %3690 = vmatpush1.msra.mxu0 %v3661
    %3691 = vmatprep.subr.mxu0 0.0
    %3692 = vmatpush1.msra.mxu0 %v3662
    %3693 = vmatprep.subr.mxu0 0.0
    %3694 = vmatpush1.msra.mxu0 %v3663
    %3695 = vmatprep.subr.mxu0 0.0
    %3696 = vmatpush1.msra.mxu0 %v3664
    %3697 = vmatprep.subr.mxu0 0.0
    %3698 = vmatpush1.msra.mxu0 %v3665
    %3699 = vmatprep.subr.mxu0 0.0
    %3700 = vmatpush1.msra.mxu0 %v3666
    %3701 = vmatprep.subr.mxu0 0.0
    %3702 = vmatpush1.msra.mxu0 %v3667
    %3703 = vmatprep.subr.mxu0 0.0
    %3704 = vmatpush1.msra.mxu0 %v3668
    %3705 = vmatprep.subr.mxu0 0.0
    %3706 = vmatpush1.msra.mxu0 %v3669
    %3707 = vmatprep.subr.mxu0 0.0
    %3708 = vmatpush1.msra.mxu0 %v3670
    %3709 = vmatprep.subr.mxu0 0.0
    %3710 = vmatpush1.msra.mxu0 %v3671
    %3711 = vmatprep.subr.mxu0 0.0
    %3712 = vmatpush1.msra.mxu0 %v3672
    %3713 = vmatprep.subr.mxu0 0.0
    %3714 = vmatpush1.msra.mxu0 0.0
    %3715 = vmatprep.subr.mxu0 0.0
    %3716 = vmatpush1.msra.mxu0 0.0
    %3717 = vmatprep.subr.mxu0 0.0
    %3718 = vmatpush1.msra.mxu0 0.0
    %3719 = vmatprep.subr.mxu0 0.0
    %3720 = vmatpush1.msra.mxu0 0.0
    %3721 = vmatprep.subr.mxu0 0.0
    %3722 = vmatpush1.msra.mxu0 0.0
    %3723 = vmatprep.subr.mxu0 0.0
    %3724 = vmatpush1.msra.mxu0 0.0
    %3725 = vmatprep.subr.mxu0 0.0
    %3726 = vmatpush1.msra.mxu0 0.0
    %3727 = vmatprep.subr.mxu0 0.0
    %3728 = vmatpush1.msra.mxu0 0.0
    %3729 = vmatprep.subr.mxu0 0.0
    %3730 = vmatpush1.msra.mxu0 0.0
    %3731 = vmatprep.subr.mxu0 0.0
    %3732 = vmatpush1.msra.mxu0 0.0
    %3733 = vmatprep.subr.mxu0 0.0
    %3734 = vmatpush1.msra.mxu0 0.0
    %3735 = vmatprep.subr.mxu0 0.0
    %3736 = vmatpush1.msra.mxu0 0.0
    %3737 = vmatprep.subr.mxu0 0.0
    %3738 = vmatpush1.msra.mxu0 0.0
    %3739 = vmatprep.subr.mxu0 0.0
    %3740 = vmatpush1.msra.mxu0 0.0
    %3741 = vmatprep.subr.mxu0 0.0
    %3742 = vmatpush1.msra.mxu0 0.0
    %3743 = vmatprep.subr.mxu0 0.0
    %3744 = vmatpush1.msra.mxu0 0.0
    %3745 = vmatprep.mubr.f32.mxu0 0.0
    %3746 = vmatmul.mubr.f32.gmra.mrb[0].mxu0 %v3654
    %v3747 = vpop.f32.mrb[0].mxu0
    %v3748 = vadd.f32 %v3679, %v3747
    %v3749 = vpop.f32.mrb[0].mxu0
    %3750 = vmatprep.mubr.f32.mxu0 0.0
    %3751 = vmatmul.mubr.f32.gmra.mrb[0].mxu0 %v3655
    %v3752 = vpop.f32.mrb[0].mxu0
    %v3753 = vadd.f32 %v3679, %v3752
    %v3754 = vpop.f32.mrb[0].mxu0
    %3755 = vdwg.mxu0
    %v3756 = vadd.f32 %v3748, %v3542
    %v3757 = vadd.f32 %v3753, %v3543
    %s3758 = scalar_lea.vmem %s14, 1
    %v3759 = vld [vmem:[%s3758] sm:$0x1]
    %s3760 = scalar_lea.vmem %s15, 1
    %v3761 = vld [vmem:[%s3760] sm:$0x1]
    %v3762 = vsel %vm70, %v3756, 0.0
    %3763 = vadd.xlane.f32.xlu0 %v3762
    %v3764 = vpop.xlane.xlu0 %3763
    %v3765 = vsel %vm70, %v3757, 0.0
    %3766 = vadd.xlane.f32.xlu0 %v3765
    %v3767 = vpop.xlane.xlu0 %3766
    %v3768 = vmul.f32 %v3764, %v77
    %v3769 = vmul.f32 %v3767, %v77
    %v3770 = vsub.f32 %v3756, %v3768
    %v3771 = vsub.f32 %v3757, %v3769
    %v3772 = vmul.f32 %v3770, %v3770
    %v3773 = vmul.f32 %v3771, %v3771
    %v3774 = vsel %vm70, %v3772, 0.0
    %3775 = vadd.xlane.f32.xlu0 %v3774
    %v3776 = vpop.xlane.xlu0 %3775
    %v3777 = vsel %vm70, %v3773, 0.0
    %3778 = vadd.xlane.f32.xlu0 %v3777
    %v3779 = vpop.xlane.xlu0 %3778
    %v3780 = vmul.f32 %v3776, %v77
    %v3781 = vmul.f32 %v3779, %v77
    %v3782 = vadd.f32 %v3780, 1e-12
    %v3783 = vadd.f32 %v3781, 1e-12
    %v3784 = vrsqrt.pop %v3782
    %v3785 = vrsqrt.pop %v3783
    %v3786 = vmul.f32 %v3770, %v3784
    %v3787 = vmul.f32 %v3771, %v3785
    %v3789 = vlaneseq
    %v3790 = vshrl.u32 %v3789, 7
    %v3791 = vsub.s32 0, %v3790
    %v3792 = vrot.slane %v3759, %v3791
    %v3794 = vmul.f32 %v3786, %v3792
    %v3795 = vmul.f32 %v3787, %v3792
    %v3797 = vlaneseq
    %v3798 = vshrl.u32 %v3797, 7
    %v3799 = vsub.s32 0, %v3798
    %v3800 = vrot.slane %v3761, %v3799
    %v3802 = vadd.f32 %v3794, %v3800
    %v3803 = vadd.f32 %v3795, %v3800
    %v3805 = vrot.slane %v3803, 7
    %vm3807 = vcmask 1040384
    %v3808 = vsel %vm3807, %v3802, %v3805
    %v3809 = vld [vmem:[%s16] sm:$0xff]
    %v3810 = vld [vmem:[%s16 + $0x8] sm:$0xff]
    %v3811 = vld [vmem:[%s16 + $0x10] sm:$0xff]
    %v3812 = vld [vmem:[%s16 + $0x18] sm:$0xff]
    %v3813 = vld [vmem:[%s17] sm:$0x1]
    %v3815 = vlaneseq
    %v3816 = vshrl.u32 %v3815, 7
    %v3817 = vsub.s32 0, %v3816
    %v3818 = vrot.slane %v3813, %v3817
    %v3821 = vsel %vm70, %v3808, 0
    %3823 = vmatprep.subr.mxu0 0.0
    %3824 = vmatpush1.msra.mxu0 %v3809
    %3825 = vmatprep.subr.mxu0 0.0
    %3826 = vmatpush1.msra.mxu0 %v3810
    %3827 = vmatprep.subr.mxu0 0.0
    %3828 = vmatpush1.msra.mxu0 %v3811
    %3829 = vmatprep.subr.mxu0 0.0
    %3830 = vmatpush1.msra.mxu0 %v3812
    %3831 = vmatprep.subr.mxu0 0.0
    %3832 = vmatpush1.msra.mxu0 0.0
    %3833 = vmatprep.subr.mxu0 0.0
    %3834 = vmatpush1.msra.mxu0 0.0
    %3835 = vmatprep.subr.mxu0 0.0
    %3836 = vmatpush1.msra.mxu0 0.0
    %3837 = vmatprep.subr.mxu0 0.0
    %3838 = vmatpush1.msra.mxu0 0.0
    %3839 = vmatprep.subr.mxu0 0.0
    %3840 = vmatpush1.msra.mxu0 0.0
    %3841 = vmatprep.subr.mxu0 0.0
    %3842 = vmatpush1.msra.mxu0 0.0
    %3843 = vmatprep.subr.mxu0 0.0
    %3844 = vmatpush1.msra.mxu0 0.0
    %3845 = vmatprep.subr.mxu0 0.0
    %3846 = vmatpush1.msra.mxu0 0.0
    %3847 = vmatprep.subr.mxu0 0.0
    %3848 = vmatpush1.msra.mxu0 0.0
    %3849 = vmatprep.subr.mxu0 0.0
    %3850 = vmatpush1.msra.mxu0 0.0
    %3851 = vmatprep.subr.mxu0 0.0
    %3852 = vmatpush1.msra.mxu0 0.0
    %3853 = vmatprep.subr.mxu0 0.0
    %3854 = vmatpush1.msra.mxu0 0.0
    %3855 = vmatprep.subr.mxu0 0.0
    %3856 = vmatpush1.msra.mxu0 0.0
    %3857 = vmatprep.subr.mxu0 0.0
    %3858 = vmatpush1.msra.mxu0 0.0
    %3859 = vmatprep.subr.mxu0 0.0
    %3860 = vmatpush1.msra.mxu0 0.0
    %3861 = vmatprep.subr.mxu0 0.0
    %3862 = vmatpush1.msra.mxu0 0.0
    %3863 = vmatprep.subr.mxu0 0.0
    %3864 = vmatpush1.msra.mxu0 0.0
    %3865 = vmatprep.subr.mxu0 0.0
    %3866 = vmatpush1.msra.mxu0 0.0
    %3867 = vmatprep.subr.mxu0 0.0
    %3868 = vmatpush1.msra.mxu0 0.0
    %3869 = vmatprep.subr.mxu0 0.0
    %3870 = vmatpush1.msra.mxu0 0.0
    %3871 = vmatprep.subr.mxu0 0.0
    %3872 = vmatpush1.msra.mxu0 0.0
    %3873 = vmatprep.subr.mxu0 0.0
    %3874 = vmatpush1.msra.mxu0 0.0
    %3875 = vmatprep.subr.mxu0 0.0
    %3876 = vmatpush1.msra.mxu0 0.0
    %3877 = vmatprep.subr.mxu0 0.0
    %3878 = vmatpush1.msra.mxu0 0.0
    %3879 = vmatprep.subr.mxu0 0.0
    %3880 = vmatpush1.msra.mxu0 0.0
    %3881 = vmatprep.subr.mxu0 0.0
    %3882 = vmatpush1.msra.mxu0 0.0
    %3883 = vmatprep.subr.mxu0 0.0
    %3884 = vmatpush1.msra.mxu0 0.0
    %3885 = vmatprep.subr.mxu0 0.0
    %3886 = vmatpush1.msra.mxu0 0.0
    %3887 = vmatprep.mubr.f32.mxu0 0.0
    %3888 = vmatmul.mubr.f32.gmra.mrb[0].mxu0 %v3821
    %v3889 = vpop.f32.mrb[0].mxu0
    %v3890 = vadd.f32 %v3818, %v3889
    %v3891 = vpop.f32.mrb[0].mxu0
    %3892 = vdwg.mxu0
    %v3893 = vtanh.pop %v3890
    %v3894 = vld [vmem:[%s18] sm:$0xff]
    %v3895 = vld [vmem:[%s18 + $0x8] sm:$0xff]
    %v3896 = vld [vmem:[%s18 + $0x10] sm:$0xff]
    %v3897 = vld [vmem:[%s18 + $0x18] sm:$0xff]
    %v3898 = vld [vmem:[%s19] sm:$0x1]
    %v3900 = vlaneseq
    %v3901 = vshrl.u32 %v3900, 7
    %v3902 = vsub.s32 0, %v3901
    %v3903 = vrot.slane %v3898, %v3902
    %v3906 = vsel %vm70, %v3893, 0
    %3908 = vmatprep.subr.mxu0 0.0
    %3909 = vmatpush1.msra.mxu0 %v3894
    %3910 = vmatprep.subr.mxu0 0.0
    %3911 = vmatpush1.msra.mxu0 %v3895
    %3912 = vmatprep.subr.mxu0 0.0
    %3913 = vmatpush1.msra.mxu0 %v3896
    %3914 = vmatprep.subr.mxu0 0.0
    %3915 = vmatpush1.msra.mxu0 %v3897
    %3916 = vmatprep.subr.mxu0 0.0
    %3917 = vmatpush1.msra.mxu0 0.0
    %3918 = vmatprep.subr.mxu0 0.0
    %3919 = vmatpush1.msra.mxu0 0.0
    %3920 = vmatprep.subr.mxu0 0.0
    %3921 = vmatpush1.msra.mxu0 0.0
    %3922 = vmatprep.subr.mxu0 0.0
    %3923 = vmatpush1.msra.mxu0 0.0
    %3924 = vmatprep.subr.mxu0 0.0
    %3925 = vmatpush1.msra.mxu0 0.0
    %3926 = vmatprep.subr.mxu0 0.0
    %3927 = vmatpush1.msra.mxu0 0.0
    %3928 = vmatprep.subr.mxu0 0.0
    %3929 = vmatpush1.msra.mxu0 0.0
    %3930 = vmatprep.subr.mxu0 0.0
    %3931 = vmatpush1.msra.mxu0 0.0
    %3932 = vmatprep.subr.mxu0 0.0
    %3933 = vmatpush1.msra.mxu0 0.0
    %3934 = vmatprep.subr.mxu0 0.0
    %3935 = vmatpush1.msra.mxu0 0.0
    %3936 = vmatprep.subr.mxu0 0.0
    %3937 = vmatpush1.msra.mxu0 0.0
    %3938 = vmatprep.subr.mxu0 0.0
    %3939 = vmatpush1.msra.mxu0 0.0
    %3940 = vmatprep.subr.mxu0 0.0
    %3941 = vmatpush1.msra.mxu0 0.0
    %3942 = vmatprep.subr.mxu0 0.0
    %3943 = vmatpush1.msra.mxu0 0.0
    %3944 = vmatprep.subr.mxu0 0.0
    %3945 = vmatpush1.msra.mxu0 0.0
    %3946 = vmatprep.subr.mxu0 0.0
    %3947 = vmatpush1.msra.mxu0 0.0
    %3948 = vmatprep.subr.mxu0 0.0
    %3949 = vmatpush1.msra.mxu0 0.0
    %3950 = vmatprep.subr.mxu0 0.0
    %3951 = vmatpush1.msra.mxu0 0.0
    %3952 = vmatprep.subr.mxu0 0.0
    %3953 = vmatpush1.msra.mxu0 0.0
    %3954 = vmatprep.subr.mxu0 0.0
    %3955 = vmatpush1.msra.mxu0 0.0
    %3956 = vmatprep.subr.mxu0 0.0
    %3957 = vmatpush1.msra.mxu0 0.0
    %3958 = vmatprep.subr.mxu0 0.0
    %3959 = vmatpush1.msra.mxu0 0.0
    %3960 = vmatprep.subr.mxu0 0.0
    %3961 = vmatpush1.msra.mxu0 0.0
    %3962 = vmatprep.subr.mxu0 0.0
    %3963 = vmatpush1.msra.mxu0 0.0
    %3964 = vmatprep.subr.mxu0 0.0
    %3965 = vmatpush1.msra.mxu0 0.0
    %3966 = vmatprep.subr.mxu0 0.0
    %3967 = vmatpush1.msra.mxu0 0.0
    %3968 = vmatprep.subr.mxu0 0.0
    %3969 = vmatpush1.msra.mxu0 0.0
    %3970 = vmatprep.subr.mxu0 0.0
    %3971 = vmatpush1.msra.mxu0 0.0
    %3972 = vmatprep.mubr.f32.mxu0 0.0
    %3973 = vmatmul.mubr.f32.gmra.mrb[0].mxu0 %v3906
    %v3974 = vpop.f32.mrb[0].mxu0
    %v3975 = vadd.f32 %v3903, %v3974
    %v3976 = vpop.f32.mrb[0].mxu0
    %3977 = vdwg.mxu0
    %v3978 = vmax.f32 %v3975, 0.0
    %vm3979 = vcmask 9216
    %3980 = vst.msk [vmem:[#allocation2] sm:$0x3] %vm3979, %v3978
    // Predicated region
    $region82: #{bert_classifier_forward.1} parent=1 // pred_check
      _
    $region83: #{bert_classifier_forward.1} parent=1 // pred_check_branch
      %3982 = sbr.rel (0) target = $region85
    $region84: #{bert_classifier_forward.1} parent=1 // pred_region
      %s3984 = ssub.s32 32, 32
      %3985 = vsyncadd [#allocation3], %s3984
      %s3987 = sshll.u32 [#allocation2], 4
      %s3988 = int_to_ptr.vmem [resolvable:$true] %s3987
      %3990 = dma.vmem_to_hbm [thread:$0]  %s3988, 32, %s20, [#allocation3]
    $region85: #{bert_classifier_forward.1} parent=1 // pred_fallthru
      _
    // Predicated region
    $region86: #{bert_classifier_forward.1} parent=1 // pred_check
      _
    $region87: #{bert_classifier_forward.1} parent=1 // pred_check_branch
      %3992 = sbr.rel (0) target = $region89
    $region88: #{bert_classifier_forward.1} parent=1 // pred_region
      %3993 = dma.done [#allocation3], 32
    $region89: #{bert_classifier_forward.1} parent=1 // pred_fallthru
      _
    %3994 = vsyncpa [#allocation3], 1

</llo_original>
